<compile_context>
chip_gen: v6e
topology: v6e:2x2x1
jax: 0.10.0
libtpu: 0.0.40
codegen_flags: <defaults>
</compile_context>

<pallas_src>
import functools

import jax
import jax.numpy as jnp
from jax.experimental import pallas as pl
from jax.experimental.pallas import tpu as pltpu


K = 7                      # conv taps
P = (K - 1) // 2           # = 3
R_SLAB = 24                # per-image slab rows (>= H + 2P)
S_SLAB = 32                # per-image slab cols (>= W + 2P), power of two
MARGIN = 256               # slab read margin (>= (K-1)*S_SLAB), mult of 128


# ---------------------------------------------------------------------------
# Fused Pallas kernel
# ---------------------------------------------------------------------------
def _gcn_kernel(dims,
                x_ref, w1_ref, b1_ref, w2_ref, b2_ref,
                o_ref,
                xs_scr, s1_scr, l1r1_scr, s2_scr):
    N, C, O, H, W, k, p, R, S, flat, fpad = dims
    f32 = jnp.float32

    # ---- 0. zero the input slab (its zeros ARE the conv padding) and the
    #         read margin of the intermediate slab.  [:, :flat] of l1r1 is
    #         fully overwritten below, so only the margin needs zeros.
    xs_scr[...] = jnp.zeros(xs_scr.shape, f32)
    l1r1_scr[:, flat:fpad] = jnp.zeros((2 * O, fpad - flat), f32)

    # ---- 1. scatter x (N*C, H*W) into the per-channel flat slab ------------
    for n in range(N):
        for h in range(H):
            src = x_ref[n * C:(n + 1) * C, h * W:(h + 1) * W]        # (C, W)
            off = n * R * S + (h + p) * S + p
            xs_scr[:, off:off + W] = src

    # ---- 2. stage 1: stack all 2*k shifted windows, ONE matmul -------------
    for t in range(k):
        # conv_l1: (k,1) kernel -> row shift of t*S lanes
        s1_scr[t * C:(t + 1) * C, :] = xs_scr[:, t * S:t * S + flat]
        # conv_r1: (1,k) kernel -> col shift of t lanes
        s1_scr[(k + t) * C:(k + t + 1) * C, :] = xs_scr[:, t:t + flat]

    pre1 = jax.lax.dot_general(
        w1_ref[...], s1_scr[...],
        dimension_numbers=(((1,), (0,)), ((), ())),
        preferred_element_type=f32) + b1_ref[...]                    # (2O, flat)

    # validity masks built in-kernel (iota + pow2 shift/and, no HBM inputs)
    idx = jax.lax.broadcasted_iota(jnp.int32, (1, flat), 1)
    ss = jnp.bitwise_and(idx, S - 1)                  # col within slab row
    rq = jnp.right_shift(idx, S.bit_length() - 1)     # idx // S  (S pow2)
    rr = rq
    for _ in range(N - 1):                            # rq mod R, R small
        rr = jnp.where(rr >= R, rr - R, rr)
    ml1 = ((rr < H) & (ss >= p) & (ss < p + W)).astype(f32)
    mr1 = ((rr < H + 2 * p) & (ss >= p) & (ss < p + W - (k - 1))).astype(f32)

    l1r1_scr[:O, :flat] = pre1[:O] * ml1              # masked l1
    l1r1_scr[O:, :flat] = pre1[O:] * mr1              # masked r1

    # ---- 3. stage 2: stack both branches, ONE matmul gives x_l + x_r -------
    for t in range(k):
        # conv_l2: (1,k) kernel on l1 -> col shift t
        s2_scr[t * O:(t + 1) * O, :] = l1r1_scr[:O, t:t + flat]
        # conv_r2: (k,1) kernel on r1 -> row shift t*S
        s2_scr[(k + t) * O:(k + t + 1) * O, :] = l1r1_scr[O:, t * S:t * S + flat]

    y = jax.lax.dot_general(
        w2_ref[...], s2_scr[...],
        dimension_numbers=(((1,), (0,)), ((), ())),
        preferred_element_type=f32) + b2_ref[...]                    # (O, flat)

    # ---- 4. un-slab: write a lane-dense (N*O, H*W) output ------------------
    for n in range(N):
        for h in range(H):
            off = n * R * S + h * S
            o_ref[n * O:(n + 1) * O, h * W:(h + 1) * W] = y[:, off:off + W]


# ---------------------------------------------------------------------------
# Wrapper: NCHW in / NCHW out, one pallas_call, only free reshapes outside
# ---------------------------------------------------------------------------
def gcn_forward(x, params, k=K):
    N, C, H, W = x.shape
    O = params["bl1"].shape[0]
    p = (k - 1) // 2
    R, S = R_SLAB, S_SLAB
    assert k == K and H + 2 * p <= R and W + 2 * p <= S
    assert S & (S - 1) == 0 and MARGIN >= (k - 1) * S
    flat = N * R * S
    fpad = flat + MARGIN
    f32 = jnp.float32

    # Weight packing (tiny; in a real model these are precomputed once).
    # stage 1: block-diagonal (2O, 2kC); column t*C+c matches stacked row t*C+c
    wl1 = jnp.transpose(params["wl1"][:, :, :, 0], (0, 2, 1)).reshape(O, k * C)
    wr1 = jnp.transpose(params["wr1"][:, :, 0, :], (0, 2, 1)).reshape(O, k * C)
    zr = jnp.zeros((O, k * C), f32)
    w1 = jnp.concatenate(
        [jnp.concatenate([wl1, zr], axis=1),
         jnp.concatenate([zr, wr1], axis=1)], axis=0).astype(f32)    # (2O, 2kC)
    b1 = jnp.concatenate(
        [params["bl1"], params["br1"]]).reshape(2 * O, 1).astype(f32)
    # stage 2: concatenated (O, 2kO); one matmul = x_l + x_r, bias folded
    wl2 = jnp.transpose(params["wl2"][:, :, 0, :], (0, 2, 1)).reshape(O, k * O)
    wr2 = jnp.transpose(params["wr2"][:, :, :, 0], (0, 2, 1)).reshape(O, k * O)
    w2 = jnp.concatenate([wl2, wr2], axis=1).astype(f32)             # (O, 2kO)
    b2 = (params["bl2"] + params["br2"]).reshape(O, 1).astype(f32)

    x2d = x.astype(f32).reshape(N * C, H * W)      # layout-compatible, free

    dims = (N, C, O, H, W, k, p, R, S, flat, fpad)

    def full(shape):
        return pl.BlockSpec(shape, lambda *_: (0,) * len(shape))

    out2d = pl.pallas_call(
        functools.partial(_gcn_kernel, dims),
        out_shape=jax.ShapeDtypeStruct((N * O, H * W), f32),
        grid=(1,),
        in_specs=[full((N * C, H * W)),
                  full(w1.shape), full(b1.shape),
                  full(w2.shape), full(b2.shape)],
        out_specs=full((N * O, H * W)),
        scratch_shapes=[
            pltpu.VMEM((C, fpad), f32),             # zero-padded input slab
            pltpu.VMEM((2 * k * C, flat), f32),     # stage-1 stacked windows
            pltpu.VMEM((2 * O, fpad), f32),         # l1 / r1 slab (+ margin)
            pltpu.VMEM((2 * k * O, flat), f32),     # stage-2 stacked windows
        ],
        compiler_params=pltpu.CompilerParams(
            dimension_semantics=("arbitrary",)),
    )(x2d, w1, b1, w2, b2)

    return out2d.reshape(N, O, H, W)               # layout-compatible, free


# ---------------------------------------------------------------------------
# Parameter init + pure-JAX reference (for verification)
# ---------------------------------------------------------------------------
def init_gcn_params(key, c, out_c, k):
    ks = jax.random.split(key, 8)
    s = 0.1
    return {
        "wl1": s * jax.random.normal(ks[0], (out_c, c, k, 1), jnp.float32),
        "bl1": s * jax.random.normal(ks[1], (out_c,), jnp.float32),
        "wl2": s * jax.random.normal(ks[2], (out_c, out_c, 1, k), jnp.float32),
        "bl2": s * jax.random.normal(ks[3], (out_c,), jnp.float32),
        "wr1": s * jax.random.normal(ks[4], (out_c, c, 1, k), jnp.float32),
        "br1": s * jax.random.normal(ks[5], (out_c,), jnp.float32),
        "wr2": s * jax.random.normal(ks[6], (out_c, out_c, k, 1), jnp.float32),
        "br2": s * jax.random.normal(ks[7], (out_c,), jnp.float32),
    }


def conv2d_ref(x, w, b, padding):
    out = jax.lax.conv_general_dilated(
        x, w, window_strides=(1, 1),
        padding=[(padding[0], padding[0]), (padding[1], padding[1])],
        dimension_numbers=("NCHW", "OIHW", "NCHW"))
    return out + b.reshape(1, -1, 1, 1)


def gcn_ref(x, params, k):
    p = (k - 1) // 2
    x_l = conv2d_ref(x, params["wl1"], params["bl1"], (p, 0))
    x_l = conv2d_ref(x_l, params["wl2"], params["bl2"], (0, p))
    x_r = conv2d_ref(x, params["wr1"], params["br1"], (p, 0))
    x_r = conv2d_ref(x_r, params["wr2"], params["br2"], (0, p))
    return x_l + x_r


# ---------------------------------------------------------------------------
if __name__ == "__main__":
    N, C, H, W = 2, 4, 16, 16   # NCHW, matching the PyTorch module
    OUT_C = 8

    key = jax.random.PRNGKey(0)
    kx, kp = jax.random.split(key)
    x = jax.random.normal(kx, (N, C, H, W), jnp.float32)
    params = init_gcn_params(kp, C, OUT_C, K)

    out = jax.block_until_ready(gcn_forward(x, params, K))
    ref = jax.block_until_ready(gcn_ref(x, params, K))

    assert out.shape == (N, OUT_C, H, W), out.shape
    err = float(jnp.max(jnp.abs(out - ref)))
    assert err < 1e-4, err

    print("KERNEL_OK")
</pallas_src>

<mosaic_0001>
module attributes {stable_mosaic.version = 11 : i64} {
  func.func @_gcn_kernel(%arg0: i32, %arg1: memref<8x256xf32, #tpu.memory_space<vmem>>, %arg2: memref<16x56xf32, #tpu.memory_space<vmem>>, %arg3: memref<16x1xf32, #tpu.memory_space<vmem>>, %arg4: memref<8x112xf32, #tpu.memory_space<vmem>>, %arg5: memref<8x1xf32, #tpu.memory_space<vmem>>, %arg6: memref<16x256xf32, #tpu.memory_space<vmem>>, %arg7: memref<4x1792xf32, #tpu.memory_space<vmem>>, %arg8: memref<56x1536xf32, #tpu.memory_space<vmem>>, %arg9: memref<16x1792xf32, #tpu.memory_space<vmem>>, %arg10: memref<112x1536xf32, #tpu.memory_space<vmem>>) attributes {dimension_semantics = [#tpu.dimension_semantics<arbitrary>], iteration_bounds = array<i64: 1>, scalar_prefetch = 0 : i64, scratch_operands = 4 : i64, tpu.core_type = #tpu.core_type<tc>, window_params = [{pipeline_mode = #tpu.pipeline_mode<synchronous>, transform_indices = @transform_0, window_bounds = array<i64: 8, 256>}, {pipeline_mode = #tpu.pipeline_mode<synchronous>, transform_indices = @transform_1, window_bounds = array<i64: 16, 56>}, {pipeline_mode = #tpu.pipeline_mode<synchronous>, transform_indices = @transform_2, window_bounds = array<i64: 16, 1>}, {pipeline_mode = #tpu.pipeline_mode<synchronous>, transform_indices = @transform_3, window_bounds = array<i64: 8, 112>}, {pipeline_mode = #tpu.pipeline_mode<synchronous>, transform_indices = @transform_4, window_bounds = array<i64: 8, 1>}, {pipeline_mode = #tpu.pipeline_mode<synchronous>, transform_indices = @transform_5, window_bounds = array<i64: 16, 256>}]} {
    %cst = arith.constant 0.000000e+00 : f32
    %0 = vector.broadcast %cst : f32 to vector<4x1792xf32>
    %c0 = arith.constant 0 : index
    %c0_0 = arith.constant 0 : index
    %1 = vector.load %arg7[%c0, %c0_0] : memref<4x1792xf32, #tpu.memory_space<vmem>>, vector<4x1792xf32>
    tpu.vector_store %arg7[%c0, %c0_0], %0 {strides = array<i32>} : memref<4x1792xf32, #tpu.memory_space<vmem>>, vector<4x1792xf32>,
    %cst_1 = arith.constant 0.000000e+00 : f32
    %2 = vector.broadcast %cst_1 : f32 to vector<16x256xf32>
    %c0_2 = arith.constant 0 : index
    %c1536 = arith.constant 1536 : index
    %3 = vector.load %arg9[%c0_2, %c1536] : memref<16x1792xf32, #tpu.memory_space<vmem>>, vector<16x256xf32>
    tpu.vector_store %arg9[%c0_2, %c1536], %2 {strides = array<i32>} : memref<16x1792xf32, #tpu.memory_space<vmem>>, vector<16x256xf32>,
    %c0_3 = arith.constant 0 : index
    %c0_4 = arith.constant 0 : index
    %4 = vector.load %arg1[%c0_3, %c0_4] : memref<8x256xf32, #tpu.memory_space<vmem>>, vector<4x16xf32>
    %c0_5 = arith.constant 0 : index
    %c99 = arith.constant 99 : index
    %5 = vector.load %arg7[%c0_5, %c99] : memref<4x1792xf32, #tpu.memory_space<vmem>>, vector<4x16xf32>
    tpu.vector_store %arg7[%c0_5, %c99], %4 {strides = array<i32>} : memref<4x1792xf32, #tpu.memory_space<vmem>>, vector<4x16xf32>,
    %c0_6 = arith.constant 0 : index
    %c16 = arith.constant 16 : index
    %6 = vector.load %arg1[%c0_6, %c16] : memref<8x256xf32, #tpu.memory_space<vmem>>, vector<4x16xf32>
    %c0_7 = arith.constant 0 : index
    %c131 = arith.constant 131 : index
    %7 = vector.load %arg7[%c0_7, %c131] : memref<4x1792xf32, #tpu.memory_space<vmem>>, vector<4x16xf32>
    tpu.vector_store %arg7[%c0_7, %c131], %6 {strides = array<i32>} : memref<4x1792xf32, #tpu.memory_space<vmem>>, vector<4x16xf32>,
    %c0_8 = arith.constant 0 : index
    %c32 = arith.constant 32 : index
    %8 = vector.load %arg1[%c0_8, %c32] : memref<8x256xf32, #tpu.memory_space<vmem>>, vector<4x16xf32>
    %c0_9 = arith.constant 0 : index
    %c163 = arith.constant 163 : index
    %9 = vector.load %arg7[%c0_9, %c163] : memref<4x1792xf32, #tpu.memory_space<vmem>>, vector<4x16xf32>
    tpu.vector_store %arg7[%c0_9, %c163], %8 {strides = array<i32>} : memref<4x1792xf32, #tpu.memory_space<vmem>>, vector<4x16xf32>,
    %c0_10 = arith.constant 0 : index
    %c48 = arith.constant 48 : index
    %10 = vector.load %arg1[%c0_10, %c48] : memref<8x256xf32, #tpu.memory_space<vmem>>, vector<4x16xf32>
    %c0_11 = arith.constant 0 : index
    %c195 = arith.constant 195 : index
    %11 = vector.load %arg7[%c0_11, %c195] : memref<4x1792xf32, #tpu.memory_space<vmem>>, vector<4x16xf32>
    tpu.vector_store %arg7[%c0_11, %c195], %10 {strides = array<i32>} : memref<4x1792xf32, #tpu.memory_space<vmem>>, vector<4x16xf32>,
    %c0_12 = arith.constant 0 : index
    %c64 = arith.constant 64 : index
    %12 = vector.load %arg1[%c0_12, %c64] : memref<8x256xf32, #tpu.memory_space<vmem>>, vector<4x16xf32>
    %c0_13 = arith.constant 0 : index
    %c227 = arith.constant 227 : index
    %13 = vector.load %arg7[%c0_13, %c227] : memref<4x1792xf32, #tpu.memory_space<vmem>>, vector<4x16xf32>
    tpu.vector_store %arg7[%c0_13, %c227], %12 {strides = array<i32>} : memref<4x1792xf32, #tpu.memory_space<vmem>>, vector<4x16xf32>,
    %c0_14 = arith.constant 0 : index
    %c80 = arith.constant 80 : index
    %14 = vector.load %arg1[%c0_14, %c80] : memref<8x256xf32, #tpu.memory_space<vmem>>, vector<4x16xf32>
    %c0_15 = arith.constant 0 : index
    %c259 = arith.constant 259 : index
    %15 = vector.load %arg7[%c0_15, %c259] : memref<4x1792xf32, #tpu.memory_space<vmem>>, vector<4x16xf32>
    tpu.vector_store %arg7[%c0_15, %c259], %14 {strides = array<i32>} : memref<4x1792xf32, #tpu.memory_space<vmem>>, vector<4x16xf32>,
    %c0_16 = arith.constant 0 : index
    %c96 = arith.constant 96 : index
    %16 = vector.load %arg1[%c0_16, %c96] : memref<8x256xf32, #tpu.memory_space<vmem>>, vector<4x16xf32>
    %c0_17 = arith.constant 0 : index
    %c291 = arith.constant 291 : index
    %17 = vector.load %arg7[%c0_17, %c291] : memref<4x1792xf32, #tpu.memory_space<vmem>>, vector<4x16xf32>
    tpu.vector_store %arg7[%c0_17, %c291], %16 {strides = array<i32>} : memref<4x1792xf32, #tpu.memory_space<vmem>>, vector<4x16xf32>,
    %c0_18 = arith.constant 0 : index
    %c112 = arith.constant 112 : index
    %18 = vector.load %arg1[%c0_18, %c112] : memref<8x256xf32, #tpu.memory_space<vmem>>, vector<4x16xf32>
    %c0_19 = arith.constant 0 : index
    %c323 = arith.constant 323 : index
    %19 = vector.load %arg7[%c0_19, %c323] : memref<4x1792xf32, #tpu.memory_space<vmem>>, vector<4x16xf32>
    tpu.vector_store %arg7[%c0_19, %c323], %18 {strides = array<i32>} : memref<4x1792xf32, #tpu.memory_space<vmem>>, vector<4x16xf32>,
    %c0_20 = arith.constant 0 : index
    %c128 = arith.constant 128 : index
    %20 = vector.load %arg1[%c0_20, %c128] : memref<8x256xf32, #tpu.memory_space<vmem>>, vector<4x16xf32>
    %c0_21 = arith.constant 0 : index
    %c355 = arith.constant 355 : index
    %21 = vector.load %arg7[%c0_21, %c355] : memref<4x1792xf32, #tpu.memory_space<vmem>>, vector<4x16xf32>
    tpu.vector_store %arg7[%c0_21, %c355], %20 {strides = array<i32>} : memref<4x1792xf32, #tpu.memory_space<vmem>>, vector<4x16xf32>,
    %c0_22 = arith.constant 0 : index
    %c144 = arith.constant 144 : index
    %22 = vector.load %arg1[%c0_22, %c144] : memref<8x256xf32, #tpu.memory_space<vmem>>, vector<4x16xf32>
    %c0_23 = arith.constant 0 : index
    %c387 = arith.constant 387 : index
    %23 = vector.load %arg7[%c0_23, %c387] : memref<4x1792xf32, #tpu.memory_space<vmem>>, vector<4x16xf32>
    tpu.vector_store %arg7[%c0_23, %c387], %22 {strides = array<i32>} : memref<4x1792xf32, #tpu.memory_space<vmem>>, vector<4x16xf32>,
    %c0_24 = arith.constant 0 : index
    %c160 = arith.constant 160 : index
    %24 = vector.load %arg1[%c0_24, %c160] : memref<8x256xf32, #tpu.memory_space<vmem>>, vector<4x16xf32>
    %c0_25 = arith.constant 0 : index
    %c419 = arith.constant 419 : index
    %25 = vector.load %arg7[%c0_25, %c419] : memref<4x1792xf32, #tpu.memory_space<vmem>>, vector<4x16xf32>
    tpu.vector_store %arg7[%c0_25, %c419], %24 {strides = array<i32>} : memref<4x1792xf32, #tpu.memory_space<vmem>>, vector<4x16xf32>,
    %c0_26 = arith.constant 0 : index
    %c176 = arith.constant 176 : index
    %26 = vector.load %arg1[%c0_26, %c176] : memref<8x256xf32, #tpu.memory_space<vmem>>, vector<4x16xf32>
    %c0_27 = arith.constant 0 : index
    %c451 = arith.constant 451 : index
    %27 = vector.load %arg7[%c0_27, %c451] : memref<4x1792xf32, #tpu.memory_space<vmem>>, vector<4x16xf32>
    tpu.vector_store %arg7[%c0_27, %c451], %26 {strides = array<i32>} : memref<4x1792xf32, #tpu.memory_space<vmem>>, vector<4x16xf32>,
    %c0_28 = arith.constant 0 : index
    %c192 = arith.constant 192 : index
    %28 = vector.load %arg1[%c0_28, %c192] : memref<8x256xf32, #tpu.memory_space<vmem>>, vector<4x16xf32>
    %c0_29 = arith.constant 0 : index
    %c483 = arith.constant 483 : index
    %29 = vector.load %arg7[%c0_29, %c483] : memref<4x1792xf32, #tpu.memory_space<vmem>>, vector<4x16xf32>
    tpu.vector_store %arg7[%c0_29, %c483], %28 {strides = array<i32>} : memref<4x1792xf32, #tpu.memory_space<vmem>>, vector<4x16xf32>,
    %c0_30 = arith.constant 0 : index
    %c208 = arith.constant 208 : index
    %30 = vector.load %arg1[%c0_30, %c208] : memref<8x256xf32, #tpu.memory_space<vmem>>, vector<4x16xf32>
    %c0_31 = arith.constant 0 : index
    %c515 = arith.constant 515 : index
    %31 = vector.load %arg7[%c0_31, %c515] : memref<4x1792xf32, #tpu.memory_space<vmem>>, vector<4x16xf32>
    tpu.vector_store %arg7[%c0_31, %c515], %30 {strides = array<i32>} : memref<4x1792xf32, #tpu.memory_space<vmem>>, vector<4x16xf32>,
    %c0_32 = arith.constant 0 : index
    %c224 = arith.constant 224 : index
    %32 = vector.load %arg1[%c0_32, %c224] : memref<8x256xf32, #tpu.memory_space<vmem>>, vector<4x16xf32>
    %c0_33 = arith.constant 0 : index
    %c547 = arith.constant 547 : index
    %33 = vector.load %arg7[%c0_33, %c547] : memref<4x1792xf32, #tpu.memory_space<vmem>>, vector<4x16xf32>
    tpu.vector_store %arg7[%c0_33, %c547], %32 {strides = array<i32>} : memref<4x1792xf32, #tpu.memory_space<vmem>>, vector<4x16xf32>,
    %c0_34 = arith.constant 0 : index
    %c240 = arith.constant 240 : index
    %34 = vector.load %arg1[%c0_34, %c240] : memref<8x256xf32, #tpu.memory_space<vmem>>, vector<4x16xf32>
    %c0_35 = arith.constant 0 : index
    %c579 = arith.constant 579 : index
    %35 = vector.load %arg7[%c0_35, %c579] : memref<4x1792xf32, #tpu.memory_space<vmem>>, vector<4x16xf32>
    tpu.vector_store %arg7[%c0_35, %c579], %34 {strides = array<i32>} : memref<4x1792xf32, #tpu.memory_space<vmem>>, vector<4x16xf32>,
    %c4 = arith.constant 4 : index
    %c0_36 = arith.constant 0 : index
    %36 = vector.load %arg1[%c4, %c0_36] : memref<8x256xf32, #tpu.memory_space<vmem>>, vector<4x16xf32>
    %c0_37 = arith.constant 0 : index
    %c867 = arith.constant 867 : index
    %37 = vector.load %arg7[%c0_37, %c867] : memref<4x1792xf32, #tpu.memory_space<vmem>>, vector<4x16xf32>
    tpu.vector_store %arg7[%c0_37, %c867], %36 {strides = array<i32>} : memref<4x1792xf32, #tpu.memory_space<vmem>>, vector<4x16xf32>,
    %c4_38 = arith.constant 4 : index
    %c16_39 = arith.constant 16 : index
    %38 = vector.load %arg1[%c4_38, %c16_39] : memref<8x256xf32, #tpu.memory_space<vmem>>, vector<4x16xf32>
    %c0_40 = arith.constant 0 : index
    %c899 = arith.constant 899 : index
    %39 = vector.load %arg7[%c0_40, %c899] : memref<4x1792xf32, #tpu.memory_space<vmem>>, vector<4x16xf32>
    tpu.vector_store %arg7[%c0_40, %c899], %38 {strides = array<i32>} : memref<4x1792xf32, #tpu.memory_space<vmem>>, vector<4x16xf32>,
    %c4_41 = arith.constant 4 : index
    %c32_42 = arith.constant 32 : index
    %40 = vector.load %arg1[%c4_41, %c32_42] : memref<8x256xf32, #tpu.memory_space<vmem>>, vector<4x16xf32>
    %c0_43 = arith.constant 0 : index
    %c931 = arith.constant 931 : index
    %41 = vector.load %arg7[%c0_43, %c931] : memref<4x1792xf32, #tpu.memory_space<vmem>>, vector<4x16xf32>
    tpu.vector_store %arg7[%c0_43, %c931], %40 {strides = array<i32>} : memref<4x1792xf32, #tpu.memory_space<vmem>>, vector<4x16xf32>,
    %c4_44 = arith.constant 4 : index
    %c48_45 = arith.constant 48 : index
    %42 = vector.load %arg1[%c4_44, %c48_45] : memref<8x256xf32, #tpu.memory_space<vmem>>, vector<4x16xf32>
    %c0_46 = arith.constant 0 : index
    %c963 = arith.constant 963 : index
    %43 = vector.load %arg7[%c0_46, %c963] : memref<4x1792xf32, #tpu.memory_space<vmem>>, vector<4x16xf32>
    tpu.vector_store %arg7[%c0_46, %c963], %42 {strides = array<i32>} : memref<4x1792xf32, #tpu.memory_space<vmem>>, vector<4x16xf32>,
    %c4_47 = arith.constant 4 : index
    %c64_48 = arith.constant 64 : index
    %44 = vector.load %arg1[%c4_47, %c64_48] : memref<8x256xf32, #tpu.memory_space<vmem>>, vector<4x16xf32>
    %c0_49 = arith.constant 0 : index
    %c995 = arith.constant 995 : index
    %45 = vector.load %arg7[%c0_49, %c995] : memref<4x1792xf32, #tpu.memory_space<vmem>>, vector<4x16xf32>
    tpu.vector_store %arg7[%c0_49, %c995], %44 {strides = array<i32>} : memref<4x1792xf32, #tpu.memory_space<vmem>>, vector<4x16xf32>,
    %c4_50 = arith.constant 4 : index
    %c80_51 = arith.constant 80 : index
    %46 = vector.load %arg1[%c4_50, %c80_51] : memref<8x256xf32, #tpu.memory_space<vmem>>, vector<4x16xf32>
    %c0_52 = arith.constant 0 : index
    %c1027 = arith.constant 1027 : index
    %47 = vector.load %arg7[%c0_52, %c1027] : memref<4x1792xf32, #tpu.memory_space<vmem>>, vector<4x16xf32>
    tpu.vector_store %arg7[%c0_52, %c1027], %46 {strides = array<i32>} : memref<4x1792xf32, #tpu.memory_space<vmem>>, vector<4x16xf32>,
    %c4_53 = arith.constant 4 : index
    %c96_54 = arith.constant 96 : index
    %48 = vector.load %arg1[%c4_53, %c96_54] : memref<8x256xf32, #tpu.memory_space<vmem>>, vector<4x16xf32>
    %c0_55 = arith.constant 0 : index
    %c1059 = arith.constant 1059 : index
    %49 = vector.load %arg7[%c0_55, %c1059] : memref<4x1792xf32, #tpu.memory_space<vmem>>, vector<4x16xf32>
    tpu.vector_store %arg7[%c0_55, %c1059], %48 {strides = array<i32>} : memref<4x1792xf32, #tpu.memory_space<vmem>>, vector<4x16xf32>,
    %c4_56 = arith.constant 4 : index
    %c112_57 = arith.constant 112 : index
    %50 = vector.load %arg1[%c4_56, %c112_57] : memref<8x256xf32, #tpu.memory_space<vmem>>, vector<4x16xf32>
    %c0_58 = arith.constant 0 : index
    %c1091 = arith.constant 1091 : index
    %51 = vector.load %arg7[%c0_58, %c1091] : memref<4x1792xf32, #tpu.memory_space<vmem>>, vector<4x16xf32>
    tpu.vector_store %arg7[%c0_58, %c1091], %50 {strides = array<i32>} : memref<4x1792xf32, #tpu.memory_space<vmem>>, vector<4x16xf32>,
    %c4_59 = arith.constant 4 : index
    %c128_60 = arith.constant 128 : index
    %52 = vector.load %arg1[%c4_59, %c128_60] : memref<8x256xf32, #tpu.memory_space<vmem>>, vector<4x16xf32>
    %c0_61 = arith.constant 0 : index
    %c1123 = arith.constant 1123 : index
    %53 = vector.load %arg7[%c0_61, %c1123] : memref<4x1792xf32, #tpu.memory_space<vmem>>, vector<4x16xf32>
    tpu.vector_store %arg7[%c0_61, %c1123], %52 {strides = array<i32>} : memref<4x1792xf32, #tpu.memory_space<vmem>>, vector<4x16xf32>,
    %c4_62 = arith.constant 4 : index
    %c144_63 = arith.constant 144 : index
    %54 = vector.load %arg1[%c4_62, %c144_63] : memref<8x256xf32, #tpu.memory_space<vmem>>, vector<4x16xf32>
    %c0_64 = arith.constant 0 : index
    %c1155 = arith.constant 1155 : index
    %55 = vector.load %arg7[%c0_64, %c1155] : memref<4x1792xf32, #tpu.memory_space<vmem>>, vector<4x16xf32>
    tpu.vector_store %arg7[%c0_64, %c1155], %54 {strides = array<i32>} : memref<4x1792xf32, #tpu.memory_space<vmem>>, vector<4x16xf32>,
    %c4_65 = arith.constant 4 : index
    %c160_66 = arith.constant 160 : index
    %56 = vector.load %arg1[%c4_65, %c160_66] : memref<8x256xf32, #tpu.memory_space<vmem>>, vector<4x16xf32>
    %c0_67 = arith.constant 0 : index
    %c1187 = arith.constant 1187 : index
    %57 = vector.load %arg7[%c0_67, %c1187] : memref<4x1792xf32, #tpu.memory_space<vmem>>, vector<4x16xf32>
    tpu.vector_store %arg7[%c0_67, %c1187], %56 {strides = array<i32>} : memref<4x1792xf32, #tpu.memory_space<vmem>>, vector<4x16xf32>,
    %c4_68 = arith.constant 4 : index
    %c176_69 = arith.constant 176 : index
    %58 = vector.load %arg1[%c4_68, %c176_69] : memref<8x256xf32, #tpu.memory_space<vmem>>, vector<4x16xf32>
    %c0_70 = arith.constant 0 : index
    %c1219 = arith.constant 1219 : index
    %59 = vector.load %arg7[%c0_70, %c1219] : memref<4x1792xf32, #tpu.memory_space<vmem>>, vector<4x16xf32>
    tpu.vector_store %arg7[%c0_70, %c1219], %58 {strides = array<i32>} : memref<4x1792xf32, #tpu.memory_space<vmem>>, vector<4x16xf32>,
    %c4_71 = arith.constant 4 : index
    %c192_72 = arith.constant 192 : index
    %60 = vector.load %arg1[%c4_71, %c192_72] : memref<8x256xf32, #tpu.memory_space<vmem>>, vector<4x16xf32>
    %c0_73 = arith.constant 0 : index
    %c1251 = arith.constant 1251 : index
    %61 = vector.load %arg7[%c0_73, %c1251] : memref<4x1792xf32, #tpu.memory_space<vmem>>, vector<4x16xf32>
    tpu.vector_store %arg7[%c0_73, %c1251], %60 {strides = array<i32>} : memref<4x1792xf32, #tpu.memory_space<vmem>>, vector<4x16xf32>,
    %c4_74 = arith.constant 4 : index
    %c208_75 = arith.constant 208 : index
    %62 = vector.load %arg1[%c4_74, %c208_75] : memref<8x256xf32, #tpu.memory_space<vmem>>, vector<4x16xf32>
    %c0_76 = arith.constant 0 : index
    %c1283 = arith.constant 1283 : index
    %63 = vector.load %arg7[%c0_76, %c1283] : memref<4x1792xf32, #tpu.memory_space<vmem>>, vector<4x16xf32>
    tpu.vector_store %arg7[%c0_76, %c1283], %62 {strides = array<i32>} : memref<4x1792xf32, #tpu.memory_space<vmem>>, vector<4x16xf32>,
    %c4_77 = arith.constant 4 : index
    %c224_78 = arith.constant 224 : index
    %64 = vector.load %arg1[%c4_77, %c224_78] : memref<8x256xf32, #tpu.memory_space<vmem>>, vector<4x16xf32>
    %c0_79 = arith.constant 0 : index
    %c1315 = arith.constant 1315 : index
    %65 = vector.load %arg7[%c0_79, %c1315] : memref<4x1792xf32, #tpu.memory_space<vmem>>, vector<4x16xf32>
    tpu.vector_store %arg7[%c0_79, %c1315], %64 {strides = array<i32>} : memref<4x1792xf32, #tpu.memory_space<vmem>>, vector<4x16xf32>,
    %c4_80 = arith.constant 4 : index
    %c240_81 = arith.constant 240 : index
    %66 = vector.load %arg1[%c4_80, %c240_81] : memref<8x256xf32, #tpu.memory_space<vmem>>, vector<4x16xf32>
    %c0_82 = arith.constant 0 : index
    %c1347 = arith.constant 1347 : index
    %67 = vector.load %arg7[%c0_82, %c1347] : memref<4x1792xf32, #tpu.memory_space<vmem>>, vector<4x16xf32>
    tpu.vector_store %arg7[%c0_82, %c1347], %66 {strides = array<i32>} : memref<4x1792xf32, #tpu.memory_space<vmem>>, vector<4x16xf32>,
    %c0_83 = arith.constant 0 : index
    %c0_84 = arith.constant 0 : index
    %68 = vector.load %arg7[%c0_83, %c0_84] : memref<4x1792xf32, #tpu.memory_space<vmem>>, vector<4x1536xf32>
    %c0_85 = arith.constant 0 : index
    %c0_86 = arith.constant 0 : index
    %69 = vector.load %arg8[%c0_85, %c0_86] : memref<56x1536xf32, #tpu.memory_space<vmem>>, vector<4x1536xf32>
    tpu.vector_store %arg8[%c0_85, %c0_86], %68 {strides = array<i32>} : memref<56x1536xf32, #tpu.memory_space<vmem>>, vector<4x1536xf32>,
    %c0_87 = arith.constant 0 : index
    %c0_88 = arith.constant 0 : index
    %70 = vector.load %arg7[%c0_87, %c0_88] : memref<4x1792xf32, #tpu.memory_space<vmem>>, vector<4x1536xf32>
    %c28 = arith.constant 28 : index
    %c0_89 = arith.constant 0 : index
    %71 = vector.load %arg8[%c28, %c0_89] : memref<56x1536xf32, #tpu.memory_space<vmem>>, vector<4x1536xf32>
    tpu.vector_store %arg8[%c28, %c0_89], %70 {strides = array<i32>} : memref<56x1536xf32, #tpu.memory_space<vmem>>, vector<4x1536xf32>,
    %c0_90 = arith.constant 0 : index
    %c32_91 = arith.constant 32 : index
    %72 = vector.load %arg7[%c0_90, %c32_91] : memref<4x1792xf32, #tpu.memory_space<vmem>>, vector<4x1536xf32>
    %c4_92 = arith.constant 4 : index
    %c0_93 = arith.constant 0 : index
    %73 = vector.load %arg8[%c4_92, %c0_93] : memref<56x1536xf32, #tpu.memory_space<vmem>>, vector<4x1536xf32>
    tpu.vector_store %arg8[%c4_92, %c0_93], %72 {strides = array<i32>} : memref<56x1536xf32, #tpu.memory_space<vmem>>, vector<4x1536xf32>,
    %c0_94 = arith.constant 0 : index
    %c1 = arith.constant 1 : index
    %74 = vector.load %arg7[%c0_94, %c1] : memref<4x1792xf32, #tpu.memory_space<vmem>>, vector<4x1536xf32>
    %c32_95 = arith.constant 32 : index
    %c0_96 = arith.constant 0 : index
    %75 = vector.load %arg8[%c32_95, %c0_96] : memref<56x1536xf32, #tpu.memory_space<vmem>>, vector<4x1536xf32>
    tpu.vector_store %arg8[%c32_95, %c0_96], %74 {strides = array<i32>} : memref<56x1536xf32, #tpu.memory_space<vmem>>, vector<4x1536xf32>,
    %c0_97 = arith.constant 0 : index
    %c64_98 = arith.constant 64 : index
    %76 = vector.load %arg7[%c0_97, %c64_98] : memref<4x1792xf32, #tpu.memory_space<vmem>>, vector<4x1536xf32>
    %c8 = arith.constant 8 : index
    %c0_99 = arith.constant 0 : index
    %77 = vector.load %arg8[%c8, %c0_99] : memref<56x1536xf32, #tpu.memory_space<vmem>>, vector<4x1536xf32>
    tpu.vector_store %arg8[%c8, %c0_99], %76 {strides = array<i32>} : memref<56x1536xf32, #tpu.memory_space<vmem>>, vector<4x1536xf32>,
    %c0_100 = arith.constant 0 : index
    %c2 = arith.constant 2 : index
    %78 = vector.load %arg7[%c0_100, %c2] : memref<4x1792xf32, #tpu.memory_space<vmem>>, vector<4x1536xf32>
    %c36 = arith.constant 36 : index
    %c0_101 = arith.constant 0 : index
    %79 = vector.load %arg8[%c36, %c0_101] : memref<56x1536xf32, #tpu.memory_space<vmem>>, vector<4x1536xf32>
    tpu.vector_store %arg8[%c36, %c0_101], %78 {strides = array<i32>} : memref<56x1536xf32, #tpu.memory_space<vmem>>, vector<4x1536xf32>,
    %c0_102 = arith.constant 0 : index
    %c96_103 = arith.constant 96 : index
    %80 = vector.load %arg7[%c0_102, %c96_103] : memref<4x1792xf32, #tpu.memory_space<vmem>>, vector<4x1536xf32>
    %c12 = arith.constant 12 : index
    %c0_104 = arith.constant 0 : index
    %81 = vector.load %arg8[%c12, %c0_104] : memref<56x1536xf32, #tpu.memory_space<vmem>>, vector<4x1536xf32>
    tpu.vector_store %arg8[%c12, %c0_104], %80 {strides = array<i32>} : memref<56x1536xf32, #tpu.memory_space<vmem>>, vector<4x1536xf32>,
    %c0_105 = arith.constant 0 : index
    %c3 = arith.constant 3 : index
    %82 = vector.load %arg7[%c0_105, %c3] : memref<4x1792xf32, #tpu.memory_space<vmem>>, vector<4x1536xf32>
    %c40 = arith.constant 40 : index
    %c0_106 = arith.constant 0 : index
    %83 = vector.load %arg8[%c40, %c0_106] : memref<56x1536xf32, #tpu.memory_space<vmem>>, vector<4x1536xf32>
    tpu.vector_store %arg8[%c40, %c0_106], %82 {strides = array<i32>} : memref<56x1536xf32, #tpu.memory_space<vmem>>, vector<4x1536xf32>,
    %c0_107 = arith.constant 0 : index
    %c128_108 = arith.constant 128 : index
    %84 = vector.load %arg7[%c0_107, %c128_108] : memref<4x1792xf32, #tpu.memory_space<vmem>>, vector<4x1536xf32>
    %c16_109 = arith.constant 16 : index
    %c0_110 = arith.constant 0 : index
    %85 = vector.load %arg8[%c16_109, %c0_110] : memref<56x1536xf32, #tpu.memory_space<vmem>>, vector<4x1536xf32>
    tpu.vector_store %arg8[%c16_109, %c0_110], %84 {strides = array<i32>} : memref<56x1536xf32, #tpu.memory_space<vmem>>, vector<4x1536xf32>,
    %c0_111 = arith.constant 0 : index
    %c4_112 = arith.constant 4 : index
    %86 = vector.load %arg7[%c0_111, %c4_112] : memref<4x1792xf32, #tpu.memory_space<vmem>>, vector<4x1536xf32>
    %c44 = arith.constant 44 : index
    %c0_113 = arith.constant 0 : index
    %87 = vector.load %arg8[%c44, %c0_113] : memref<56x1536xf32, #tpu.memory_space<vmem>>, vector<4x1536xf32>
    tpu.vector_store %arg8[%c44, %c0_113], %86 {strides = array<i32>} : memref<56x1536xf32, #tpu.memory_space<vmem>>, vector<4x1536xf32>,
    %c0_114 = arith.constant 0 : index
    %c160_115 = arith.constant 160 : index
    %88 = vector.load %arg7[%c0_114, %c160_115] : memref<4x1792xf32, #tpu.memory_space<vmem>>, vector<4x1536xf32>
    %c20 = arith.constant 20 : index
    %c0_116 = arith.constant 0 : index
    %89 = vector.load %arg8[%c20, %c0_116] : memref<56x1536xf32, #tpu.memory_space<vmem>>, vector<4x1536xf32>
    tpu.vector_store %arg8[%c20, %c0_116], %88 {strides = array<i32>} : memref<56x1536xf32, #tpu.memory_space<vmem>>, vector<4x1536xf32>,
    %c0_117 = arith.constant 0 : index
    %c5 = arith.constant 5 : index
    %90 = vector.load %arg7[%c0_117, %c5] : memref<4x1792xf32, #tpu.memory_space<vmem>>, vector<4x1536xf32>
    %c48_118 = arith.constant 48 : index
    %c0_119 = arith.constant 0 : index
    %91 = vector.load %arg8[%c48_118, %c0_119] : memref<56x1536xf32, #tpu.memory_space<vmem>>, vector<4x1536xf32>
    tpu.vector_store %arg8[%c48_118, %c0_119], %90 {strides = array<i32>} : memref<56x1536xf32, #tpu.memory_space<vmem>>, vector<4x1536xf32>,
    %c0_120 = arith.constant 0 : index
    %c192_121 = arith.constant 192 : index
    %92 = vector.load %arg7[%c0_120, %c192_121] : memref<4x1792xf32, #tpu.memory_space<vmem>>, vector<4x1536xf32>
    %c24 = arith.constant 24 : index
    %c0_122 = arith.constant 0 : index
    %93 = vector.load %arg8[%c24, %c0_122] : memref<56x1536xf32, #tpu.memory_space<vmem>>, vector<4x1536xf32>
    tpu.vector_store %arg8[%c24, %c0_122], %92 {strides = array<i32>} : memref<56x1536xf32, #tpu.memory_space<vmem>>, vector<4x1536xf32>,
    %c0_123 = arith.constant 0 : index
    %c6 = arith.constant 6 : index
    %94 = vector.load %arg7[%c0_123, %c6] : memref<4x1792xf32, #tpu.memory_space<vmem>>, vector<4x1536xf32>
    %c52 = arith.constant 52 : index
    %c0_124 = arith.constant 0 : index
    %95 = vector.load %arg8[%c52, %c0_124] : memref<56x1536xf32, #tpu.memory_space<vmem>>, vector<4x1536xf32>
    tpu.vector_store %arg8[%c52, %c0_124], %94 {strides = array<i32>} : memref<56x1536xf32, #tpu.memory_space<vmem>>, vector<4x1536xf32>,
    %c0_125 = arith.constant 0 : index
    %c0_126 = arith.constant 0 : index
    %96 = vector.load %arg2[%c0_125, %c0_126] : memref<16x56xf32, #tpu.memory_space<vmem>>, vector<16x56xf32>
    %c0_127 = arith.constant 0 : index
    %c0_128 = arith.constant 0 : index
    %97 = vector.load %arg8[%c0_127, %c0_128] : memref<56x1536xf32, #tpu.memory_space<vmem>>, vector<56x1536xf32>
    %cst_129 = arith.constant dense<0.000000e+00> : vector<16x1536xf32>
    %98 = tpu.matmul %96, %97, %cst_129 {dimension_numbers = #tpu.dot_dimension_numbers<[1], [0], [0], [1], [0, 0, 1, 1], [], []>} : vector<16x56xf32>, vector<56x1536xf32>, vector<16x1536xf32> -> vector<16x1536xf32>
    %c0_130 = arith.constant 0 : index
    %c0_131 = arith.constant 0 : index
    %99 = vector.load %arg3[%c0_130, %c0_131] : memref<16x1xf32, #tpu.memory_space<vmem>>, vector<16x1xf32>
    %100 = vector.broadcast %99 : vector<16x1xf32> to vector<16x1536xf32>
    %101 = arith.addf %98, %100 : vector<16x1536xf32>
    %102 = tpu.iota {dimensions = array<i32: 1>} : vector<1x1536xi32>
    %c31_i32 = arith.constant 31 : i32
    %103 = vector.broadcast %c31_i32 : i32 to vector<1x1536xi32>
    %104 = arith.andi %102, %103 : vector<1x1536xi32>
    %c5_i32 = arith.constant 5 : i32
    %105 = vector.broadcast %c5_i32 : i32 to vector<1x1536xi32>
    %106 = arith.shrsi %102, %105 : vector<1x1536xi32>
    %c24_i32 = arith.constant 24 : i32
    %107 = vector.broadcast %c24_i32 : i32 to vector<1x1536xi32>
    %108 = arith.cmpi sge, %106, %107 : vector<1x1536xi32>
    %c24_i32_132 = arith.constant 24 : i32
    %109 = vector.broadcast %c24_i32_132 : i32 to vector<1x1536xi32>
    %110 = arith.subi %106, %109 : vector<1x1536xi32>
    %111 = arith.select %108, %110, %106 : vector<1x1536xi1>, vector<1x1536xi32>
    %c16_i32 = arith.constant 16 : i32
    %112 = vector.broadcast %c16_i32 : i32 to vector<1x1536xi32>
    %113 = arith.cmpi slt, %111, %112 : vector<1x1536xi32>
    %c3_i32 = arith.constant 3 : i32
    %114 = vector.broadcast %c3_i32 : i32 to vector<1x1536xi32>
    %115 = arith.cmpi sge, %104, %114 : vector<1x1536xi32>
    %116 = arith.andi %113, %115 : vector<1x1536xi1>
    %c19_i32 = arith.constant 19 : i32
    %117 = vector.broadcast %c19_i32 : i32 to vector<1x1536xi32>
    %118 = arith.cmpi slt, %104, %117 : vector<1x1536xi32>
    %119 = arith.andi %116, %118 : vector<1x1536xi1>
    %120 = arith.extui %119 : vector<1x1536xi1> to vector<1x1536xi32>
    %121 = arith.sitofp %120 : vector<1x1536xi32> to vector<1x1536xf32>
    %c22_i32 = arith.constant 22 : i32
    %122 = vector.broadcast %c22_i32 : i32 to vector<1x1536xi32>
    %123 = arith.cmpi slt, %111, %122 : vector<1x1536xi32>
    %c3_i32_133 = arith.constant 3 : i32
    %124 = vector.broadcast %c3_i32_133 : i32 to vector<1x1536xi32>
    %125 = arith.cmpi sge, %104, %124 : vector<1x1536xi32>
    %126 = arith.andi %123, %125 : vector<1x1536xi1>
    %c13_i32 = arith.constant 13 : i32
    %127 = vector.broadcast %c13_i32 : i32 to vector<1x1536xi32>
    %128 = arith.cmpi slt, %104, %127 : vector<1x1536xi32>
    %129 = arith.andi %126, %128 : vector<1x1536xi1>
    %130 = arith.extui %129 : vector<1x1536xi1> to vector<1x1536xi32>
    %131 = arith.sitofp %130 : vector<1x1536xi32> to vector<1x1536xf32>
    %132 = vector.extract_strided_slice %101 {offsets = [0, 0], sizes = [8, 1536], strides = [1, 1]} : vector<16x1536xf32> to vector<8x1536xf32>
    %133 = vector.broadcast %121 : vector<1x1536xf32> to vector<8x1536xf32>
    %134 = arith.mulf %132, %133 : vector<8x1536xf32>
    %c0_134 = arith.constant 0 : index
    %c0_135 = arith.constant 0 : index
    %135 = vector.load %arg9[%c0_134, %c0_135] : memref<16x1792xf32, #tpu.memory_space<vmem>>, vector<8x1536xf32>
    tpu.vector_store %arg9[%c0_134, %c0_135], %134 {strides = array<i32>} : memref<16x1792xf32, #tpu.memory_space<vmem>>, vector<8x1536xf32>,
    %136 = vector.extract_strided_slice %101 {offsets = [8, 0], sizes = [8, 1536], strides = [1, 1]} : vector<16x1536xf32> to vector<8x1536xf32>
    %137 = vector.broadcast %131 : vector<1x1536xf32> to vector<8x1536xf32>
    %138 = arith.mulf %136, %137 : vector<8x1536xf32>
    %c8_136 = arith.constant 8 : index
    %c0_137 = arith.constant 0 : index
    %139 = vector.load %arg9[%c8_136, %c0_137] : memref<16x1792xf32, #tpu.memory_space<vmem>>, vector<8x1536xf32>
    tpu.vector_store %arg9[%c8_136, %c0_137], %138 {strides = array<i32>} : memref<16x1792xf32, #tpu.memory_space<vmem>>, vector<8x1536xf32>,
    %c0_138 = arith.constant 0 : index
    %c0_139 = arith.constant 0 : index
    %140 = vector.load %arg9[%c0_138, %c0_139] : memref<16x1792xf32, #tpu.memory_space<vmem>>, vector<8x1536xf32>
    %c0_140 = arith.constant 0 : index
    %c0_141 = arith.constant 0 : index
    %141 = vector.load %arg10[%c0_140, %c0_141] : memref<112x1536xf32, #tpu.memory_space<vmem>>, vector<8x1536xf32>
    tpu.vector_store %arg10[%c0_140, %c0_141], %140 {strides = array<i32>} : memref<112x1536xf32, #tpu.memory_space<vmem>>, vector<8x1536xf32>,
    %c8_142 = arith.constant 8 : index
    %c0_143 = arith.constant 0 : index
    %142 = vector.load %arg9[%c8_142, %c0_143] : memref<16x1792xf32, #tpu.memory_space<vmem>>, vector<8x1536xf32>
    %c56 = arith.constant 56 : index
    %c0_144 = arith.constant 0 : index
    %143 = vector.load %arg10[%c56, %c0_144] : memref<112x1536xf32, #tpu.memory_space<vmem>>, vector<8x1536xf32>
    tpu.vector_store %arg10[%c56, %c0_144], %142 {strides = array<i32>} : memref<112x1536xf32, #tpu.memory_space<vmem>>, vector<8x1536xf32>,
    %c0_145 = arith.constant 0 : index
    %c1_146 = arith.constant 1 : index
    %144 = vector.load %arg9[%c0_145, %c1_146] : memref<16x1792xf32, #tpu.memory_space<vmem>>, vector<8x1536xf32>
    %c8_147 = arith.constant 8 : index
    %c0_148 = arith.constant 0 : index
    %145 = vector.load %arg10[%c8_147, %c0_148] : memref<112x1536xf32, #tpu.memory_space<vmem>>, vector<8x1536xf32>
    tpu.vector_store %arg10[%c8_147, %c0_148], %144 {strides = array<i32>} : memref<112x1536xf32, #tpu.memory_space<vmem>>, vector<8x1536xf32>,
    %c8_149 = arith.constant 8 : index
    %c32_150 = arith.constant 32 : index
    %146 = vector.load %arg9[%c8_149, %c32_150] : memref<16x1792xf32, #tpu.memory_space<vmem>>, vector<8x1536xf32>
    %c64_151 = arith.constant 64 : index
    %c0_152 = arith.constant 0 : index
    %147 = vector.load %arg10[%c64_151, %c0_152] : memref<112x1536xf32, #tpu.memory_space<vmem>>, vector<8x1536xf32>
    tpu.vector_store %arg10[%c64_151, %c0_152], %146 {strides = array<i32>} : memref<112x1536xf32, #tpu.memory_space<vmem>>, vector<8x1536xf32>,
    %c0_153 = arith.constant 0 : index
    %c2_154 = arith.constant 2 : index
    %148 = vector.load %arg9[%c0_153, %c2_154] : memref<16x1792xf32, #tpu.memory_space<vmem>>, vector<8x1536xf32>
    %c16_155 = arith.constant 16 : index
    %c0_156 = arith.constant 0 : index
    %149 = vector.load %arg10[%c16_155, %c0_156] : memref<112x1536xf32, #tpu.memory_space<vmem>>, vector<8x1536xf32>
    tpu.vector_store %arg10[%c16_155, %c0_156], %148 {strides = array<i32>} : memref<112x1536xf32, #tpu.memory_space<vmem>>, vector<8x1536xf32>,
    %c8_157 = arith.constant 8 : index
    %c64_158 = arith.constant 64 : index
    %150 = vector.load %arg9[%c8_157, %c64_158] : memref<16x1792xf32, #tpu.memory_space<vmem>>, vector<8x1536xf32>
    %c72 = arith.constant 72 : index
    %c0_159 = arith.constant 0 : index
    %151 = vector.load %arg10[%c72, %c0_159] : memref<112x1536xf32, #tpu.memory_space<vmem>>, vector<8x1536xf32>
    tpu.vector_store %arg10[%c72, %c0_159], %150 {strides = array<i32>} : memref<112x1536xf32, #tpu.memory_space<vmem>>, vector<8x1536xf32>,
    %c0_160 = arith.constant 0 : index
    %c3_161 = arith.constant 3 : index
    %152 = vector.load %arg9[%c0_160, %c3_161] : memref<16x1792xf32, #tpu.memory_space<vmem>>, vector<8x1536xf32>
    %c24_162 = arith.constant 24 : index
    %c0_163 = arith.constant 0 : index
    %153 = vector.load %arg10[%c24_162, %c0_163] : memref<112x1536xf32, #tpu.memory_space<vmem>>, vector<8x1536xf32>
    tpu.vector_store %arg10[%c24_162, %c0_163], %152 {strides = array<i32>} : memref<112x1536xf32, #tpu.memory_space<vmem>>, vector<8x1536xf32>,
    %c8_164 = arith.constant 8 : index
    %c96_165 = arith.constant 96 : index
    %154 = vector.load %arg9[%c8_164, %c96_165] : memref<16x1792xf32, #tpu.memory_space<vmem>>, vector<8x1536xf32>
    %c80_166 = arith.constant 80 : index
    %c0_167 = arith.constant 0 : index
    %155 = vector.load %arg10[%c80_166, %c0_167] : memref<112x1536xf32, #tpu.memory_space<vmem>>, vector<8x1536xf32>
    tpu.vector_store %arg10[%c80_166, %c0_167], %154 {strides = array<i32>} : memref<112x1536xf32, #tpu.memory_space<vmem>>, vector<8x1536xf32>,
    %c0_168 = arith.constant 0 : index
    %c4_169 = arith.constant 4 : index
    %156 = vector.load %arg9[%c0_168, %c4_169] : memref<16x1792xf32, #tpu.memory_space<vmem>>, vector<8x1536xf32>
    %c32_170 = arith.constant 32 : index
    %c0_171 = arith.constant 0 : index
    %157 = vector.load %arg10[%c32_170, %c0_171] : memref<112x1536xf32, #tpu.memory_space<vmem>>, vector<8x1536xf32>
    tpu.vector_store %arg10[%c32_170, %c0_171], %156 {strides = array<i32>} : memref<112x1536xf32, #tpu.memory_space<vmem>>, vector<8x1536xf32>,
    %c8_172 = arith.constant 8 : index
    %c128_173 = arith.constant 128 : index
    %158 = vector.load %arg9[%c8_172, %c128_173] : memref<16x1792xf32, #tpu.memory_space<vmem>>, vector<8x1536xf32>
    %c88 = arith.constant 88 : index
    %c0_174 = arith.constant 0 : index
    %159 = vector.load %arg10[%c88, %c0_174] : memref<112x1536xf32, #tpu.memory_space<vmem>>, vector<8x1536xf32>
    tpu.vector_store %arg10[%c88, %c0_174], %158 {strides = array<i32>} : memref<112x1536xf32, #tpu.memory_space<vmem>>, vector<8x1536xf32>,
    %c0_175 = arith.constant 0 : index
    %c5_176 = arith.constant 5 : index
    %160 = vector.load %arg9[%c0_175, %c5_176] : memref<16x1792xf32, #tpu.memory_space<vmem>>, vector<8x1536xf32>
    %c40_177 = arith.constant 40 : index
    %c0_178 = arith.constant 0 : index
    %161 = vector.load %arg10[%c40_177, %c0_178] : memref<112x1536xf32, #tpu.memory_space<vmem>>, vector<8x1536xf32>
    tpu.vector_store %arg10[%c40_177, %c0_178], %160 {strides = array<i32>} : memref<112x1536xf32, #tpu.memory_space<vmem>>, vector<8x1536xf32>,
    %c8_179 = arith.constant 8 : index
    %c160_180 = arith.constant 160 : index
    %162 = vector.load %arg9[%c8_179, %c160_180] : memref<16x1792xf32, #tpu.memory_space<vmem>>, vector<8x1536xf32>
    %c96_181 = arith.constant 96 : index
    %c0_182 = arith.constant 0 : index
    %163 = vector.load %arg10[%c96_181, %c0_182] : memref<112x1536xf32, #tpu.memory_space<vmem>>, vector<8x1536xf32>
    tpu.vector_store %arg10[%c96_181, %c0_182], %162 {strides = array<i32>} : memref<112x1536xf32, #tpu.memory_space<vmem>>, vector<8x1536xf32>,
    %c0_183 = arith.constant 0 : index
    %c6_184 = arith.constant 6 : index
    %164 = vector.load %arg9[%c0_183, %c6_184] : memref<16x1792xf32, #tpu.memory_space<vmem>>, vector<8x1536xf32>
    %c48_185 = arith.constant 48 : index
    %c0_186 = arith.constant 0 : index
    %165 = vector.load %arg10[%c48_185, %c0_186] : memref<112x1536xf32, #tpu.memory_space<vmem>>, vector<8x1536xf32>
    tpu.vector_store %arg10[%c48_185, %c0_186], %164 {strides = array<i32>} : memref<112x1536xf32, #tpu.memory_space<vmem>>, vector<8x1536xf32>,
    %c8_187 = arith.constant 8 : index
    %c192_188 = arith.constant 192 : index
    %166 = vector.load %arg9[%c8_187, %c192_188] : memref<16x1792xf32, #tpu.memory_space<vmem>>, vector<8x1536xf32>
    %c104 = arith.constant 104 : index
    %c0_189 = arith.constant 0 : index
    %167 = vector.load %arg10[%c104, %c0_189] : memref<112x1536xf32, #tpu.memory_space<vmem>>, vector<8x1536xf32>
    tpu.vector_store %arg10[%c104, %c0_189], %166 {strides = array<i32>} : memref<112x1536xf32, #tpu.memory_space<vmem>>, vector<8x1536xf32>,
    %c0_190 = arith.constant 0 : index
    %c0_191 = arith.constant 0 : index
    %168 = vector.load %arg4[%c0_190, %c0_191] : memref<8x112xf32, #tpu.memory_space<vmem>>, vector<8x112xf32>
    %c0_192 = arith.constant 0 : index
    %c0_193 = arith.constant 0 : index
    %169 = vector.load %arg10[%c0_192, %c0_193] : memref<112x1536xf32, #tpu.memory_space<vmem>>, vector<112x1536xf32>
    %cst_194 = arith.constant dense<0.000000e+00> : vector<8x1536xf32>
    %170 = tpu.matmul %168, %169, %cst_194 {dimension_numbers = #tpu.dot_dimension_numbers<[1], [0], [0], [1], [0, 0, 1, 1], [], []>} : vector<8x112xf32>, vector<112x1536xf32>, vector<8x1536xf32> -> vector<8x1536xf32>
    %c0_195 = arith.constant 0 : index
    %c0_196 = arith.constant 0 : index
    %171 = vector.load %arg5[%c0_195, %c0_196] : memref<8x1xf32, #tpu.memory_space<vmem>>, vector<8x1xf32>
    %172 = vector.broadcast %171 : vector<8x1xf32> to vector<8x1536xf32>
    %173 = arith.addf %170, %172 : vector<8x1536xf32>
    %174 = vector.extract_strided_slice %173 {offsets = [0, 0], sizes = [8, 16], strides = [1, 1]} : vector<8x1536xf32> to vector<8x16xf32>
    %c0_197 = arith.constant 0 : index
    %c0_198 = arith.constant 0 : index
    %175 = vector.load %arg6[%c0_197, %c0_198] : memref<16x256xf32, #tpu.memory_space<vmem>>, vector<8x16xf32>
    tpu.vector_store %arg6[%c0_197, %c0_198], %174 {strides = array<i32>} : memref<16x256xf32, #tpu.memory_space<vmem>>, vector<8x16xf32>,
    %176 = vector.extract_strided_slice %173 {offsets = [0, 32], sizes = [8, 16], strides = [1, 1]} : vector<8x1536xf32> to vector<8x16xf32>
    %c0_199 = arith.constant 0 : index
    %c16_200 = arith.constant 16 : index
    %177 = vector.load %arg6[%c0_199, %c16_200] : memref<16x256xf32, #tpu.memory_space<vmem>>, vector<8x16xf32>
    tpu.vector_store %arg6[%c0_199, %c16_200], %176 {strides = array<i32>} : memref<16x256xf32, #tpu.memory_space<vmem>>, vector<8x16xf32>,
    %178 = vector.extract_strided_slice %173 {offsets = [0, 64], sizes = [8, 16], strides = [1, 1]} : vector<8x1536xf32> to vector<8x16xf32>
    %c0_201 = arith.constant 0 : index
    %c32_202 = arith.constant 32 : index
    %179 = vector.load %arg6[%c0_201, %c32_202] : memref<16x256xf32, #tpu.memory_space<vmem>>, vector<8x16xf32>
    tpu.vector_store %arg6[%c0_201, %c32_202], %178 {strides = array<i32>} : memref<16x256xf32, #tpu.memory_space<vmem>>, vector<8x16xf32>,
    %180 = vector.extract_strided_slice %173 {offsets = [0, 96], sizes = [8, 16], strides = [1, 1]} : vector<8x1536xf32> to vector<8x16xf32>
    %c0_203 = arith.constant 0 : index
    %c48_204 = arith.constant 48 : index
    %181 = vector.load %arg6[%c0_203, %c48_204] : memref<16x256xf32, #tpu.memory_space<vmem>>, vector<8x16xf32>
    tpu.vector_store %arg6[%c0_203, %c48_204], %180 {strides = array<i32>} : memref<16x256xf32, #tpu.memory_space<vmem>>, vector<8x16xf32>,
    %182 = vector.extract_strided_slice %173 {offsets = [0, 128], sizes = [8, 16], strides = [1, 1]} : vector<8x1536xf32> to vector<8x16xf32>
    %c0_205 = arith.constant 0 : index
    %c64_206 = arith.constant 64 : index
    %183 = vector.load %arg6[%c0_205, %c64_206] : memref<16x256xf32, #tpu.memory_space<vmem>>, vector<8x16xf32>
    tpu.vector_store %arg6[%c0_205, %c64_206], %182 {strides = array<i32>} : memref<16x256xf32, #tpu.memory_space<vmem>>, vector<8x16xf32>,
    %184 = vector.extract_strided_slice %173 {offsets = [0, 160], sizes = [8, 16], strides = [1, 1]} : vector<8x1536xf32> to vector<8x16xf32>
    %c0_207 = arith.constant 0 : index
    %c80_208 = arith.constant 80 : index
    %185 = vector.load %arg6[%c0_207, %c80_208] : memref<16x256xf32, #tpu.memory_space<vmem>>, vector<8x16xf32>
    tpu.vector_store %arg6[%c0_207, %c80_208], %184 {strides = array<i32>} : memref<16x256xf32, #tpu.memory_space<vmem>>, vector<8x16xf32>,
    %186 = vector.extract_strided_slice %173 {offsets = [0, 192], sizes = [8, 16], strides = [1, 1]} : vector<8x1536xf32> to vector<8x16xf32>
    %c0_209 = arith.constant 0 : index
    %c96_210 = arith.constant 96 : index
    %187 = vector.load %arg6[%c0_209, %c96_210] : memref<16x256xf32, #tpu.memory_space<vmem>>, vector<8x16xf32>
    tpu.vector_store %arg6[%c0_209, %c96_210], %186 {strides = array<i32>} : memref<16x256xf32, #tpu.memory_space<vmem>>, vector<8x16xf32>,
    %188 = vector.extract_strided_slice %173 {offsets = [0, 224], sizes = [8, 16], strides = [1, 1]} : vector<8x1536xf32> to vector<8x16xf32>
    %c0_211 = arith.constant 0 : index
    %c112_212 = arith.constant 112 : index
    %189 = vector.load %arg6[%c0_211, %c112_212] : memref<16x256xf32, #tpu.memory_space<vmem>>, vector<8x16xf32>
    tpu.vector_store %arg6[%c0_211, %c112_212], %188 {strides = array<i32>} : memref<16x256xf32, #tpu.memory_space<vmem>>, vector<8x16xf32>,
    %190 = vector.extract_strided_slice %173 {offsets = [0, 256], sizes = [8, 16], strides = [1, 1]} : vector<8x1536xf32> to vector<8x16xf32>
    %c0_213 = arith.constant 0 : index
    %c128_214 = arith.constant 128 : index
    %191 = vector.load %arg6[%c0_213, %c128_214] : memref<16x256xf32, #tpu.memory_space<vmem>>, vector<8x16xf32>
    tpu.vector_store %arg6[%c0_213, %c128_214], %190 {strides = array<i32>} : memref<16x256xf32, #tpu.memory_space<vmem>>, vector<8x16xf32>,
    %192 = vector.extract_strided_slice %173 {offsets = [0, 288], sizes = [8, 16], strides = [1, 1]} : vector<8x1536xf32> to vector<8x16xf32>
    %c0_215 = arith.constant 0 : index
    %c144_216 = arith.constant 144 : index
    %193 = vector.load %arg6[%c0_215, %c144_216] : memref<16x256xf32, #tpu.memory_space<vmem>>, vector<8x16xf32>
    tpu.vector_store %arg6[%c0_215, %c144_216], %192 {strides = array<i32>} : memref<16x256xf32, #tpu.memory_space<vmem>>, vector<8x16xf32>,
    %194 = vector.extract_strided_slice %173 {offsets = [0, 320], sizes = [8, 16], strides = [1, 1]} : vector<8x1536xf32> to vector<8x16xf32>
    %c0_217 = arith.constant 0 : index
    %c160_218 = arith.constant 160 : index
    %195 = vector.load %arg6[%c0_217, %c160_218] : memref<16x256xf32, #tpu.memory_space<vmem>>, vector<8x16xf32>
    tpu.vector_store %arg6[%c0_217, %c160_218], %194 {strides = array<i32>} : memref<16x256xf32, #tpu.memory_space<vmem>>, vector<8x16xf32>,
    %196 = vector.extract_strided_slice %173 {offsets = [0, 352], sizes = [8, 16], strides = [1, 1]} : vector<8x1536xf32> to vector<8x16xf32>
    %c0_219 = arith.constant 0 : index
    %c176_220 = arith.constant 176 : index
    %197 = vector.load %arg6[%c0_219, %c176_220] : memref<16x256xf32, #tpu.memory_space<vmem>>, vector<8x16xf32>
    tpu.vector_store %arg6[%c0_219, %c176_220], %196 {strides = array<i32>} : memref<16x256xf32, #tpu.memory_space<vmem>>, vector<8x16xf32>,
    %198 = vector.extract_strided_slice %173 {offsets = [0, 384], sizes = [8, 16], strides = [1, 1]} : vector<8x1536xf32> to vector<8x16xf32>
    %c0_221 = arith.constant 0 : index
    %c192_222 = arith.constant 192 : index
    %199 = vector.load %arg6[%c0_221, %c192_222] : memref<16x256xf32, #tpu.memory_space<vmem>>, vector<8x16xf32>
    tpu.vector_store %arg6[%c0_221, %c192_222], %198 {strides = array<i32>} : memref<16x256xf32, #tpu.memory_space<vmem>>, vector<8x16xf32>,
    %200 = vector.extract_strided_slice %173 {offsets = [0, 416], sizes = [8, 16], strides = [1, 1]} : vector<8x1536xf32> to vector<8x16xf32>
    %c0_223 = arith.constant 0 : index
    %c208_224 = arith.constant 208 : index
    %201 = vector.load %arg6[%c0_223, %c208_224] : memref<16x256xf32, #tpu.memory_space<vmem>>, vector<8x16xf32>
    tpu.vector_store %arg6[%c0_223, %c208_224], %200 {strides = array<i32>} : memref<16x256xf32, #tpu.memory_space<vmem>>, vector<8x16xf32>,
    %202 = vector.extract_strided_slice %173 {offsets = [0, 448], sizes = [8, 16], strides = [1, 1]} : vector<8x1536xf32> to vector<8x16xf32>
    %c0_225 = arith.constant 0 : index
    %c224_226 = arith.constant 224 : index
    %203 = vector.load %arg6[%c0_225, %c224_226] : memref<16x256xf32, #tpu.memory_space<vmem>>, vector<8x16xf32>
    tpu.vector_store %arg6[%c0_225, %c224_226], %202 {strides = array<i32>} : memref<16x256xf32, #tpu.memory_space<vmem>>, vector<8x16xf32>,
    %204 = vector.extract_strided_slice %173 {offsets = [0, 480], sizes = [8, 16], strides = [1, 1]} : vector<8x1536xf32> to vector<8x16xf32>
    %c0_227 = arith.constant 0 : index
    %c240_228 = arith.constant 240 : index
    %205 = vector.load %arg6[%c0_227, %c240_228] : memref<16x256xf32, #tpu.memory_space<vmem>>, vector<8x16xf32>
    tpu.vector_store %arg6[%c0_227, %c240_228], %204 {strides = array<i32>} : memref<16x256xf32, #tpu.memory_space<vmem>>, vector<8x16xf32>,
    %206 = vector.extract_strided_slice %173 {offsets = [0, 768], sizes = [8, 16], strides = [1, 1]} : vector<8x1536xf32> to vector<8x16xf32>
    %c8_229 = arith.constant 8 : index
    %c0_230 = arith.constant 0 : index
    %207 = vector.load %arg6[%c8_229, %c0_230] : memref<16x256xf32, #tpu.memory_space<vmem>>, vector<8x16xf32>
    tpu.vector_store %arg6[%c8_229, %c0_230], %206 {strides = array<i32>} : memref<16x256xf32, #tpu.memory_space<vmem>>, vector<8x16xf32>,
    %208 = vector.extract_strided_slice %173 {offsets = [0, 800], sizes = [8, 16], strides = [1, 1]} : vector<8x1536xf32> to vector<8x16xf32>
    %c8_231 = arith.constant 8 : index
    %c16_232 = arith.constant 16 : index
    %209 = vector.load %arg6[%c8_231, %c16_232] : memref<16x256xf32, #tpu.memory_space<vmem>>, vector<8x16xf32>
    tpu.vector_store %arg6[%c8_231, %c16_232], %208 {strides = array<i32>} : memref<16x256xf32, #tpu.memory_space<vmem>>, vector<8x16xf32>,
    %210 = vector.extract_strided_slice %173 {offsets = [0, 832], sizes = [8, 16], strides = [1, 1]} : vector<8x1536xf32> to vector<8x16xf32>
    %c8_233 = arith.constant 8 : index
    %c32_234 = arith.constant 32 : index
    %211 = vector.load %arg6[%c8_233, %c32_234] : memref<16x256xf32, #tpu.memory_space<vmem>>, vector<8x16xf32>
    tpu.vector_store %arg6[%c8_233, %c32_234], %210 {strides = array<i32>} : memref<16x256xf32, #tpu.memory_space<vmem>>, vector<8x16xf32>,
    %212 = vector.extract_strided_slice %173 {offsets = [0, 864], sizes = [8, 16], strides = [1, 1]} : vector<8x1536xf32> to vector<8x16xf32>
    %c8_235 = arith.constant 8 : index
    %c48_236 = arith.constant 48 : index
    %213 = vector.load %arg6[%c8_235, %c48_236] : memref<16x256xf32, #tpu.memory_space<vmem>>, vector<8x16xf32>
    tpu.vector_store %arg6[%c8_235, %c48_236], %212 {strides = array<i32>} : memref<16x256xf32, #tpu.memory_space<vmem>>, vector<8x16xf32>,
    %214 = vector.extract_strided_slice %173 {offsets = [0, 896], sizes = [8, 16], strides = [1, 1]} : vector<8x1536xf32> to vector<8x16xf32>
    %c8_237 = arith.constant 8 : index
    %c64_238 = arith.constant 64 : index
    %215 = vector.load %arg6[%c8_237, %c64_238] : memref<16x256xf32, #tpu.memory_space<vmem>>, vector<8x16xf32>
    tpu.vector_store %arg6[%c8_237, %c64_238], %214 {strides = array<i32>} : memref<16x256xf32, #tpu.memory_space<vmem>>, vector<8x16xf32>,
    %216 = vector.extract_strided_slice %173 {offsets = [0, 928], sizes = [8, 16], strides = [1, 1]} : vector<8x1536xf32> to vector<8x16xf32>
    %c8_239 = arith.constant 8 : index
    %c80_240 = arith.constant 80 : index
    %217 = vector.load %arg6[%c8_239, %c80_240] : memref<16x256xf32, #tpu.memory_space<vmem>>, vector<8x16xf32>
    tpu.vector_store %arg6[%c8_239, %c80_240], %216 {strides = array<i32>} : memref<16x256xf32, #tpu.memory_space<vmem>>, vector<8x16xf32>,
    %218 = vector.extract_strided_slice %173 {offsets = [0, 960], sizes = [8, 16], strides = [1, 1]} : vector<8x1536xf32> to vector<8x16xf32>
    %c8_241 = arith.constant 8 : index
    %c96_242 = arith.constant 96 : index
    %219 = vector.load %arg6[%c8_241, %c96_242] : memref<16x256xf32, #tpu.memory_space<vmem>>, vector<8x16xf32>
    tpu.vector_store %arg6[%c8_241, %c96_242], %218 {strides = array<i32>} : memref<16x256xf32, #tpu.memory_space<vmem>>, vector<8x16xf32>,
    %220 = vector.extract_strided_slice %173 {offsets = [0, 992], sizes = [8, 16], strides = [1, 1]} : vector<8x1536xf32> to vector<8x16xf32>
    %c8_243 = arith.constant 8 : index
    %c112_244 = arith.constant 112 : index
    %221 = vector.load %arg6[%c8_243, %c112_244] : memref<16x256xf32, #tpu.memory_space<vmem>>, vector<8x16xf32>
    tpu.vector_store %arg6[%c8_243, %c112_244], %220 {strides = array<i32>} : memref<16x256xf32, #tpu.memory_space<vmem>>, vector<8x16xf32>,
    %222 = vector.extract_strided_slice %173 {offsets = [0, 1024], sizes = [8, 16], strides = [1, 1]} : vector<8x1536xf32> to vector<8x16xf32>
    %c8_245 = arith.constant 8 : index
    %c128_246 = arith.constant 128 : index
    %223 = vector.load %arg6[%c8_245, %c128_246] : memref<16x256xf32, #tpu.memory_space<vmem>>, vector<8x16xf32>
    tpu.vector_store %arg6[%c8_245, %c128_246], %222 {strides = array<i32>} : memref<16x256xf32, #tpu.memory_space<vmem>>, vector<8x16xf32>,
    %224 = vector.extract_strided_slice %173 {offsets = [0, 1056], sizes = [8, 16], strides = [1, 1]} : vector<8x1536xf32> to vector<8x16xf32>
    %c8_247 = arith.constant 8 : index
    %c144_248 = arith.constant 144 : index
    %225 = vector.load %arg6[%c8_247, %c144_248] : memref<16x256xf32, #tpu.memory_space<vmem>>, vector<8x16xf32>
    tpu.vector_store %arg6[%c8_247, %c144_248], %224 {strides = array<i32>} : memref<16x256xf32, #tpu.memory_space<vmem>>, vector<8x16xf32>,
    %226 = vector.extract_strided_slice %173 {offsets = [0, 1088], sizes = [8, 16], strides = [1, 1]} : vector<8x1536xf32> to vector<8x16xf32>
    %c8_249 = arith.constant 8 : index
    %c160_250 = arith.constant 160 : index
    %227 = vector.load %arg6[%c8_249, %c160_250] : memref<16x256xf32, #tpu.memory_space<vmem>>, vector<8x16xf32>
    tpu.vector_store %arg6[%c8_249, %c160_250], %226 {strides = array<i32>} : memref<16x256xf32, #tpu.memory_space<vmem>>, vector<8x16xf32>,
    %228 = vector.extract_strided_slice %173 {offsets = [0, 1120], sizes = [8, 16], strides = [1, 1]} : vector<8x1536xf32> to vector<8x16xf32>
    %c8_251 = arith.constant 8 : index
    %c176_252 = arith.constant 176 : index
    %229 = vector.load %arg6[%c8_251, %c176_252] : memref<16x256xf32, #tpu.memory_space<vmem>>, vector<8x16xf32>
    tpu.vector_store %arg6[%c8_251, %c176_252], %228 {strides = array<i32>} : memref<16x256xf32, #tpu.memory_space<vmem>>, vector<8x16xf32>,
    %230 = vector.extract_strided_slice %173 {offsets = [0, 1152], sizes = [8, 16], strides = [1, 1]} : vector<8x1536xf32> to vector<8x16xf32>
    %c8_253 = arith.constant 8 : index
    %c192_254 = arith.constant 192 : index
    %231 = vector.load %arg6[%c8_253, %c192_254] : memref<16x256xf32, #tpu.memory_space<vmem>>, vector<8x16xf32>
    tpu.vector_store %arg6[%c8_253, %c192_254], %230 {strides = array<i32>} : memref<16x256xf32, #tpu.memory_space<vmem>>, vector<8x16xf32>,
    %232 = vector.extract_strided_slice %173 {offsets = [0, 1184], sizes = [8, 16], strides = [1, 1]} : vector<8x1536xf32> to vector<8x16xf32>
    %c8_255 = arith.constant 8 : index
    %c208_256 = arith.constant 208 : index
    %233 = vector.load %arg6[%c8_255, %c208_256] : memref<16x256xf32, #tpu.memory_space<vmem>>, vector<8x16xf32>
    tpu.vector_store %arg6[%c8_255, %c208_256], %232 {strides = array<i32>} : memref<16x256xf32, #tpu.memory_space<vmem>>, vector<8x16xf32>,
    %234 = vector.extract_strided_slice %173 {offsets = [0, 1216], sizes = [8, 16], strides = [1, 1]} : vector<8x1536xf32> to vector<8x16xf32>
    %c8_257 = arith.constant 8 : index
    %c224_258 = arith.constant 224 : index
    %235 = vector.load %arg6[%c8_257, %c224_258] : memref<16x256xf32, #tpu.memory_space<vmem>>, vector<8x16xf32>
    tpu.vector_store %arg6[%c8_257, %c224_258], %234 {strides = array<i32>} : memref<16x256xf32, #tpu.memory_space<vmem>>, vector<8x16xf32>,
    %236 = vector.extract_strided_slice %173 {offsets = [0, 1248], sizes = [8, 16], strides = [1, 1]} : vector<8x1536xf32> to vector<8x16xf32>
    %c8_259 = arith.constant 8 : index
    %c240_260 = arith.constant 240 : index
    %237 = vector.load %arg6[%c8_259, %c240_260] : memref<16x256xf32, #tpu.memory_space<vmem>>, vector<8x16xf32>
    tpu.vector_store %arg6[%c8_259, %c240_260], %236 {strides = array<i32>} : memref<16x256xf32, #tpu.memory_space<vmem>>, vector<8x16xf32>,
    return
  }
  func.func @transform_0(%arg0: i32) -> (i32, i32) {
    %c0_i32 = arith.constant 0 : i32
    %c0_i32_0 = arith.constant 0 : i32
    %c0_i32_1 = arith.constant 0 : i32
    return %c0_i32, %c0_i32_0 : i32, i32
  }
  func.func @transform_1(%arg0: i32) -> (i32, i32) {
    %c0_i32 = arith.constant 0 : i32
    %c0_i32_0 = arith.constant 0 : i32
    %c0_i32_1 = arith.constant 0 : i32
    return %c0_i32, %c0_i32_0 : i32, i32
  }
  func.func @transform_2(%arg0: i32) -> (i32, i32) {
    %c0_i32 = arith.constant 0 : i32
    %c0_i32_0 = arith.constant 0 : i32
    %c0_i32_1 = arith.constant 0 : i32
    return %c0_i32, %c0_i32_0 : i32, i32
  }
  func.func @transform_3(%arg0: i32) -> (i32, i32) {
    %c0_i32 = arith.constant 0 : i32
    %c0_i32_0 = arith.constant 0 : i32
    %c0_i32_1 = arith.constant 0 : i32
    return %c0_i32, %c0_i32_0 : i32, i32
  }
  func.func @transform_4(%arg0: i32) -> (i32, i32) {
    %c0_i32 = arith.constant 0 : i32
    %c0_i32_0 = arith.constant 0 : i32
    %c0_i32_1 = arith.constant 0 : i32
    return %c0_i32, %c0_i32_0 : i32, i32
  }
  func.func @transform_5(%arg0: i32) -> (i32, i32) {
    %c0_i32 = arith.constant 0 : i32
    %c0_i32_0 = arith.constant 0 : i32
    %c0_i32_1 = arith.constant 0 : i32
    return %c0_i32, %c0_i32_0 : i32, i32
  }
}

</mosaic_0001>

<llo_original>
// kernel: tpu_custom_call.1
$region0: #{tpu_custom_call.1}
  #allocation0 [shape = 'u32[]', space=smem, size = 0x4, offset = 0x4, fixed_abs, tag = 'smem constant byte address 0x4 - core index']
  #allocation1 [shape = 'u32[144,128]{1,0:T(1,128)}', space=vmem, size = 0x12000, scoped, tag = 'internal scratch']
  #allocation2 [shape = 'f32[4,1792]{1,0:T(4,128)}', space=vmem, size = 0x7000, scoped, tag = 'scratch operand']
  #allocation3 [shape = 'f32[56,1536]{1,0:T(8,128)}', space=vmem, size = 0x54000, scoped, tag = 'scratch operand']
  #allocation4 [shape = 'f32[16,1792]{1,0:T(8,128)}', space=vmem, size = 0x1c000, scoped, tag = 'scratch operand']
  #allocation5 [shape = 'f32[112,1536]{1,0:T(8,128)}', space=vmem, size = 0xa8000, scoped, tag = 'scratch operand']
  %s0 = inlined_call_operand.vmem [shape: f32[8,256], index: 0, kind: input, shape index: {}]
  %s1 = inlined_call_operand.hbm [shape: f32[16,56], index: 1, kind: input, shape index: {}]
  %s2 = inlined_call_operand.vmem [shape: f32[16,1], index: 2, kind: input, shape index: {}]
  %s3 = inlined_call_operand.vmem [shape: f32[8,112], index: 3, kind: input, shape index: {}]
  %s4 = inlined_call_operand.vmem [shape: f32[8,1], index: 4, kind: input, shape index: {}]
  %s5 = inlined_call_operand.hbm [shape: f32[16,256], index: 5, kind: output, shape index: {}]
  %s6 = sld [smem:[#allocation0]]
  $region34: #{tpu_custom_call.1} parent=0
    _
  %s8 = ssub.s32 1, %s6
  %s9 = scalar_select 0, %s8, %s6
  $region1: #{tpu_custom_call.1} parent=0
    #allocation6 [shape = 'u8[8192]{0}', space=vmem, size = 0x2000, scoped, tag = 'input window, operand 1, single buffered']
    #allocation7 [shape = 's32[1]{0}', space=sflag, size = 0x4, scoped, tag = 'scoped memory for tpu_custom_call.1']
    #allocation8 [shape = 's32[1]{0}', space=sflag, size = 0x4, scoped, tag = 'scoped memory for tpu_custom_call.1']
    #allocation9 [shape = 'u8[16384]{0}', space=vmem, size = 0x4000, scoped, tag = 'output window, operand 0, single buffered']
    %10 = vsyncpa [#allocation7], 0
    %11 = vsyncpa [#allocation8], 0
    // Predicated region
    $region2: #{tpu_custom_call.1} parent=1 // pred_check
      _
    $region3: #{tpu_custom_call.1} parent=1 // pred_check_branch
      %13 = sbr.rel (0) target = $region5
    $region4: #{tpu_custom_call.1} parent=1 // pred_region
      _
    $region5: #{tpu_custom_call.1} parent=1 // pred_fallthru
      _
    // Predicated region
    $region6: #{tpu_custom_call.1} parent=1 // pred_check
      _
    $region7: #{tpu_custom_call.1} parent=1 // pred_check_branch
      %15 = sbr.rel (0) target = $region9
    $region8: #{tpu_custom_call.1} parent=1 // pred_region
      %s17 = ssub.s32 256, 256
      %18 = vsyncadd [#allocation7], %s17
      %s19 = sshll.u32 [#allocation6], 4
      %s20 = int_to_ptr.vmem [resolvable:$true] %s19
      %25 = dma.hbm_to_vmem [thread:$0]  %s1, 256, %s20, [#allocation7], 128, 128, 8
    $region9: #{tpu_custom_call.1} parent=1 // pred_fallthru
      _
    // Predicated region
    $region10: #{tpu_custom_call.1} parent=1 // pred_check
      _
    $region11: #{tpu_custom_call.1} parent=1 // pred_check_branch
      %27 = sbr.rel (0) target = $region13
    $region12: #{tpu_custom_call.1} parent=1 // pred_region
      _
    $region13: #{tpu_custom_call.1} parent=1 // pred_fallthru
      _
    // Predicated region
    $region14: #{tpu_custom_call.1} parent=1 // pred_check
      _
    $region15: #{tpu_custom_call.1} parent=1 // pred_check_branch
      %29 = sbr.rel (0) target = $region17
    $region16: #{tpu_custom_call.1} parent=1 // pred_region
      _
    $region17: #{tpu_custom_call.1} parent=1 // pred_fallthru
      _
    // Predicated region
    $region18: #{tpu_custom_call.1} parent=1 // pred_check
      _
    $region19: #{tpu_custom_call.1} parent=1 // pred_check_branch
      %31 = sbr.rel (0) target = $region21
    $region20: #{tpu_custom_call.1} parent=1 // pred_region
      _
    $region21: #{tpu_custom_call.1} parent=1 // pred_fallthru
      _
    // Predicated region
    $region22: #{tpu_custom_call.1} parent=1 // pred_check
      _
    $region23: #{tpu_custom_call.1} parent=1 // pred_check_branch
      %33 = sbr.rel (0) target = $region25
    $region24: #{tpu_custom_call.1} parent=1 // pred_region
      %34 = dma.done [#allocation7], 256
    $region25: #{tpu_custom_call.1} parent=1 // pred_fallthru
      _
    %35 = vst [vmem:[#allocation2] sm:$0xff] 0.0
    %36 = vst [vmem:[#allocation2 + $0x8] sm:$0xff] 0.0
    %37 = vst [vmem:[#allocation2 + $0x10] sm:$0xff] 0.0
    %38 = vst [vmem:[#allocation2 + $0x18] sm:$0xff] 0.0
    %39 = vst [vmem:[#allocation2 + $0x20] sm:$0xff] 0.0
    %40 = vst [vmem:[#allocation2 + $0x28] sm:$0xff] 0.0
    %41 = vst [vmem:[#allocation2 + $0x30] sm:$0xff] 0.0
    %42 = vst [vmem:[#allocation4 + $0x60] sm:$0xff] 0.0
    %43 = vst [vmem:[#allocation4 + $0x68] sm:$0xff] 0.0
    %44 = vst [vmem:[#allocation4 + $0xd0] sm:$0xff] 0.0
    %45 = vst [vmem:[#allocation4 + $0xd8] sm:$0xff] 0.0
    %v46 = vld [vmem:[%s0] sm:$0xf]
    %48 = vrot.lane.b32.xlu0 %v46, 99
    %v49 = vpop.permute.xlu0 %48
    %vm51 = vcmask 937752
    %52 = vst.msk [vmem:[#allocation2] sm:$0xf] %vm51, %v49
    %v53 = vld [vmem:[%s0] sm:$0xf]
    %55 = vrot.lane.b32.xlu0 %v53, 115
    %v56 = vpop.permute.xlu0 %55
    %vm58 = vcmask 150552
    %59 = vst.msk [vmem:[#allocation2 + $0x4] sm:$0xf] %vm58, %v56
    %v60 = vld [vmem:[%s0] sm:$0xf]
    %62 = vrot.lane.b32.xlu0 %v60, 3
    %v63 = vpop.permute.xlu0 %62
    %vm65 = vcmask 412952
    %66 = vst.msk [vmem:[#allocation2 + $0x4] sm:$0xf] %vm65, %v63
    %v67 = vld [vmem:[%s0] sm:$0xf]
    %69 = vrot.lane.b32.xlu0 %v67, 19
    %v70 = vpop.permute.xlu0 %69
    %vm72 = vcmask 675352
    %73 = vst.msk [vmem:[#allocation2 + $0x4] sm:$0xf] %vm72, %v70
    %v74 = vld [vmem:[%s0] sm:$0xf]
    %76 = vrot.lane.b32.xlu0 %v74, 35
    %v77 = vpop.permute.xlu0 %76
    %79 = vst.msk [vmem:[#allocation2 + $0x4] sm:$0xf] %vm51, %v77
    %v80 = vld [vmem:[%s0] sm:$0xf]
    %82 = vrot.lane.b32.xlu0 %v80, 51
    %v83 = vpop.permute.xlu0 %82
    %85 = vst.msk [vmem:[#allocation2 + $0x8] sm:$0xf] %vm58, %v83
    %v86 = vld [vmem:[%s0] sm:$0xf]
    %88 = vrot.lane.b32.xlu0 %v86, 67
    %v89 = vpop.permute.xlu0 %88
    %91 = vst.msk [vmem:[#allocation2 + $0x8] sm:$0xf] %vm65, %v89
    %v92 = vld [vmem:[%s0] sm:$0xf]
    %94 = vrot.lane.b32.xlu0 %v92, 83
    %v95 = vpop.permute.xlu0 %94
    %97 = vst.msk [vmem:[#allocation2 + $0x8] sm:$0xf] %vm72, %v95
    %v98 = vld [vmem:[%s0 + $0x8] sm:$0xf]
    %100 = vrot.lane.b32.xlu0 %v98, 99
    %v101 = vpop.permute.xlu0 %100
    %103 = vst.msk [vmem:[#allocation2 + $0x8] sm:$0xf] %vm51, %v101
    %v104 = vld [vmem:[%s0 + $0x8] sm:$0xf]
    %106 = vrot.lane.b32.xlu0 %v104, 115
    %v107 = vpop.permute.xlu0 %106
    %109 = vst.msk [vmem:[#allocation2 + $0xc] sm:$0xf] %vm58, %v107
    %v110 = vld [vmem:[%s0 + $0x8] sm:$0xf]
    %112 = vrot.lane.b32.xlu0 %v110, 3
    %v113 = vpop.permute.xlu0 %112
    %115 = vst.msk [vmem:[#allocation2 + $0xc] sm:$0xf] %vm65, %v113
    %v116 = vld [vmem:[%s0 + $0x8] sm:$0xf]
    %118 = vrot.lane.b32.xlu0 %v116, 19
    %v119 = vpop.permute.xlu0 %118
    %121 = vst.msk [vmem:[#allocation2 + $0xc] sm:$0xf] %vm72, %v119
    %v122 = vld [vmem:[%s0 + $0x8] sm:$0xf]
    %124 = vrot.lane.b32.xlu0 %v122, 35
    %v125 = vpop.permute.xlu0 %124
    %127 = vst.msk [vmem:[#allocation2 + $0xc] sm:$0xf] %vm51, %v125
    %v128 = vld [vmem:[%s0 + $0x8] sm:$0xf]
    %130 = vrot.lane.b32.xlu0 %v128, 51
    %v131 = vpop.permute.xlu0 %130
    %133 = vst.msk [vmem:[#allocation2 + $0x10] sm:$0xf] %vm58, %v131
    %v134 = vld [vmem:[%s0 + $0x8] sm:$0xf]
    %136 = vrot.lane.b32.xlu0 %v134, 67
    %v137 = vpop.permute.xlu0 %136
    %139 = vst.msk [vmem:[#allocation2 + $0x10] sm:$0xf] %vm65, %v137
    %v140 = vld [vmem:[%s0 + $0x8] sm:$0xf]
    %142 = vrot.lane.b32.xlu0 %v140, 83
    %v143 = vpop.permute.xlu0 %142
    %145 = vst.msk [vmem:[#allocation2 + $0x10] sm:$0xf] %vm72, %v143
    %v146 = vld [vmem:[%s0] sm:$0xf0]
    %v148 = vcombine.high %v146, %v146
    %149 = vrot.lane.b32.xlu0 %v148, 99
    %v150 = vpop.permute.xlu0 %149
    %152 = vst.msk [vmem:[#allocation2 + $0x18] sm:$0xf] %vm51, %v150
    %v153 = vld [vmem:[%s0] sm:$0xf0]
    %v155 = vcombine.high %v153, %v153
    %156 = vrot.lane.b32.xlu0 %v155, 115
    %v157 = vpop.permute.xlu0 %156
    %159 = vst.msk [vmem:[#allocation2 + $0x1c] sm:$0xf] %vm58, %v157
    %v160 = vld [vmem:[%s0] sm:$0xf0]
    %v162 = vcombine.high %v160, %v160
    %163 = vrot.lane.b32.xlu0 %v162, 3
    %v164 = vpop.permute.xlu0 %163
    %166 = vst.msk [vmem:[#allocation2 + $0x1c] sm:$0xf] %vm65, %v164
    %v167 = vld [vmem:[%s0] sm:$0xf0]
    %v169 = vcombine.high %v167, %v167
    %170 = vrot.lane.b32.xlu0 %v169, 19
    %v171 = vpop.permute.xlu0 %170
    %173 = vst.msk [vmem:[#allocation2 + $0x1c] sm:$0xf] %vm72, %v171
    %v174 = vld [vmem:[%s0] sm:$0xf0]
    %v176 = vcombine.high %v174, %v174
    %177 = vrot.lane.b32.xlu0 %v176, 35
    %v178 = vpop.permute.xlu0 %177
    %180 = vst.msk [vmem:[#allocation2 + $0x1c] sm:$0xf] %vm51, %v178
    %v181 = vld [vmem:[%s0] sm:$0xf0]
    %v183 = vcombine.high %v181, %v181
    %184 = vrot.lane.b32.xlu0 %v183, 51
    %v185 = vpop.permute.xlu0 %184
    %187 = vst.msk [vmem:[#allocation2 + $0x20] sm:$0xf] %vm58, %v185
    %v188 = vld [vmem:[%s0] sm:$0xf0]
    %v190 = vcombine.high %v188, %v188
    %191 = vrot.lane.b32.xlu0 %v190, 67
    %v192 = vpop.permute.xlu0 %191
    %194 = vst.msk [vmem:[#allocation2 + $0x20] sm:$0xf] %vm65, %v192
    %v195 = vld [vmem:[%s0] sm:$0xf0]
    %v197 = vcombine.high %v195, %v195
    %198 = vrot.lane.b32.xlu0 %v197, 83
    %v199 = vpop.permute.xlu0 %198
    %201 = vst.msk [vmem:[#allocation2 + $0x20] sm:$0xf] %vm72, %v199
    %v202 = vld [vmem:[%s0 + $0x8] sm:$0xf0]
    %v204 = vcombine.high %v202, %v202
    %205 = vrot.lane.b32.xlu0 %v204, 99
    %v206 = vpop.permute.xlu0 %205
    %208 = vst.msk [vmem:[#allocation2 + $0x20] sm:$0xf] %vm51, %v206
    %v209 = vld [vmem:[%s0 + $0x8] sm:$0xf0]
    %v211 = vcombine.high %v209, %v209
    %212 = vrot.lane.b32.xlu0 %v211, 115
    %v213 = vpop.permute.xlu0 %212
    %215 = vst.msk [vmem:[#allocation2 + $0x24] sm:$0xf] %vm58, %v213
    %v216 = vld [vmem:[%s0 + $0x8] sm:$0xf0]
    %v218 = vcombine.high %v216, %v216
    %219 = vrot.lane.b32.xlu0 %v218, 3
    %v220 = vpop.permute.xlu0 %219
    %222 = vst.msk [vmem:[#allocation2 + $0x24] sm:$0xf] %vm65, %v220
    %v223 = vld [vmem:[%s0 + $0x8] sm:$0xf0]
    %v225 = vcombine.high %v223, %v223
    %226 = vrot.lane.b32.xlu0 %v225, 19
    %v227 = vpop.permute.xlu0 %226
    %229 = vst.msk [vmem:[#allocation2 + $0x24] sm:$0xf] %vm72, %v227
    %v230 = vld [vmem:[%s0 + $0x8] sm:$0xf0]
    %v232 = vcombine.high %v230, %v230
    %233 = vrot.lane.b32.xlu0 %v232, 35
    %v234 = vpop.permute.xlu0 %233
    %236 = vst.msk [vmem:[#allocation2 + $0x24] sm:$0xf] %vm51, %v234
    %v237 = vld [vmem:[%s0 + $0x8] sm:$0xf0]
    %v239 = vcombine.high %v237, %v237
    %240 = vrot.lane.b32.xlu0 %v239, 51
    %v241 = vpop.permute.xlu0 %240
    %243 = vst.msk [vmem:[#allocation2 + $0x28] sm:$0xf] %vm58, %v241
    %v244 = vld [vmem:[%s0 + $0x8] sm:$0xf0]
    %v246 = vcombine.high %v244, %v244
    %247 = vrot.lane.b32.xlu0 %v246, 67
    %v248 = vpop.permute.xlu0 %247
    %250 = vst.msk [vmem:[#allocation2 + $0x28] sm:$0xf] %vm65, %v248
    %v251 = vld [vmem:[%s0 + $0x8] sm:$0xf0]
    %v253 = vcombine.high %v251, %v251
    %254 = vrot.lane.b32.xlu0 %v253, 83
    %v255 = vpop.permute.xlu0 %254
    %257 = vst.msk [vmem:[#allocation2 + $0x28] sm:$0xf] %vm72, %v255
    %v258 = vld [vmem:[#allocation2] sm:$0xff]
    %v259 = vld [vmem:[#allocation2 + $0x8] sm:$0xff]
    %v260 = vld [vmem:[#allocation2 + $0x10] sm:$0xff]
    %v261 = vld [vmem:[#allocation2 + $0x18] sm:$0xff]
    %v262 = vld [vmem:[#allocation2 + $0x20] sm:$0xff]
    %v263 = vld [vmem:[#allocation2 + $0x28] sm:$0xff]
    %v270 = vcombine.high %v258, %v258
    %v271 = vcombine.high %v259, %v259
    %v272 = vcombine.high %v260, %v260
    %v273 = vcombine.high %v261, %v261
    %v274 = vcombine.high %v262, %v262
    %v275 = vcombine.high %v263, %v263
    %282 = vst [vmem:[#allocation3] sm:$0xf] %v258
    %283 = vst [vmem:[#allocation3 + $0x8] sm:$0xf] %v270
    %284 = vst [vmem:[#allocation3 + $0x10] sm:$0xf] %v259
    %285 = vst [vmem:[#allocation3 + $0x18] sm:$0xf] %v271
    %286 = vst [vmem:[#allocation3 + $0x20] sm:$0xf] %v260
    %287 = vst [vmem:[#allocation3 + $0x28] sm:$0xf] %v272
    %288 = vst [vmem:[#allocation3 + $0x30] sm:$0xf] %v261
    %289 = vst [vmem:[#allocation3 + $0x38] sm:$0xf] %v273
    %290 = vst [vmem:[#allocation3 + $0x40] sm:$0xf] %v262
    %291 = vst [vmem:[#allocation3 + $0x48] sm:$0xf] %v274
    %292 = vst [vmem:[#allocation3 + $0x50] sm:$0xf] %v263
    %293 = vst [vmem:[#allocation3 + $0x58] sm:$0xf] %v275
    %v294 = vld [vmem:[#allocation2] sm:$0xff]
    %v295 = vld [vmem:[#allocation2 + $0x8] sm:$0xff]
    %v296 = vld [vmem:[#allocation2 + $0x10] sm:$0xff]
    %v297 = vld [vmem:[#allocation2 + $0x18] sm:$0xff]
    %v298 = vld [vmem:[#allocation2 + $0x20] sm:$0xff]
    %v299 = vld [vmem:[#allocation2 + $0x28] sm:$0xff]
    %v306 = vcombine.low %v294, %v294
    %v307 = vcombine.low %v295, %v295
    %v308 = vcombine.low %v296, %v296
    %v309 = vcombine.low %v297, %v297
    %v310 = vcombine.low %v298, %v298
    %v311 = vcombine.low %v299, %v299
    %318 = vst [vmem:[#allocation3 + $0x120] sm:$0xf0] %v306
    %319 = vst [vmem:[#allocation3 + $0x128] sm:$0xf0] %v294
    %320 = vst [vmem:[#allocation3 + $0x130] sm:$0xf0] %v307
    %321 = vst [vmem:[#allocation3 + $0x138] sm:$0xf0] %v295
    %322 = vst [vmem:[#allocation3 + $0x140] sm:$0xf0] %v308
    %323 = vst [vmem:[#allocation3 + $0x148] sm:$0xf0] %v296
    %324 = vst [vmem:[#allocation3 + $0x150] sm:$0xf0] %v309
    %325 = vst [vmem:[#allocation3 + $0x158] sm:$0xf0] %v297
    %326 = vst [vmem:[#allocation3 + $0x160] sm:$0xf0] %v310
    %327 = vst [vmem:[#allocation3 + $0x168] sm:$0xf0] %v298
    %328 = vst [vmem:[#allocation3 + $0x170] sm:$0xf0] %v311
    %329 = vst [vmem:[#allocation3 + $0x178] sm:$0xf0] %v299
    %v330 = vld [vmem:[#allocation2] sm:$0xff]
    %v331 = vld [vmem:[#allocation2 + $0x8] sm:$0xff]
    %v332 = vld [vmem:[#allocation2 + $0x10] sm:$0xff]
    %v333 = vld [vmem:[#allocation2 + $0x18] sm:$0xff]
    %v334 = vld [vmem:[#allocation2 + $0x20] sm:$0xff]
    %v335 = vld [vmem:[#allocation2 + $0x28] sm:$0xff]
    %v336 = vld [vmem:[#allocation2 + $0x30] sm:$0xf]
    %v344 = vcombine.low %v330, %v330
    %v345 = vcombine.low %v331, %v331
    %v346 = vcombine.low %v332, %v332
    %v347 = vcombine.low %v333, %v333
    %v348 = vcombine.low %v334, %v334
    %v349 = vcombine.low %v335, %v335
    %v350 = vcombine.low %v336, %v336
    %351 = vrot.lane.b32.xlu0 %v344, 96
    %v352 = vpop.permute.xlu0 %351
    %353 = vrot.lane.b32.xlu0 %v330, 96
    %v354 = vpop.permute.xlu0 %353
    %355 = vrot.lane.b32.xlu0 %v345, 96
    %v356 = vpop.permute.xlu0 %355
    %357 = vrot.lane.b32.xlu0 %v331, 96
    %v358 = vpop.permute.xlu0 %357
    %359 = vrot.lane.b32.xlu0 %v346, 96
    %v360 = vpop.permute.xlu0 %359
    %361 = vrot.lane.b32.xlu0 %v332, 96
    %v362 = vpop.permute.xlu0 %361
    %363 = vrot.lane.b32.xlu0 %v347, 96
    %v364 = vpop.permute.xlu0 %363
    %365 = vrot.lane.b32.xlu0 %v333, 96
    %v366 = vpop.permute.xlu0 %365
    %367 = vrot.lane.b32.xlu0 %v348, 96
    %v368 = vpop.permute.xlu0 %367
    %369 = vrot.lane.b32.xlu0 %v334, 96
    %v370 = vpop.permute.xlu0 %369
    %371 = vrot.lane.b32.xlu0 %v349, 96
    %v372 = vpop.permute.xlu0 %371
    %373 = vrot.lane.b32.xlu0 %v335, 96
    %v374 = vpop.permute.xlu0 %373
    %375 = vrot.lane.b32.xlu0 %v350, 96
    %v376 = vpop.permute.xlu0 %375
    %vm377 = vcmask 785408
    %v378 = vsel %vm377, %v352, %v354
    %v379 = vsel %vm377, %v354, %v356
    %v380 = vsel %vm377, %v356, %v358
    %v381 = vsel %vm377, %v358, %v360
    %v382 = vsel %vm377, %v360, %v362
    %v383 = vsel %vm377, %v362, %v364
    %v384 = vsel %vm377, %v364, %v366
    %v385 = vsel %vm377, %v366, %v368
    %v386 = vsel %vm377, %v368, %v370
    %v387 = vsel %vm377, %v370, %v372
    %v388 = vsel %vm377, %v372, %v374
    %v389 = vsel %vm377, %v374, %v376
    %402 = vst [vmem:[#allocation3] sm:$0xf0] %v378
    %403 = vst [vmem:[#allocation3 + $0x8] sm:$0xf0] %v379
    %404 = vst [vmem:[#allocation3 + $0x10] sm:$0xf0] %v380
    %405 = vst [vmem:[#allocation3 + $0x18] sm:$0xf0] %v381
    %406 = vst [vmem:[#allocation3 + $0x20] sm:$0xf0] %v382
    %407 = vst [vmem:[#allocation3 + $0x28] sm:$0xf0] %v383
    %408 = vst [vmem:[#allocation3 + $0x30] sm:$0xf0] %v384
    %409 = vst [vmem:[#allocation3 + $0x38] sm:$0xf0] %v385
    %410 = vst [vmem:[#allocation3 + $0x40] sm:$0xf0] %v386
    %411 = vst [vmem:[#allocation3 + $0x48] sm:$0xf0] %v387
    %412 = vst [vmem:[#allocation3 + $0x50] sm:$0xf0] %v388
    %413 = vst [vmem:[#allocation3 + $0x58] sm:$0xf0] %v389
    %v414 = vld [vmem:[#allocation2] sm:$0xff]
    %v415 = vld [vmem:[#allocation2 + $0x8] sm:$0xff]
    %v416 = vld [vmem:[#allocation2 + $0x10] sm:$0xff]
    %v417 = vld [vmem:[#allocation2 + $0x18] sm:$0xff]
    %v418 = vld [vmem:[#allocation2 + $0x20] sm:$0xff]
    %v419 = vld [vmem:[#allocation2 + $0x28] sm:$0xff]
    %v420 = vld [vmem:[#allocation2 + $0x30] sm:$0xf]
    %v428 = vcombine.high %v414, %v414
    %v429 = vcombine.high %v415, %v415
    %v430 = vcombine.high %v416, %v416
    %v431 = vcombine.high %v417, %v417
    %v432 = vcombine.high %v418, %v418
    %v433 = vcombine.high %v419, %v419
    %434 = vrot.lane.b32.xlu0 %v414, 127
    %v435 = vpop.permute.xlu0 %434
    %436 = vrot.lane.b32.xlu0 %v428, 127
    %v437 = vpop.permute.xlu0 %436
    %438 = vrot.lane.b32.xlu0 %v415, 127
    %v439 = vpop.permute.xlu0 %438
    %440 = vrot.lane.b32.xlu0 %v429, 127
    %v441 = vpop.permute.xlu0 %440
    %442 = vrot.lane.b32.xlu0 %v416, 127
    %v443 = vpop.permute.xlu0 %442
    %444 = vrot.lane.b32.xlu0 %v430, 127
    %v445 = vpop.permute.xlu0 %444
    %446 = vrot.lane.b32.xlu0 %v417, 127
    %v447 = vpop.permute.xlu0 %446
    %448 = vrot.lane.b32.xlu0 %v431, 127
    %v449 = vpop.permute.xlu0 %448
    %450 = vrot.lane.b32.xlu0 %v418, 127
    %v451 = vpop.permute.xlu0 %450
    %452 = vrot.lane.b32.xlu0 %v432, 127
    %v453 = vpop.permute.xlu0 %452
    %454 = vrot.lane.b32.xlu0 %v419, 127
    %v455 = vpop.permute.xlu0 %454
    %456 = vrot.lane.b32.xlu0 %v433, 127
    %v457 = vpop.permute.xlu0 %456
    %458 = vrot.lane.b32.xlu0 %v420, 127
    %v459 = vpop.permute.xlu0 %458
    %vm460 = vcmask 1039360
    %v461 = vsel %vm460, %v435, %v437
    %v462 = vsel %vm460, %v437, %v439
    %v463 = vsel %vm460, %v439, %v441
    %v464 = vsel %vm460, %v441, %v443
    %v465 = vsel %vm460, %v443, %v445
    %v466 = vsel %vm460, %v445, %v447
    %v467 = vsel %vm460, %v447, %v449
    %v468 = vsel %vm460, %v449, %v451
    %v469 = vsel %vm460, %v451, %v453
    %v470 = vsel %vm460, %v453, %v455
    %v471 = vsel %vm460, %v455, %v457
    %v472 = vsel %vm460, %v457, %v459
    %485 = vst [vmem:[#allocation3 + $0x180] sm:$0xf] %v461
    %486 = vst [vmem:[#allocation3 + $0x188] sm:$0xf] %v462
    %487 = vst [vmem:[#allocation3 + $0x190] sm:$0xf] %v463
    %488 = vst [vmem:[#allocation3 + $0x198] sm:$0xf] %v464
    %489 = vst [vmem:[#allocation3 + $0x1a0] sm:$0xf] %v465
    %490 = vst [vmem:[#allocation3 + $0x1a8] sm:$0xf] %v466
    %491 = vst [vmem:[#allocation3 + $0x1b0] sm:$0xf] %v467
    %492 = vst [vmem:[#allocation3 + $0x1b8] sm:$0xf] %v468
    %493 = vst [vmem:[#allocation3 + $0x1c0] sm:$0xf] %v469
    %494 = vst [vmem:[#allocation3 + $0x1c8] sm:$0xf] %v470
    %495 = vst [vmem:[#allocation3 + $0x1d0] sm:$0xf] %v471
    %496 = vst [vmem:[#allocation3 + $0x1d8] sm:$0xf] %v472
    %v497 = vld [vmem:[#allocation2] sm:$0xff]
    %v498 = vld [vmem:[#allocation2 + $0x8] sm:$0xff]
    %v499 = vld [vmem:[#allocation2 + $0x10] sm:$0xff]
    %v500 = vld [vmem:[#allocation2 + $0x18] sm:$0xff]
    %v501 = vld [vmem:[#allocation2 + $0x20] sm:$0xff]
    %v502 = vld [vmem:[#allocation2 + $0x28] sm:$0xff]
    %v503 = vld [vmem:[#allocation2 + $0x30] sm:$0xf]
    %v511 = vcombine.high %v497, %v497
    %v512 = vcombine.high %v498, %v498
    %v513 = vcombine.high %v499, %v499
    %v514 = vcombine.high %v500, %v500
    %v515 = vcombine.high %v501, %v501
    %v516 = vcombine.high %v502, %v502
    %517 = vrot.lane.b32.xlu0 %v497, 64
    %v518 = vpop.permute.xlu0 %517
    %519 = vrot.lane.b32.xlu0 %v511, 64
    %v520 = vpop.permute.xlu0 %519
    %521 = vrot.lane.b32.xlu0 %v498, 64
    %v522 = vpop.permute.xlu0 %521
    %523 = vrot.lane.b32.xlu0 %v512, 64
    %v524 = vpop.permute.xlu0 %523
    %525 = vrot.lane.b32.xlu0 %v499, 64
    %v526 = vpop.permute.xlu0 %525
    %527 = vrot.lane.b32.xlu0 %v513, 64
    %v528 = vpop.permute.xlu0 %527
    %529 = vrot.lane.b32.xlu0 %v500, 64
    %v530 = vpop.permute.xlu0 %529
    %531 = vrot.lane.b32.xlu0 %v514, 64
    %v532 = vpop.permute.xlu0 %531
    %533 = vrot.lane.b32.xlu0 %v501, 64
    %v534 = vpop.permute.xlu0 %533
    %535 = vrot.lane.b32.xlu0 %v515, 64
    %v536 = vpop.permute.xlu0 %535
    %537 = vrot.lane.b32.xlu0 %v502, 64
    %v538 = vpop.permute.xlu0 %537
    %539 = vrot.lane.b32.xlu0 %v516, 64
    %v540 = vpop.permute.xlu0 %539
    %541 = vrot.lane.b32.xlu0 %v503, 64
    %v542 = vpop.permute.xlu0 %541
    %vm543 = vcmask 523264
    %v544 = vsel %vm543, %v518, %v520
    %v545 = vsel %vm543, %v520, %v522
    %v546 = vsel %vm543, %v522, %v524
    %v547 = vsel %vm543, %v524, %v526
    %v548 = vsel %vm543, %v526, %v528
    %v549 = vsel %vm543, %v528, %v530
    %v550 = vsel %vm543, %v530, %v532
    %v551 = vsel %vm543, %v532, %v534
    %v552 = vsel %vm543, %v534, %v536
    %v553 = vsel %vm543, %v536, %v538
    %v554 = vsel %vm543, %v538, %v540
    %v555 = vsel %vm543, %v540, %v542
    %568 = vst [vmem:[#allocation3 + $0x60] sm:$0xf] %v544
    %569 = vst [vmem:[#allocation3 + $0x68] sm:$0xf] %v545
    %570 = vst [vmem:[#allocation3 + $0x70] sm:$0xf] %v546
    %571 = vst [vmem:[#allocation3 + $0x78] sm:$0xf] %v547
    %572 = vst [vmem:[#allocation3 + $0x80] sm:$0xf] %v548
    %573 = vst [vmem:[#allocation3 + $0x88] sm:$0xf] %v549
    %574 = vst [vmem:[#allocation3 + $0x90] sm:$0xf] %v550
    %575 = vst [vmem:[#allocation3 + $0x98] sm:$0xf] %v551
    %576 = vst [vmem:[#allocation3 + $0xa0] sm:$0xf] %v552
    %577 = vst [vmem:[#allocation3 + $0xa8] sm:$0xf] %v553
    %578 = vst [vmem:[#allocation3 + $0xb0] sm:$0xf] %v554
    %579 = vst [vmem:[#allocation3 + $0xb8] sm:$0xf] %v555
    %v580 = vld [vmem:[#allocation2] sm:$0xff]
    %v581 = vld [vmem:[#allocation2 + $0x8] sm:$0xff]
    %v582 = vld [vmem:[#allocation2 + $0x10] sm:$0xff]
    %v583 = vld [vmem:[#allocation2 + $0x18] sm:$0xff]
    %v584 = vld [vmem:[#allocation2 + $0x20] sm:$0xff]
    %v585 = vld [vmem:[#allocation2 + $0x28] sm:$0xff]
    %v586 = vld [vmem:[#allocation2 + $0x30] sm:$0xf]
    %v594 = vcombine.low %v580, %v580
    %v595 = vcombine.low %v581, %v581
    %v596 = vcombine.low %v582, %v582
    %v597 = vcombine.low %v583, %v583
    %v598 = vcombine.low %v584, %v584
    %v599 = vcombine.low %v585, %v585
    %v600 = vcombine.low %v586, %v586
    %601 = vrot.lane.b32.xlu0 %v594, 126
    %v602 = vpop.permute.xlu0 %601
    %603 = vrot.lane.b32.xlu0 %v580, 126
    %v604 = vpop.permute.xlu0 %603
    %605 = vrot.lane.b32.xlu0 %v595, 126
    %v606 = vpop.permute.xlu0 %605
    %607 = vrot.lane.b32.xlu0 %v581, 126
    %v608 = vpop.permute.xlu0 %607
    %609 = vrot.lane.b32.xlu0 %v596, 126
    %v610 = vpop.permute.xlu0 %609
    %611 = vrot.lane.b32.xlu0 %v582, 126
    %v612 = vpop.permute.xlu0 %611
    %613 = vrot.lane.b32.xlu0 %v597, 126
    %v614 = vpop.permute.xlu0 %613
    %615 = vrot.lane.b32.xlu0 %v583, 126
    %v616 = vpop.permute.xlu0 %615
    %617 = vrot.lane.b32.xlu0 %v598, 126
    %v618 = vpop.permute.xlu0 %617
    %619 = vrot.lane.b32.xlu0 %v584, 126
    %v620 = vpop.permute.xlu0 %619
    %621 = vrot.lane.b32.xlu0 %v599, 126
    %v622 = vpop.permute.xlu0 %621
    %623 = vrot.lane.b32.xlu0 %v585, 126
    %v624 = vpop.permute.xlu0 %623
    %625 = vrot.lane.b32.xlu0 %v600, 126
    %v626 = vpop.permute.xlu0 %625
    %vm627 = vcmask 1031168
    %v628 = vsel %vm627, %v602, %v604
    %v629 = vsel %vm627, %v604, %v606
    %v630 = vsel %vm627, %v606, %v608
    %v631 = vsel %vm627, %v608, %v610
    %v632 = vsel %vm627, %v610, %v612
    %v633 = vsel %vm627, %v612, %v614
    %v634 = vsel %vm627, %v614, %v616
    %v635 = vsel %vm627, %v616, %v618
    %v636 = vsel %vm627, %v618, %v620
    %v637 = vsel %vm627, %v620, %v622
    %v638 = vsel %vm627, %v622, %v624
    %v639 = vsel %vm627, %v624, %v626
    %652 = vst [vmem:[#allocation3 + $0x180] sm:$0xf0] %v628
    %653 = vst [vmem:[#allocation3 + $0x188] sm:$0xf0] %v629
    %654 = vst [vmem:[#allocation3 + $0x190] sm:$0xf0] %v630
    %655 = vst [vmem:[#allocation3 + $0x198] sm:$0xf0] %v631
    %656 = vst [vmem:[#allocation3 + $0x1a0] sm:$0xf0] %v632
    %657 = vst [vmem:[#allocation3 + $0x1a8] sm:$0xf0] %v633
    %658 = vst [vmem:[#allocation3 + $0x1b0] sm:$0xf0] %v634
    %659 = vst [vmem:[#allocation3 + $0x1b8] sm:$0xf0] %v635
    %660 = vst [vmem:[#allocation3 + $0x1c0] sm:$0xf0] %v636
    %661 = vst [vmem:[#allocation3 + $0x1c8] sm:$0xf0] %v637
    %662 = vst [vmem:[#allocation3 + $0x1d0] sm:$0xf0] %v638
    %663 = vst [vmem:[#allocation3 + $0x1d8] sm:$0xf0] %v639
    %v664 = vld [vmem:[#allocation2] sm:$0xff]
    %v665 = vld [vmem:[#allocation2 + $0x8] sm:$0xff]
    %v666 = vld [vmem:[#allocation2 + $0x10] sm:$0xff]
    %v667 = vld [vmem:[#allocation2 + $0x18] sm:$0xff]
    %v668 = vld [vmem:[#allocation2 + $0x20] sm:$0xff]
    %v669 = vld [vmem:[#allocation2 + $0x28] sm:$0xff]
    %v670 = vld [vmem:[#allocation2 + $0x30] sm:$0xf]
    %v678 = vcombine.low %v664, %v664
    %v679 = vcombine.low %v665, %v665
    %v680 = vcombine.low %v666, %v666
    %v681 = vcombine.low %v667, %v667
    %v682 = vcombine.low %v668, %v668
    %v683 = vcombine.low %v669, %v669
    %v684 = vcombine.low %v670, %v670
    %685 = vrot.lane.b32.xlu0 %v678, 32
    %v686 = vpop.permute.xlu0 %685
    %687 = vrot.lane.b32.xlu0 %v664, 32
    %v688 = vpop.permute.xlu0 %687
    %689 = vrot.lane.b32.xlu0 %v679, 32
    %v690 = vpop.permute.xlu0 %689
    %691 = vrot.lane.b32.xlu0 %v665, 32
    %v692 = vpop.permute.xlu0 %691
    %693 = vrot.lane.b32.xlu0 %v680, 32
    %v694 = vpop.permute.xlu0 %693
    %695 = vrot.lane.b32.xlu0 %v666, 32
    %v696 = vpop.permute.xlu0 %695
    %697 = vrot.lane.b32.xlu0 %v681, 32
    %v698 = vpop.permute.xlu0 %697
    %699 = vrot.lane.b32.xlu0 %v667, 32
    %v700 = vpop.permute.xlu0 %699
    %701 = vrot.lane.b32.xlu0 %v682, 32
    %v702 = vpop.permute.xlu0 %701
    %703 = vrot.lane.b32.xlu0 %v668, 32
    %v704 = vpop.permute.xlu0 %703
    %705 = vrot.lane.b32.xlu0 %v683, 32
    %v706 = vpop.permute.xlu0 %705
    %707 = vrot.lane.b32.xlu0 %v669, 32
    %v708 = vpop.permute.xlu0 %707
    %709 = vrot.lane.b32.xlu0 %v684, 32
    %v710 = vpop.permute.xlu0 %709
    %vm711 = vcmask 261120
    %v712 = vsel %vm711, %v686, %v688
    %v713 = vsel %vm711, %v688, %v690
    %v714 = vsel %vm711, %v690, %v692
    %v715 = vsel %vm711, %v692, %v694
    %v716 = vsel %vm711, %v694, %v696
    %v717 = vsel %vm711, %v696, %v698
    %v718 = vsel %vm711, %v698, %v700
    %v719 = vsel %vm711, %v700, %v702
    %v720 = vsel %vm711, %v702, %v704
    %v721 = vsel %vm711, %v704, %v706
    %v722 = vsel %vm711, %v706, %v708
    %v723 = vsel %vm711, %v708, %v710
    %736 = vst [vmem:[#allocation3 + $0x60] sm:$0xf0] %v712
    %737 = vst [vmem:[#allocation3 + $0x68] sm:$0xf0] %v713
    %738 = vst [vmem:[#allocation3 + $0x70] sm:$0xf0] %v714
    %739 = vst [vmem:[#allocation3 + $0x78] sm:$0xf0] %v715
    %740 = vst [vmem:[#allocation3 + $0x80] sm:$0xf0] %v716
    %741 = vst [vmem:[#allocation3 + $0x88] sm:$0xf0] %v717
    %742 = vst [vmem:[#allocation3 + $0x90] sm:$0xf0] %v718
    %743 = vst [vmem:[#allocation3 + $0x98] sm:$0xf0] %v719
    %744 = vst [vmem:[#allocation3 + $0xa0] sm:$0xf0] %v720
    %745 = vst [vmem:[#allocation3 + $0xa8] sm:$0xf0] %v721
    %746 = vst [vmem:[#allocation3 + $0xb0] sm:$0xf0] %v722
    %747 = vst [vmem:[#allocation3 + $0xb8] sm:$0xf0] %v723
    %v748 = vld [vmem:[#allocation2] sm:$0xff]
    %v749 = vld [vmem:[#allocation2 + $0x8] sm:$0xff]
    %v750 = vld [vmem:[#allocation2 + $0x10] sm:$0xff]
    %v751 = vld [vmem:[#allocation2 + $0x18] sm:$0xff]
    %v752 = vld [vmem:[#allocation2 + $0x20] sm:$0xff]
    %v753 = vld [vmem:[#allocation2 + $0x28] sm:$0xff]
    %v754 = vld [vmem:[#allocation2 + $0x30] sm:$0xf]
    %v762 = vcombine.high %v748, %v748
    %v763 = vcombine.high %v749, %v749
    %v764 = vcombine.high %v750, %v750
    %v765 = vcombine.high %v751, %v751
    %v766 = vcombine.high %v752, %v752
    %v767 = vcombine.high %v753, %v753
    %768 = vrot.lane.b32.xlu0 %v748, 125
    %v769 = vpop.permute.xlu0 %768
    %770 = vrot.lane.b32.xlu0 %v762, 125
    %v771 = vpop.permute.xlu0 %770
    %772 = vrot.lane.b32.xlu0 %v749, 125
    %v773 = vpop.permute.xlu0 %772
    %774 = vrot.lane.b32.xlu0 %v763, 125
    %v775 = vpop.permute.xlu0 %774
    %776 = vrot.lane.b32.xlu0 %v750, 125
    %v777 = vpop.permute.xlu0 %776
    %778 = vrot.lane.b32.xlu0 %v764, 125
    %v779 = vpop.permute.xlu0 %778
    %780 = vrot.lane.b32.xlu0 %v751, 125
    %v781 = vpop.permute.xlu0 %780
    %782 = vrot.lane.b32.xlu0 %v765, 125
    %v783 = vpop.permute.xlu0 %782
    %784 = vrot.lane.b32.xlu0 %v752, 125
    %v785 = vpop.permute.xlu0 %784
    %786 = vrot.lane.b32.xlu0 %v766, 125
    %v787 = vpop.permute.xlu0 %786
    %788 = vrot.lane.b32.xlu0 %v753, 125
    %v789 = vpop.permute.xlu0 %788
    %790 = vrot.lane.b32.xlu0 %v767, 125
    %v791 = vpop.permute.xlu0 %790
    %792 = vrot.lane.b32.xlu0 %v754, 125
    %v793 = vpop.permute.xlu0 %792
    %vm794 = vcmask 1022976
    %v795 = vsel %vm794, %v769, %v771
    %v796 = vsel %vm794, %v771, %v773
    %v797 = vsel %vm794, %v773, %v775
    %v798 = vsel %vm794, %v775, %v777
    %v799 = vsel %vm794, %v777, %v779
    %v800 = vsel %vm794, %v779, %v781
    %v801 = vsel %vm794, %v781, %v783
    %v802 = vsel %vm794, %v783, %v785
    %v803 = vsel %vm794, %v785, %v787
    %v804 = vsel %vm794, %v787, %v789
    %v805 = vsel %vm794, %v789, %v791
    %v806 = vsel %vm794, %v791, %v793
    %819 = vst [vmem:[#allocation3 + $0x1e0] sm:$0xf] %v795
    %820 = vst [vmem:[#allocation3 + $0x1e8] sm:$0xf] %v796
    %821 = vst [vmem:[#allocation3 + $0x1f0] sm:$0xf] %v797
    %822 = vst [vmem:[#allocation3 + $0x1f8] sm:$0xf] %v798
    %823 = vst [vmem:[#allocation3 + $0x200] sm:$0xf] %v799
    %824 = vst [vmem:[#allocation3 + $0x208] sm:$0xf] %v800
    %825 = vst [vmem:[#allocation3 + $0x210] sm:$0xf] %v801
    %826 = vst [vmem:[#allocation3 + $0x218] sm:$0xf] %v802
    %827 = vst [vmem:[#allocation3 + $0x220] sm:$0xf] %v803
    %828 = vst [vmem:[#allocation3 + $0x228] sm:$0xf] %v804
    %829 = vst [vmem:[#allocation3 + $0x230] sm:$0xf] %v805
    %830 = vst [vmem:[#allocation3 + $0x238] sm:$0xf] %v806
    %v831 = vld [vmem:[#allocation2 + $0x4] sm:$0xff]
    %v832 = vld [vmem:[#allocation2 + $0xc] sm:$0xff]
    %v833 = vld [vmem:[#allocation2 + $0x14] sm:$0xff]
    %v834 = vld [vmem:[#allocation2 + $0x1c] sm:$0xff]
    %v835 = vld [vmem:[#allocation2 + $0x24] sm:$0xff]
    %v836 = vld [vmem:[#allocation2 + $0x2c] sm:$0xff]
    %v843 = vcombine.high %v831, %v831
    %v844 = vcombine.high %v832, %v832
    %v845 = vcombine.high %v833, %v833
    %v846 = vcombine.high %v834, %v834
    %v847 = vcombine.high %v835, %v835
    %v848 = vcombine.high %v836, %v836
    %855 = vst [vmem:[#allocation3 + $0xc0] sm:$0xf] %v831
    %856 = vst [vmem:[#allocation3 + $0xc8] sm:$0xf] %v843
    %857 = vst [vmem:[#allocation3 + $0xd0] sm:$0xf] %v832
    %858 = vst [vmem:[#allocation3 + $0xd8] sm:$0xf] %v844
    %859 = vst [vmem:[#allocation3 + $0xe0] sm:$0xf] %v833
    %860 = vst [vmem:[#allocation3 + $0xe8] sm:$0xf] %v845
    %861 = vst [vmem:[#allocation3 + $0xf0] sm:$0xf] %v834
    %862 = vst [vmem:[#allocation3 + $0xf8] sm:$0xf] %v846
    %863 = vst [vmem:[#allocation3 + $0x100] sm:$0xf] %v835
    %864 = vst [vmem:[#allocation3 + $0x108] sm:$0xf] %v847
    %865 = vst [vmem:[#allocation3 + $0x110] sm:$0xf] %v836
    %866 = vst [vmem:[#allocation3 + $0x118] sm:$0xf] %v848
    %v867 = vld [vmem:[#allocation2] sm:$0xff]
    %v868 = vld [vmem:[#allocation2 + $0x8] sm:$0xff]
    %v869 = vld [vmem:[#allocation2 + $0x10] sm:$0xff]
    %v870 = vld [vmem:[#allocation2 + $0x18] sm:$0xff]
    %v871 = vld [vmem:[#allocation2 + $0x20] sm:$0xff]
    %v872 = vld [vmem:[#allocation2 + $0x28] sm:$0xff]
    %v873 = vld [vmem:[#allocation2 + $0x30] sm:$0xf]
    %v881 = vcombine.low %v867, %v867
    %v882 = vcombine.low %v868, %v868
    %v883 = vcombine.low %v869, %v869
    %v884 = vcombine.low %v870, %v870
    %v885 = vcombine.low %v871, %v871
    %v886 = vcombine.low %v872, %v872
    %v887 = vcombine.low %v873, %v873
    %888 = vrot.lane.b32.xlu0 %v881, 124
    %v889 = vpop.permute.xlu0 %888
    %890 = vrot.lane.b32.xlu0 %v867, 124
    %v891 = vpop.permute.xlu0 %890
    %892 = vrot.lane.b32.xlu0 %v882, 124
    %v893 = vpop.permute.xlu0 %892
    %894 = vrot.lane.b32.xlu0 %v868, 124
    %v895 = vpop.permute.xlu0 %894
    %896 = vrot.lane.b32.xlu0 %v883, 124
    %v897 = vpop.permute.xlu0 %896
    %898 = vrot.lane.b32.xlu0 %v869, 124
    %v899 = vpop.permute.xlu0 %898
    %900 = vrot.lane.b32.xlu0 %v884, 124
    %v901 = vpop.permute.xlu0 %900
    %902 = vrot.lane.b32.xlu0 %v870, 124
    %v903 = vpop.permute.xlu0 %902
    %904 = vrot.lane.b32.xlu0 %v885, 124
    %v905 = vpop.permute.xlu0 %904
    %906 = vrot.lane.b32.xlu0 %v871, 124
    %v907 = vpop.permute.xlu0 %906
    %908 = vrot.lane.b32.xlu0 %v886, 124
    %v909 = vpop.permute.xlu0 %908
    %910 = vrot.lane.b32.xlu0 %v872, 124
    %v911 = vpop.permute.xlu0 %910
    %912 = vrot.lane.b32.xlu0 %v887, 124
    %v913 = vpop.permute.xlu0 %912
    %vm914 = vcmask 1014784
    %v915 = vsel %vm914, %v889, %v891
    %v916 = vsel %vm914, %v891, %v893
    %v917 = vsel %vm914, %v893, %v895
    %v918 = vsel %vm914, %v895, %v897
    %v919 = vsel %vm914, %v897, %v899
    %v920 = vsel %vm914, %v899, %v901
    %v921 = vsel %vm914, %v901, %v903
    %v922 = vsel %vm914, %v903, %v905
    %v923 = vsel %vm914, %v905, %v907
    %v924 = vsel %vm914, %v907, %v909
    %v925 = vsel %vm914, %v909, %v911
    %v926 = vsel %vm914, %v911, %v913
    %939 = vst [vmem:[#allocation3 + $0x1e0] sm:$0xf0] %v915
    %940 = vst [vmem:[#allocation3 + $0x1e8] sm:$0xf0] %v916
    %941 = vst [vmem:[#allocation3 + $0x1f0] sm:$0xf0] %v917
    %942 = vst [vmem:[#allocation3 + $0x1f8] sm:$0xf0] %v918
    %943 = vst [vmem:[#allocation3 + $0x200] sm:$0xf0] %v919
    %944 = vst [vmem:[#allocation3 + $0x208] sm:$0xf0] %v920
    %945 = vst [vmem:[#allocation3 + $0x210] sm:$0xf0] %v921
    %946 = vst [vmem:[#allocation3 + $0x218] sm:$0xf0] %v922
    %947 = vst [vmem:[#allocation3 + $0x220] sm:$0xf0] %v923
    %948 = vst [vmem:[#allocation3 + $0x228] sm:$0xf0] %v924
    %949 = vst [vmem:[#allocation3 + $0x230] sm:$0xf0] %v925
    %950 = vst [vmem:[#allocation3 + $0x238] sm:$0xf0] %v926
    %v951 = vld [vmem:[#allocation2 + $0x4] sm:$0xff]
    %v952 = vld [vmem:[#allocation2 + $0xc] sm:$0xff]
    %v953 = vld [vmem:[#allocation2 + $0x14] sm:$0xff]
    %v954 = vld [vmem:[#allocation2 + $0x1c] sm:$0xff]
    %v955 = vld [vmem:[#allocation2 + $0x24] sm:$0xff]
    %v956 = vld [vmem:[#allocation2 + $0x2c] sm:$0xff]
    %v957 = vld [vmem:[#allocation2 + $0x34] sm:$0xf]
    %v965 = vcombine.low %v951, %v951
    %v966 = vcombine.low %v952, %v952
    %v967 = vcombine.low %v953, %v953
    %v968 = vcombine.low %v954, %v954
    %v969 = vcombine.low %v955, %v955
    %v970 = vcombine.low %v956, %v956
    %v971 = vcombine.low %v957, %v957
    %972 = vrot.lane.b32.xlu0 %v965, 96
    %v973 = vpop.permute.xlu0 %972
    %974 = vrot.lane.b32.xlu0 %v951, 96
    %v975 = vpop.permute.xlu0 %974
    %976 = vrot.lane.b32.xlu0 %v966, 96
    %v977 = vpop.permute.xlu0 %976
    %978 = vrot.lane.b32.xlu0 %v952, 96
    %v979 = vpop.permute.xlu0 %978
    %980 = vrot.lane.b32.xlu0 %v967, 96
    %v981 = vpop.permute.xlu0 %980
    %982 = vrot.lane.b32.xlu0 %v953, 96
    %v983 = vpop.permute.xlu0 %982
    %984 = vrot.lane.b32.xlu0 %v968, 96
    %v985 = vpop.permute.xlu0 %984
    %986 = vrot.lane.b32.xlu0 %v954, 96
    %v987 = vpop.permute.xlu0 %986
    %988 = vrot.lane.b32.xlu0 %v969, 96
    %v989 = vpop.permute.xlu0 %988
    %990 = vrot.lane.b32.xlu0 %v955, 96
    %v991 = vpop.permute.xlu0 %990
    %992 = vrot.lane.b32.xlu0 %v970, 96
    %v993 = vpop.permute.xlu0 %992
    %994 = vrot.lane.b32.xlu0 %v956, 96
    %v995 = vpop.permute.xlu0 %994
    %996 = vrot.lane.b32.xlu0 %v971, 96
    %v997 = vpop.permute.xlu0 %996
    %v998 = vsel %vm377, %v973, %v975
    %v999 = vsel %vm377, %v975, %v977
    %v1000 = vsel %vm377, %v977, %v979
    %v1001 = vsel %vm377, %v979, %v981
    %v1002 = vsel %vm377, %v981, %v983
    %v1003 = vsel %vm377, %v983, %v985
    %v1004 = vsel %vm377, %v985, %v987
    %v1005 = vsel %vm377, %v987, %v989
    %v1006 = vsel %vm377, %v989, %v991
    %v1007 = vsel %vm377, %v991, %v993
    %v1008 = vsel %vm377, %v993, %v995
    %v1009 = vsel %vm377, %v995, %v997
    %1022 = vst [vmem:[#allocation3 + $0xc0] sm:$0xf0] %v998
    %1023 = vst [vmem:[#allocation3 + $0xc8] sm:$0xf0] %v999
    %1024 = vst [vmem:[#allocation3 + $0xd0] sm:$0xf0] %v1000
    %1025 = vst [vmem:[#allocation3 + $0xd8] sm:$0xf0] %v1001
    %1026 = vst [vmem:[#allocation3 + $0xe0] sm:$0xf0] %v1002
    %1027 = vst [vmem:[#allocation3 + $0xe8] sm:$0xf0] %v1003
    %1028 = vst [vmem:[#allocation3 + $0xf0] sm:$0xf0] %v1004
    %1029 = vst [vmem:[#allocation3 + $0xf8] sm:$0xf0] %v1005
    %1030 = vst [vmem:[#allocation3 + $0x100] sm:$0xf0] %v1006
    %1031 = vst [vmem:[#allocation3 + $0x108] sm:$0xf0] %v1007
    %1032 = vst [vmem:[#allocation3 + $0x110] sm:$0xf0] %v1008
    %1033 = vst [vmem:[#allocation3 + $0x118] sm:$0xf0] %v1009
    %v1034 = vld [vmem:[#allocation2] sm:$0xff]
    %v1035 = vld [vmem:[#allocation2 + $0x8] sm:$0xff]
    %v1036 = vld [vmem:[#allocation2 + $0x10] sm:$0xff]
    %v1037 = vld [vmem:[#allocation2 + $0x18] sm:$0xff]
    %v1038 = vld [vmem:[#allocation2 + $0x20] sm:$0xff]
    %v1039 = vld [vmem:[#allocation2 + $0x28] sm:$0xff]
    %v1040 = vld [vmem:[#allocation2 + $0x30] sm:$0xf]
    %v1048 = vcombine.high %v1034, %v1034
    %v1049 = vcombine.high %v1035, %v1035
    %v1050 = vcombine.high %v1036, %v1036
    %v1051 = vcombine.high %v1037, %v1037
    %v1052 = vcombine.high %v1038, %v1038
    %v1053 = vcombine.high %v1039, %v1039
    %1054 = vrot.lane.b32.xlu0 %v1034, 123
    %v1055 = vpop.permute.xlu0 %1054
    %1056 = vrot.lane.b32.xlu0 %v1048, 123
    %v1057 = vpop.permute.xlu0 %1056
    %1058 = vrot.lane.b32.xlu0 %v1035, 123
    %v1059 = vpop.permute.xlu0 %1058
    %1060 = vrot.lane.b32.xlu0 %v1049, 123
    %v1061 = vpop.permute.xlu0 %1060
    %1062 = vrot.lane.b32.xlu0 %v1036, 123
    %v1063 = vpop.permute.xlu0 %1062
    %1064 = vrot.lane.b32.xlu0 %v1050, 123
    %v1065 = vpop.permute.xlu0 %1064
    %1066 = vrot.lane.b32.xlu0 %v1037, 123
    %v1067 = vpop.permute.xlu0 %1066
    %1068 = vrot.lane.b32.xlu0 %v1051, 123
    %v1069 = vpop.permute.xlu0 %1068
    %1070 = vrot.lane.b32.xlu0 %v1038, 123
    %v1071 = vpop.permute.xlu0 %1070
    %1072 = vrot.lane.b32.xlu0 %v1052, 123
    %v1073 = vpop.permute.xlu0 %1072
    %1074 = vrot.lane.b32.xlu0 %v1039, 123
    %v1075 = vpop.permute.xlu0 %1074
    %1076 = vrot.lane.b32.xlu0 %v1053, 123
    %v1077 = vpop.permute.xlu0 %1076
    %1078 = vrot.lane.b32.xlu0 %v1040, 123
    %v1079 = vpop.permute.xlu0 %1078
    %vm1080 = vcmask 1006592
    %v1081 = vsel %vm1080, %v1055, %v1057
    %v1082 = vsel %vm1080, %v1057, %v1059
    %v1083 = vsel %vm1080, %v1059, %v1061
    %v1084 = vsel %vm1080, %v1061, %v1063
    %v1085 = vsel %vm1080, %v1063, %v1065
    %v1086 = vsel %vm1080, %v1065, %v1067
    %v1087 = vsel %vm1080, %v1067, %v1069
    %v1088 = vsel %vm1080, %v1069, %v1071
    %v1089 = vsel %vm1080, %v1071, %v1073
    %v1090 = vsel %vm1080, %v1073, %v1075
    %v1091 = vsel %vm1080, %v1075, %v1077
    %v1092 = vsel %vm1080, %v1077, %v1079
    %1105 = vst [vmem:[#allocation3 + $0x240] sm:$0xf] %v1081
    %1106 = vst [vmem:[#allocation3 + $0x248] sm:$0xf] %v1082
    %1107 = vst [vmem:[#allocation3 + $0x250] sm:$0xf] %v1083
    %1108 = vst [vmem:[#allocation3 + $0x258] sm:$0xf] %v1084
    %1109 = vst [vmem:[#allocation3 + $0x260] sm:$0xf] %v1085
    %1110 = vst [vmem:[#allocation3 + $0x268] sm:$0xf] %v1086
    %1111 = vst [vmem:[#allocation3 + $0x270] sm:$0xf] %v1087
    %1112 = vst [vmem:[#allocation3 + $0x278] sm:$0xf] %v1088
    %1113 = vst [vmem:[#allocation3 + $0x280] sm:$0xf] %v1089
    %1114 = vst [vmem:[#allocation3 + $0x288] sm:$0xf] %v1090
    %1115 = vst [vmem:[#allocation3 + $0x290] sm:$0xf] %v1091
    %1116 = vst [vmem:[#allocation3 + $0x298] sm:$0xf] %v1092
    %v1117 = vld [vmem:[#allocation2 + $0x4] sm:$0xff]
    %v1118 = vld [vmem:[#allocation2 + $0xc] sm:$0xff]
    %v1119 = vld [vmem:[#allocation2 + $0x14] sm:$0xff]
    %v1120 = vld [vmem:[#allocation2 + $0x1c] sm:$0xff]
    %v1121 = vld [vmem:[#allocation2 + $0x24] sm:$0xff]
    %v1122 = vld [vmem:[#allocation2 + $0x2c] sm:$0xff]
    %v1123 = vld [vmem:[#allocation2 + $0x34] sm:$0xf]
    %v1131 = vcombine.high %v1117, %v1117
    %v1132 = vcombine.high %v1118, %v1118
    %v1133 = vcombine.high %v1119, %v1119
    %v1134 = vcombine.high %v1120, %v1120
    %v1135 = vcombine.high %v1121, %v1121
    %v1136 = vcombine.high %v1122, %v1122
    %1137 = vrot.lane.b32.xlu0 %v1117, 64
    %v1138 = vpop.permute.xlu0 %1137
    %1139 = vrot.lane.b32.xlu0 %v1131, 64
    %v1140 = vpop.permute.xlu0 %1139
    %1141 = vrot.lane.b32.xlu0 %v1118, 64
    %v1142 = vpop.permute.xlu0 %1141
    %1143 = vrot.lane.b32.xlu0 %v1132, 64
    %v1144 = vpop.permute.xlu0 %1143
    %1145 = vrot.lane.b32.xlu0 %v1119, 64
    %v1146 = vpop.permute.xlu0 %1145
    %1147 = vrot.lane.b32.xlu0 %v1133, 64
    %v1148 = vpop.permute.xlu0 %1147
    %1149 = vrot.lane.b32.xlu0 %v1120, 64
    %v1150 = vpop.permute.xlu0 %1149
    %1151 = vrot.lane.b32.xlu0 %v1134, 64
    %v1152 = vpop.permute.xlu0 %1151
    %1153 = vrot.lane.b32.xlu0 %v1121, 64
    %v1154 = vpop.permute.xlu0 %1153
    %1155 = vrot.lane.b32.xlu0 %v1135, 64
    %v1156 = vpop.permute.xlu0 %1155
    %1157 = vrot.lane.b32.xlu0 %v1122, 64
    %v1158 = vpop.permute.xlu0 %1157
    %1159 = vrot.lane.b32.xlu0 %v1136, 64
    %v1160 = vpop.permute.xlu0 %1159
    %1161 = vrot.lane.b32.xlu0 %v1123, 64
    %v1162 = vpop.permute.xlu0 %1161
    %v1163 = vsel %vm543, %v1138, %v1140
    %v1164 = vsel %vm543, %v1140, %v1142
    %v1165 = vsel %vm543, %v1142, %v1144
    %v1166 = vsel %vm543, %v1144, %v1146
    %v1167 = vsel %vm543, %v1146, %v1148
    %v1168 = vsel %vm543, %v1148, %v1150
    %v1169 = vsel %vm543, %v1150, %v1152
    %v1170 = vsel %vm543, %v1152, %v1154
    %v1171 = vsel %vm543, %v1154, %v1156
    %v1172 = vsel %vm543, %v1156, %v1158
    %v1173 = vsel %vm543, %v1158, %v1160
    %v1174 = vsel %vm543, %v1160, %v1162
    %1187 = vst [vmem:[#allocation3 + $0x120] sm:$0xf] %v1163
    %1188 = vst [vmem:[#allocation3 + $0x128] sm:$0xf] %v1164
    %1189 = vst [vmem:[#allocation3 + $0x130] sm:$0xf] %v1165
    %1190 = vst [vmem:[#allocation3 + $0x138] sm:$0xf] %v1166
    %1191 = vst [vmem:[#allocation3 + $0x140] sm:$0xf] %v1167
    %1192 = vst [vmem:[#allocation3 + $0x148] sm:$0xf] %v1168
    %1193 = vst [vmem:[#allocation3 + $0x150] sm:$0xf] %v1169
    %1194 = vst [vmem:[#allocation3 + $0x158] sm:$0xf] %v1170
    %1195 = vst [vmem:[#allocation3 + $0x160] sm:$0xf] %v1171
    %1196 = vst [vmem:[#allocation3 + $0x168] sm:$0xf] %v1172
    %1197 = vst [vmem:[#allocation3 + $0x170] sm:$0xf] %v1173
    %1198 = vst [vmem:[#allocation3 + $0x178] sm:$0xf] %v1174
    %v1199 = vld [vmem:[#allocation2] sm:$0xff]
    %v1200 = vld [vmem:[#allocation2 + $0x8] sm:$0xff]
    %v1201 = vld [vmem:[#allocation2 + $0x10] sm:$0xff]
    %v1202 = vld [vmem:[#allocation2 + $0x18] sm:$0xff]
    %v1203 = vld [vmem:[#allocation2 + $0x20] sm:$0xff]
    %v1204 = vld [vmem:[#allocation2 + $0x28] sm:$0xff]
    %v1205 = vld [vmem:[#allocation2 + $0x30] sm:$0xf]
    %v1213 = vcombine.low %v1199, %v1199
    %v1214 = vcombine.low %v1200, %v1200
    %v1215 = vcombine.low %v1201, %v1201
    %v1216 = vcombine.low %v1202, %v1202
    %v1217 = vcombine.low %v1203, %v1203
    %v1218 = vcombine.low %v1204, %v1204
    %v1219 = vcombine.low %v1205, %v1205
    %1220 = vrot.lane.b32.xlu0 %v1213, 122
    %v1221 = vpop.permute.xlu0 %1220
    %1222 = vrot.lane.b32.xlu0 %v1199, 122
    %v1223 = vpop.permute.xlu0 %1222
    %1224 = vrot.lane.b32.xlu0 %v1214, 122
    %v1225 = vpop.permute.xlu0 %1224
    %1226 = vrot.lane.b32.xlu0 %v1200, 122
    %v1227 = vpop.permute.xlu0 %1226
    %1228 = vrot.lane.b32.xlu0 %v1215, 122
    %v1229 = vpop.permute.xlu0 %1228
    %1230 = vrot.lane.b32.xlu0 %v1201, 122
    %v1231 = vpop.permute.xlu0 %1230
    %1232 = vrot.lane.b32.xlu0 %v1216, 122
    %v1233 = vpop.permute.xlu0 %1232
    %1234 = vrot.lane.b32.xlu0 %v1202, 122
    %v1235 = vpop.permute.xlu0 %1234
    %1236 = vrot.lane.b32.xlu0 %v1217, 122
    %v1237 = vpop.permute.xlu0 %1236
    %1238 = vrot.lane.b32.xlu0 %v1203, 122
    %v1239 = vpop.permute.xlu0 %1238
    %1240 = vrot.lane.b32.xlu0 %v1218, 122
    %v1241 = vpop.permute.xlu0 %1240
    %1242 = vrot.lane.b32.xlu0 %v1204, 122
    %v1243 = vpop.permute.xlu0 %1242
    %1244 = vrot.lane.b32.xlu0 %v1219, 122
    %v1245 = vpop.permute.xlu0 %1244
    %vm1246 = vcmask 998400
    %v1247 = vsel %vm1246, %v1221, %v1223
    %v1248 = vsel %vm1246, %v1223, %v1225
    %v1249 = vsel %vm1246, %v1225, %v1227
    %v1250 = vsel %vm1246, %v1227, %v1229
    %v1251 = vsel %vm1246, %v1229, %v1231
    %v1252 = vsel %vm1246, %v1231, %v1233
    %v1253 = vsel %vm1246, %v1233, %v1235
    %v1254 = vsel %vm1246, %v1235, %v1237
    %v1255 = vsel %vm1246, %v1237, %v1239
    %v1256 = vsel %vm1246, %v1239, %v1241
    %v1257 = vsel %vm1246, %v1241, %v1243
    %v1258 = vsel %vm1246, %v1243, %v1245
    %1271 = vst [vmem:[#allocation3 + $0x240] sm:$0xf0] %v1247
    %1272 = vst [vmem:[#allocation3 + $0x248] sm:$0xf0] %v1248
    %1273 = vst [vmem:[#allocation3 + $0x250] sm:$0xf0] %v1249
    %1274 = vst [vmem:[#allocation3 + $0x258] sm:$0xf0] %v1250
    %1275 = vst [vmem:[#allocation3 + $0x260] sm:$0xf0] %v1251
    %1276 = vst [vmem:[#allocation3 + $0x268] sm:$0xf0] %v1252
    %1277 = vst [vmem:[#allocation3 + $0x270] sm:$0xf0] %v1253
    %1278 = vst [vmem:[#allocation3 + $0x278] sm:$0xf0] %v1254
    %1279 = vst [vmem:[#allocation3 + $0x280] sm:$0xf0] %v1255
    %1280 = vst [vmem:[#allocation3 + $0x288] sm:$0xf0] %v1256
    %1281 = vst [vmem:[#allocation3 + $0x290] sm:$0xf0] %v1257
    %1282 = vst [vmem:[#allocation3 + $0x298] sm:$0xf0] %v1258
    %v1283 = vld [vmem:[#allocation6] sm:$0xff]
    %v1284 = vld [vmem:[#allocation6 + $0x8] sm:$0xff]
    %v1285 = vld [vmem:[#allocation3] sm:$0xff]
    %v1286 = vld [vmem:[#allocation3 + $0x8] sm:$0xff]
    %v1287 = vld [vmem:[#allocation3 + $0x10] sm:$0xff]
    %v1288 = vld [vmem:[#allocation3 + $0x18] sm:$0xff]
    %v1289 = vld [vmem:[#allocation3 + $0x20] sm:$0xff]
    %v1290 = vld [vmem:[#allocation3 + $0x28] sm:$0xff]
    %v1291 = vld [vmem:[#allocation3 + $0x30] sm:$0xff]
    %v1292 = vld [vmem:[#allocation3 + $0x38] sm:$0xff]
    %v1293 = vld [vmem:[#allocation3 + $0x40] sm:$0xff]
    %v1294 = vld [vmem:[#allocation3 + $0x48] sm:$0xff]
    %v1295 = vld [vmem:[#allocation3 + $0x50] sm:$0xff]
    %v1296 = vld [vmem:[#allocation3 + $0x58] sm:$0xff]
    %v1297 = vld [vmem:[#allocation3 + $0x60] sm:$0xff]
    %v1298 = vld [vmem:[#allocation3 + $0x68] sm:$0xff]
    %v1299 = vld [vmem:[#allocation3 + $0x70] sm:$0xff]
    %v1300 = vld [vmem:[#allocation3 + $0x78] sm:$0xff]
    %v1301 = vld [vmem:[#allocation3 + $0x80] sm:$0xff]
    %v1302 = vld [vmem:[#allocation3 + $0x88] sm:$0xff]
    %v1303 = vld [vmem:[#allocation3 + $0x90] sm:$0xff]
    %v1304 = vld [vmem:[#allocation3 + $0x98] sm:$0xff]
    %v1305 = vld [vmem:[#allocation3 + $0xa0] sm:$0xff]
    %v1306 = vld [vmem:[#allocation3 + $0xa8] sm:$0xff]
    %v1307 = vld [vmem:[#allocation3 + $0xb0] sm:$0xff]
    %v1308 = vld [vmem:[#allocation3 + $0xb8] sm:$0xff]
    %v1309 = vld [vmem:[#allocation3 + $0xc0] sm:$0xff]
    %v1310 = vld [vmem:[#allocation3 + $0xc8] sm:$0xff]
    %v1311 = vld [vmem:[#allocation3 + $0xd0] sm:$0xff]
    %v1312 = vld [vmem:[#allocation3 + $0xd8] sm:$0xff]
    %v1313 = vld [vmem:[#allocation3 + $0xe0] sm:$0xff]
    %v1314 = vld [vmem:[#allocation3 + $0xe8] sm:$0xff]
    %v1315 = vld [vmem:[#allocation3 + $0xf0] sm:$0xff]
    %v1316 = vld [vmem:[#allocation3 + $0xf8] sm:$0xff]
    %v1317 = vld [vmem:[#allocation3 + $0x100] sm:$0xff]
    %v1318 = vld [vmem:[#allocation3 + $0x108] sm:$0xff]
    %v1319 = vld [vmem:[#allocation3 + $0x110] sm:$0xff]
    %v1320 = vld [vmem:[#allocation3 + $0x118] sm:$0xff]
    %v1321 = vld [vmem:[#allocation3 + $0x120] sm:$0xff]
    %v1322 = vld [vmem:[#allocation3 + $0x128] sm:$0xff]
    %v1323 = vld [vmem:[#allocation3 + $0x130] sm:$0xff]
    %v1324 = vld [vmem:[#allocation3 + $0x138] sm:$0xff]
    %v1325 = vld [vmem:[#allocation3 + $0x140] sm:$0xff]
    %v1326 = vld [vmem:[#allocation3 + $0x148] sm:$0xff]
    %v1327 = vld [vmem:[#allocation3 + $0x150] sm:$0xff]
    %v1328 = vld [vmem:[#allocation3 + $0x158] sm:$0xff]
    %v1329 = vld [vmem:[#allocation3 + $0x160] sm:$0xff]
    %v1330 = vld [vmem:[#allocation3 + $0x168] sm:$0xff]
    %v1331 = vld [vmem:[#allocation3 + $0x170] sm:$0xff]
    %v1332 = vld [vmem:[#allocation3 + $0x178] sm:$0xff]
    %v1333 = vld [vmem:[#allocation3 + $0x180] sm:$0xff]
    %v1334 = vld [vmem:[#allocation3 + $0x188] sm:$0xff]
    %v1335 = vld [vmem:[#allocation3 + $0x190] sm:$0xff]
    %v1336 = vld [vmem:[#allocation3 + $0x198] sm:$0xff]
    %v1337 = vld [vmem:[#allocation3 + $0x1a0] sm:$0xff]
    %v1338 = vld [vmem:[#allocation3 + $0x1a8] sm:$0xff]
    %v1339 = vld [vmem:[#allocation3 + $0x1b0] sm:$0xff]
    %v1340 = vld [vmem:[#allocation3 + $0x1b8] sm:$0xff]
    %v1341 = vld [vmem:[#allocation3 + $0x1c0] sm:$0xff]
    %v1342 = vld [vmem:[#allocation3 + $0x1c8] sm:$0xff]
    %v1343 = vld [vmem:[#allocation3 + $0x1d0] sm:$0xff]
    %v1344 = vld [vmem:[#allocation3 + $0x1d8] sm:$0xff]
    %v1345 = vld [vmem:[#allocation3 + $0x1e0] sm:$0xff]
    %v1346 = vld [vmem:[#allocation3 + $0x1e8] sm:$0xff]
    %v1347 = vld [vmem:[#allocation3 + $0x1f0] sm:$0xff]
    %v1348 = vld [vmem:[#allocation3 + $0x1f8] sm:$0xff]
    %v1349 = vld [vmem:[#allocation3 + $0x200] sm:$0xff]
    %v1350 = vld [vmem:[#allocation3 + $0x208] sm:$0xff]
    %v1351 = vld [vmem:[#allocation3 + $0x210] sm:$0xff]
    %v1352 = vld [vmem:[#allocation3 + $0x218] sm:$0xff]
    %v1353 = vld [vmem:[#allocation3 + $0x220] sm:$0xff]
    %v1354 = vld [vmem:[#allocation3 + $0x228] sm:$0xff]
    %v1355 = vld [vmem:[#allocation3 + $0x230] sm:$0xff]
    %v1356 = vld [vmem:[#allocation3 + $0x238] sm:$0xff]
    %v1357 = vld [vmem:[#allocation3 + $0x240] sm:$0xff]
    %v1358 = vld [vmem:[#allocation3 + $0x248] sm:$0xff]
    %v1359 = vld [vmem:[#allocation3 + $0x250] sm:$0xff]
    %v1360 = vld [vmem:[#allocation3 + $0x258] sm:$0xff]
    %v1361 = vld [vmem:[#allocation3 + $0x260] sm:$0xff]
    %v1362 = vld [vmem:[#allocation3 + $0x268] sm:$0xff]
    %v1363 = vld [vmem:[#allocation3 + $0x270] sm:$0xff]
    %v1364 = vld [vmem:[#allocation3 + $0x278] sm:$0xff]
    %v1365 = vld [vmem:[#allocation3 + $0x280] sm:$0xff]
    %v1366 = vld [vmem:[#allocation3 + $0x288] sm:$0xff]
    %v1367 = vld [vmem:[#allocation3 + $0x290] sm:$0xff]
    %v1368 = vld [vmem:[#allocation3 + $0x298] sm:$0xff]
    %v1369 = vld [vmem:[%s2] sm:$0xff]
    %v1370 = vld [vmem:[%s2 + $0x8] sm:$0xff]
    %1372 = vset.pattern.permute.xlu0 0
    %1373 = vperm.xlu0 %1372, %v1369
    %v1374 = vpop.permute.xlu0 %1373
    %1377 = vset.pattern.permute.xlu0 0
    %1378 = vperm.xlu0 %1377, %v1370
    %v1379 = vpop.permute.xlu0 %1378
    %vm1381 = vcmask 457728
    %v1383 = vsel %vm1381, %v1283, 0
    %v1386 = vsel %vm1381, %v1284, 0
    %1388 = vmatprep.subr.mxu0 0.0
    %1389 = vmatpush1.msra.mxu0 0.0
    %1390 = vmatprep.subr.mxu0 0.0
    %1391 = vmatpush1.msra.mxu0 0.0
    %1392 = vmatprep.subr.mxu0 0.0
    %1393 = vmatpush1.msra.mxu0 0.0
    %1394 = vmatprep.subr.mxu0 0.0
    %1395 = vmatpush1.msra.mxu0 0.0
    %1396 = vmatprep.subr.mxu0 0.0
    %1397 = vmatpush1.msra.mxu0 0.0
    %1398 = vmatprep.subr.mxu0 0.0
    %1399 = vmatpush1.msra.mxu0 0.0
    %1400 = vmatprep.subr.mxu0 0.0
    %1401 = vmatpush1.msra.mxu0 0.0
    %1402 = vmatprep.subr.mxu0 0.0
    %1403 = vmatpush1.msra.mxu0 0.0
    %1404 = vmatprep.subr.mxu0 0.0
    %1405 = vmatpush1.msra.mxu0 0.0
    %1406 = vmatprep.subr.mxu0 %v1358
    %1407 = vmatpush1.msra.mxu0 %v1357
    %1408 = vmatprep.subr.mxu0 %v1346
    %1409 = vmatpush1.msra.mxu0 %v1345
    %1410 = vmatprep.subr.mxu0 %v1334
    %1411 = vmatpush1.msra.mxu0 %v1333
    %1412 = vmatprep.subr.mxu0 %v1322
    %1413 = vmatpush1.msra.mxu0 %v1321
    %1414 = vmatprep.subr.mxu0 %v1310
    %1415 = vmatpush1.msra.mxu0 %v1309
    %1416 = vmatprep.subr.mxu0 %v1298
    %1417 = vmatpush1.msra.mxu0 %v1297
    %1418 = vmatprep.subr.mxu0 %v1286
    %1419 = vmatpush1.msra.mxu0 %v1285
    %1420 = vmatprep.subr.mxu0 0.0
    %1421 = vmatpush2.msra.mxu0 0.0
    %1422 = vmatprep.subr.mxu0 0.0
    %1423 = vmatpush2.msra.mxu0 0.0
    %1424 = vmatprep.subr.mxu0 0.0
    %1425 = vmatpush2.msra.mxu0 0.0
    %1426 = vmatprep.subr.mxu0 0.0
    %1427 = vmatpush2.msra.mxu0 0.0
    %1428 = vmatprep.subr.mxu0 0.0
    %1429 = vmatpush2.msra.mxu0 0.0
    %1430 = vmatprep.subr.mxu0 0.0
    %1431 = vmatpush2.msra.mxu0 0.0
    %1432 = vmatprep.subr.mxu0 0.0
    %1433 = vmatpush2.msra.mxu0 0.0
    %1434 = vmatprep.subr.mxu0 0.0
    %1435 = vmatpush2.msra.mxu0 0.0
    %1436 = vmatprep.subr.mxu0 0.0
    %1437 = vmatpush2.msra.mxu0 0.0
    %1438 = vmatprep.subr.mxu0 0.0
    %1439 = vmatpush2.msra.mxu0 0.0
    %1440 = vmatprep.subr.mxu0 0.0
    %1441 = vmatpush2.msra.mxu0 0.0
    %1442 = vmatprep.subr.mxu0 0.0
    %1443 = vmatpush2.msra.mxu0 0.0
    %1444 = vmatprep.subr.mxu0 0.0
    %1445 = vmatpush2.msra.mxu0 0.0
    %1446 = vmatprep.subr.mxu0 0.0
    %1447 = vmatpush2.msra.mxu0 0.0
    %1448 = vmatprep.subr.mxu0 0.0
    %1449 = vmatpush2.msra.mxu0 0.0
    %1450 = vmatprep.subr.mxu0 0.0
    %1451 = vmatpush2.msra.mxu0 0.0
    %1452 = vmatprep.mubr.f32.mxu0 0.0
    %1453 = vmatmul.mubr.f32.gmra.mxu0 %v1383
    %v1454 = vpop.f32.mrf.mxu0
    %v1455 = vadd.f32 %v1374, %v1454
    %v1456 = vpop.f32.mrf.mxu0
    %v1457 = vadd.f32 %v1374, %v1456
    %1458 = vmatprep.mubr.f32.mxu0 0.0
    %1459 = vmatmul.mubr.f32.gmra.mxu0 %v1386
    %v1460 = vpop.f32.mrf.mxu0
    %v1461 = vadd.f32 %v1379, %v1460
    %v1462 = vpop.f32.mrf.mxu0
    %v1463 = vadd.f32 %v1379, %v1462
    %1464 = vdwg.mxu0
    %1465 = vmatprep.subr.mxu0 0.0
    %1466 = vmatpush1.msra.mxu0 0.0
    %1467 = vmatprep.subr.mxu0 0.0
    %1468 = vmatpush1.msra.mxu0 0.0
    %1469 = vmatprep.subr.mxu0 0.0
    %1470 = vmatpush1.msra.mxu0 0.0
    %1471 = vmatprep.subr.mxu0 0.0
    %1472 = vmatpush1.msra.mxu0 0.0
    %1473 = vmatprep.subr.mxu0 0.0
    %1474 = vmatpush1.msra.mxu0 0.0
    %1475 = vmatprep.subr.mxu0 0.0
    %1476 = vmatpush1.msra.mxu0 0.0
    %1477 = vmatprep.subr.mxu0 0.0
    %1478 = vmatpush1.msra.mxu0 0.0
    %1479 = vmatprep.subr.mxu0 0.0
    %1480 = vmatpush1.msra.mxu0 0.0
    %1481 = vmatprep.subr.mxu0 0.0
    %1482 = vmatpush1.msra.mxu0 0.0
    %1483 = vmatprep.subr.mxu0 %v1360
    %1484 = vmatpush1.msra.mxu0 %v1359
    %1485 = vmatprep.subr.mxu0 %v1348
    %1486 = vmatpush1.msra.mxu0 %v1347
    %1487 = vmatprep.subr.mxu0 %v1336
    %1488 = vmatpush1.msra.mxu0 %v1335
    %1489 = vmatprep.subr.mxu0 %v1324
    %1490 = vmatpush1.msra.mxu0 %v1323
    %1491 = vmatprep.subr.mxu0 %v1312
    %1492 = vmatpush1.msra.mxu0 %v1311
    %1493 = vmatprep.subr.mxu0 %v1300
    %1494 = vmatpush1.msra.mxu0 %v1299
    %1495 = vmatprep.subr.mxu0 %v1288
    %1496 = vmatpush1.msra.mxu0 %v1287
    %1497 = vmatprep.subr.mxu0 0.0
    %1498 = vmatpush2.msra.mxu0 0.0
    %1499 = vmatprep.subr.mxu0 0.0
    %1500 = vmatpush2.msra.mxu0 0.0
    %1501 = vmatprep.subr.mxu0 0.0
    %1502 = vmatpush2.msra.mxu0 0.0
    %1503 = vmatprep.subr.mxu0 0.0
    %1504 = vmatpush2.msra.mxu0 0.0
    %1505 = vmatprep.subr.mxu0 0.0
    %1506 = vmatpush2.msra.mxu0 0.0
    %1507 = vmatprep.subr.mxu0 0.0
    %1508 = vmatpush2.msra.mxu0 0.0
    %1509 = vmatprep.subr.mxu0 0.0
    %1510 = vmatpush2.msra.mxu0 0.0
    %1511 = vmatprep.subr.mxu0 0.0
    %1512 = vmatpush2.msra.mxu0 0.0
    %1513 = vmatprep.subr.mxu0 0.0
    %1514 = vmatpush2.msra.mxu0 0.0
    %1515 = vmatprep.subr.mxu0 0.0
    %1516 = vmatpush2.msra.mxu0 0.0
    %1517 = vmatprep.subr.mxu0 0.0
    %1518 = vmatpush2.msra.mxu0 0.0
    %1519 = vmatprep.subr.mxu0 0.0
    %1520 = vmatpush2.msra.mxu0 0.0
    %1521 = vmatprep.subr.mxu0 0.0
    %1522 = vmatpush2.msra.mxu0 0.0
    %1523 = vmatprep.subr.mxu0 0.0
    %1524 = vmatpush2.msra.mxu0 0.0
    %1525 = vmatprep.subr.mxu0 0.0
    %1526 = vmatpush2.msra.mxu0 0.0
    %1527 = vmatprep.subr.mxu0 0.0
    %1528 = vmatpush2.msra.mxu0 0.0
    %1529 = vmatprep.mubr.f32.mxu0 0.0
    %1530 = vmatmul.mubr.f32.gmra.mxu0 %v1383
    %v1531 = vpop.f32.mrf.mxu0
    %v1532 = vadd.f32 %v1374, %v1531
    %v1533 = vpop.f32.mrf.mxu0
    %v1534 = vadd.f32 %v1374, %v1533
    %1535 = vmatprep.mubr.f32.mxu0 0.0
    %1536 = vmatmul.mubr.f32.gmra.mxu0 %v1386
    %v1537 = vpop.f32.mrf.mxu0
    %v1538 = vadd.f32 %v1379, %v1537
    %v1539 = vpop.f32.mrf.mxu0
    %v1540 = vadd.f32 %v1379, %v1539
    %1541 = vdwg.mxu0
    %1542 = vmatprep.subr.mxu0 0.0
    %1543 = vmatpush1.msra.mxu0 0.0
    %1544 = vmatprep.subr.mxu0 0.0
    %1545 = vmatpush1.msra.mxu0 0.0
    %1546 = vmatprep.subr.mxu0 0.0
    %1547 = vmatpush1.msra.mxu0 0.0
    %1548 = vmatprep.subr.mxu0 0.0
    %1549 = vmatpush1.msra.mxu0 0.0
    %1550 = vmatprep.subr.mxu0 0.0
    %1551 = vmatpush1.msra.mxu0 0.0
    %1552 = vmatprep.subr.mxu0 0.0
    %1553 = vmatpush1.msra.mxu0 0.0
    %1554 = vmatprep.subr.mxu0 0.0
    %1555 = vmatpush1.msra.mxu0 0.0
    %1556 = vmatprep.subr.mxu0 0.0
    %1557 = vmatpush1.msra.mxu0 0.0
    %1558 = vmatprep.subr.mxu0 0.0
    %1559 = vmatpush1.msra.mxu0 0.0
    %1560 = vmatprep.subr.mxu0 %v1362
    %1561 = vmatpush1.msra.mxu0 %v1361
    %1562 = vmatprep.subr.mxu0 %v1350
    %1563 = vmatpush1.msra.mxu0 %v1349
    %1564 = vmatprep.subr.mxu0 %v1338
    %1565 = vmatpush1.msra.mxu0 %v1337
    %1566 = vmatprep.subr.mxu0 %v1326
    %1567 = vmatpush1.msra.mxu0 %v1325
    %1568 = vmatprep.subr.mxu0 %v1314
    %1569 = vmatpush1.msra.mxu0 %v1313
    %1570 = vmatprep.subr.mxu0 %v1302
    %1571 = vmatpush1.msra.mxu0 %v1301
    %1572 = vmatprep.subr.mxu0 %v1290
    %1573 = vmatpush1.msra.mxu0 %v1289
    %1574 = vmatprep.subr.mxu0 0.0
    %1575 = vmatpush2.msra.mxu0 0.0
    %1576 = vmatprep.subr.mxu0 0.0
    %1577 = vmatpush2.msra.mxu0 0.0
    %1578 = vmatprep.subr.mxu0 0.0
    %1579 = vmatpush2.msra.mxu0 0.0
    %1580 = vmatprep.subr.mxu0 0.0
    %1581 = vmatpush2.msra.mxu0 0.0
    %1582 = vmatprep.subr.mxu0 0.0
    %1583 = vmatpush2.msra.mxu0 0.0
    %1584 = vmatprep.subr.mxu0 0.0
    %1585 = vmatpush2.msra.mxu0 0.0
    %1586 = vmatprep.subr.mxu0 0.0
    %1587 = vmatpush2.msra.mxu0 0.0
    %1588 = vmatprep.subr.mxu0 0.0
    %1589 = vmatpush2.msra.mxu0 0.0
    %1590 = vmatprep.subr.mxu0 0.0
    %1591 = vmatpush2.msra.mxu0 0.0
    %1592 = vmatprep.subr.mxu0 0.0
    %1593 = vmatpush2.msra.mxu0 0.0
    %1594 = vmatprep.subr.mxu0 0.0
    %1595 = vmatpush2.msra.mxu0 0.0
    %1596 = vmatprep.subr.mxu0 0.0
    %1597 = vmatpush2.msra.mxu0 0.0
    %1598 = vmatprep.subr.mxu0 0.0
    %1599 = vmatpush2.msra.mxu0 0.0
    %1600 = vmatprep.subr.mxu0 0.0
    %1601 = vmatpush2.msra.mxu0 0.0
    %1602 = vmatprep.subr.mxu0 0.0
    %1603 = vmatpush2.msra.mxu0 0.0
    %1604 = vmatprep.subr.mxu0 0.0
    %1605 = vmatpush2.msra.mxu0 0.0
    %1606 = vmatprep.mubr.f32.mxu0 0.0
    %1607 = vmatmul.mubr.f32.gmra.mxu0 %v1383
    %v1608 = vpop.f32.mrf.mxu0
    %v1609 = vadd.f32 %v1374, %v1608
    %v1610 = vpop.f32.mrf.mxu0
    %v1611 = vadd.f32 %v1374, %v1610
    %1612 = vmatprep.mubr.f32.mxu0 0.0
    %1613 = vmatmul.mubr.f32.gmra.mxu0 %v1386
    %v1614 = vpop.f32.mrf.mxu0
    %v1615 = vadd.f32 %v1379, %v1614
    %v1616 = vpop.f32.mrf.mxu0
    %v1617 = vadd.f32 %v1379, %v1616
    %1618 = vdwg.mxu0
    %1619 = vmatprep.subr.mxu0 0.0
    %1620 = vmatpush1.msra.mxu0 0.0
    %1621 = vmatprep.subr.mxu0 0.0
    %1622 = vmatpush1.msra.mxu0 0.0
    %1623 = vmatprep.subr.mxu0 0.0
    %1624 = vmatpush1.msra.mxu0 0.0
    %1625 = vmatprep.subr.mxu0 0.0
    %1626 = vmatpush1.msra.mxu0 0.0
    %1627 = vmatprep.subr.mxu0 0.0
    %1628 = vmatpush1.msra.mxu0 0.0
    %1629 = vmatprep.subr.mxu0 0.0
    %1630 = vmatpush1.msra.mxu0 0.0
    %1631 = vmatprep.subr.mxu0 0.0
    %1632 = vmatpush1.msra.mxu0 0.0
    %1633 = vmatprep.subr.mxu0 0.0
    %1634 = vmatpush1.msra.mxu0 0.0
    %1635 = vmatprep.subr.mxu0 0.0
    %1636 = vmatpush1.msra.mxu0 0.0
    %1637 = vmatprep.subr.mxu0 %v1364
    %1638 = vmatpush1.msra.mxu0 %v1363
    %1639 = vmatprep.subr.mxu0 %v1352
    %1640 = vmatpush1.msra.mxu0 %v1351
    %1641 = vmatprep.subr.mxu0 %v1340
    %1642 = vmatpush1.msra.mxu0 %v1339
    %1643 = vmatprep.subr.mxu0 %v1328
    %1644 = vmatpush1.msra.mxu0 %v1327
    %1645 = vmatprep.subr.mxu0 %v1316
    %1646 = vmatpush1.msra.mxu0 %v1315
    %1647 = vmatprep.subr.mxu0 %v1304
    %1648 = vmatpush1.msra.mxu0 %v1303
    %1649 = vmatprep.subr.mxu0 %v1292
    %1650 = vmatpush1.msra.mxu0 %v1291
    %1651 = vmatprep.subr.mxu0 0.0
    %1652 = vmatpush2.msra.mxu0 0.0
    %1653 = vmatprep.subr.mxu0 0.0
    %1654 = vmatpush2.msra.mxu0 0.0
    %1655 = vmatprep.subr.mxu0 0.0
    %1656 = vmatpush2.msra.mxu0 0.0
    %1657 = vmatprep.subr.mxu0 0.0
    %1658 = vmatpush2.msra.mxu0 0.0
    %1659 = vmatprep.subr.mxu0 0.0
    %1660 = vmatpush2.msra.mxu0 0.0
    %1661 = vmatprep.subr.mxu0 0.0
    %1662 = vmatpush2.msra.mxu0 0.0
    %1663 = vmatprep.subr.mxu0 0.0
    %1664 = vmatpush2.msra.mxu0 0.0
    %1665 = vmatprep.subr.mxu0 0.0
    %1666 = vmatpush2.msra.mxu0 0.0
    %1667 = vmatprep.subr.mxu0 0.0
    %1668 = vmatpush2.msra.mxu0 0.0
    %1669 = vmatprep.subr.mxu0 0.0
    %1670 = vmatpush2.msra.mxu0 0.0
    %1671 = vmatprep.subr.mxu0 0.0
    %1672 = vmatpush2.msra.mxu0 0.0
    %1673 = vmatprep.subr.mxu0 0.0
    %1674 = vmatpush2.msra.mxu0 0.0
    %1675 = vmatprep.subr.mxu0 0.0
    %1676 = vmatpush2.msra.mxu0 0.0
    %1677 = vmatprep.subr.mxu0 0.0
    %1678 = vmatpush2.msra.mxu0 0.0
    %1679 = vmatprep.subr.mxu0 0.0
    %1680 = vmatpush2.msra.mxu0 0.0
    %1681 = vmatprep.subr.mxu0 0.0
    %1682 = vmatpush2.msra.mxu0 0.0
    %1683 = vmatprep.mubr.f32.mxu0 0.0
    %1684 = vmatmul.mubr.f32.gmra.mxu0 %v1383
    %v1685 = vpop.f32.mrf.mxu0
    %v1686 = vadd.f32 %v1374, %v1685
    %v1687 = vpop.f32.mrf.mxu0
    %v1688 = vadd.f32 %v1374, %v1687
    %1689 = vmatprep.mubr.f32.mxu0 0.0
    %1690 = vmatmul.mubr.f32.gmra.mxu0 %v1386
    %v1691 = vpop.f32.mrf.mxu0
    %v1692 = vadd.f32 %v1379, %v1691
    %v1693 = vpop.f32.mrf.mxu0
    %v1694 = vadd.f32 %v1379, %v1693
    %1695 = vdwg.mxu0
    %1696 = vmatprep.subr.mxu0 0.0
    %1697 = vmatpush1.msra.mxu0 0.0
    %1698 = vmatprep.subr.mxu0 0.0
    %1699 = vmatpush1.msra.mxu0 0.0
    %1700 = vmatprep.subr.mxu0 0.0
    %1701 = vmatpush1.msra.mxu0 0.0
    %1702 = vmatprep.subr.mxu0 0.0
    %1703 = vmatpush1.msra.mxu0 0.0
    %1704 = vmatprep.subr.mxu0 0.0
    %1705 = vmatpush1.msra.mxu0 0.0
    %1706 = vmatprep.subr.mxu0 0.0
    %1707 = vmatpush1.msra.mxu0 0.0
    %1708 = vmatprep.subr.mxu0 0.0
    %1709 = vmatpush1.msra.mxu0 0.0
    %1710 = vmatprep.subr.mxu0 0.0
    %1711 = vmatpush1.msra.mxu0 0.0
    %1712 = vmatprep.subr.mxu0 0.0
    %1713 = vmatpush1.msra.mxu0 0.0
    %1714 = vmatprep.subr.mxu0 %v1366
    %1715 = vmatpush1.msra.mxu0 %v1365
    %1716 = vmatprep.subr.mxu0 %v1354
    %1717 = vmatpush1.msra.mxu0 %v1353
    %1718 = vmatprep.subr.mxu0 %v1342
    %1719 = vmatpush1.msra.mxu0 %v1341
    %1720 = vmatprep.subr.mxu0 %v1330
    %1721 = vmatpush1.msra.mxu0 %v1329
    %1722 = vmatprep.subr.mxu0 %v1318
    %1723 = vmatpush1.msra.mxu0 %v1317
    %1724 = vmatprep.subr.mxu0 %v1306
    %1725 = vmatpush1.msra.mxu0 %v1305
    %1726 = vmatprep.subr.mxu0 %v1294
    %1727 = vmatpush1.msra.mxu0 %v1293
    %1728 = vmatprep.subr.mxu0 0.0
    %1729 = vmatpush2.msra.mxu0 0.0
    %1730 = vmatprep.subr.mxu0 0.0
    %1731 = vmatpush2.msra.mxu0 0.0
    %1732 = vmatprep.subr.mxu0 0.0
    %1733 = vmatpush2.msra.mxu0 0.0
    %1734 = vmatprep.subr.mxu0 0.0
    %1735 = vmatpush2.msra.mxu0 0.0
    %1736 = vmatprep.subr.mxu0 0.0
    %1737 = vmatpush2.msra.mxu0 0.0
    %1738 = vmatprep.subr.mxu0 0.0
    %1739 = vmatpush2.msra.mxu0 0.0
    %1740 = vmatprep.subr.mxu0 0.0
    %1741 = vmatpush2.msra.mxu0 0.0
    %1742 = vmatprep.subr.mxu0 0.0
    %1743 = vmatpush2.msra.mxu0 0.0
    %1744 = vmatprep.subr.mxu0 0.0
    %1745 = vmatpush2.msra.mxu0 0.0
    %1746 = vmatprep.subr.mxu0 0.0
    %1747 = vmatpush2.msra.mxu0 0.0
    %1748 = vmatprep.subr.mxu0 0.0
    %1749 = vmatpush2.msra.mxu0 0.0
    %1750 = vmatprep.subr.mxu0 0.0
    %1751 = vmatpush2.msra.mxu0 0.0
    %1752 = vmatprep.subr.mxu0 0.0
    %1753 = vmatpush2.msra.mxu0 0.0
    %1754 = vmatprep.subr.mxu0 0.0
    %1755 = vmatpush2.msra.mxu0 0.0
    %1756 = vmatprep.subr.mxu0 0.0
    %1757 = vmatpush2.msra.mxu0 0.0
    %1758 = vmatprep.subr.mxu0 0.0
    %1759 = vmatpush2.msra.mxu0 0.0
    %1760 = vmatprep.mubr.f32.mxu0 0.0
    %1761 = vmatmul.mubr.f32.gmra.mxu0 %v1383
    %v1762 = vpop.f32.mrf.mxu0
    %v1763 = vadd.f32 %v1374, %v1762
    %v1764 = vpop.f32.mrf.mxu0
    %v1765 = vadd.f32 %v1374, %v1764
    %1766 = vmatprep.mubr.f32.mxu0 0.0
    %1767 = vmatmul.mubr.f32.gmra.mxu0 %v1386
    %v1768 = vpop.f32.mrf.mxu0
    %v1769 = vadd.f32 %v1379, %v1768
    %v1770 = vpop.f32.mrf.mxu0
    %v1771 = vadd.f32 %v1379, %v1770
    %1772 = vdwg.mxu0
    %1773 = vmatprep.subr.mxu0 0.0
    %1774 = vmatpush1.msra.mxu0 0.0
    %1775 = vmatprep.subr.mxu0 0.0
    %1776 = vmatpush1.msra.mxu0 0.0
    %1777 = vmatprep.subr.mxu0 0.0
    %1778 = vmatpush1.msra.mxu0 0.0
    %1779 = vmatprep.subr.mxu0 0.0
    %1780 = vmatpush1.msra.mxu0 0.0
    %1781 = vmatprep.subr.mxu0 0.0
    %1782 = vmatpush1.msra.mxu0 0.0
    %1783 = vmatprep.subr.mxu0 0.0
    %1784 = vmatpush1.msra.mxu0 0.0
    %1785 = vmatprep.subr.mxu0 0.0
    %1786 = vmatpush1.msra.mxu0 0.0
    %1787 = vmatprep.subr.mxu0 0.0
    %1788 = vmatpush1.msra.mxu0 0.0
    %1789 = vmatprep.subr.mxu0 0.0
    %1790 = vmatpush1.msra.mxu0 0.0
    %1791 = vmatprep.subr.mxu0 %v1368
    %1792 = vmatpush1.msra.mxu0 %v1367
    %1793 = vmatprep.subr.mxu0 %v1356
    %1794 = vmatpush1.msra.mxu0 %v1355
    %1795 = vmatprep.subr.mxu0 %v1344
    %1796 = vmatpush1.msra.mxu0 %v1343
    %1797 = vmatprep.subr.mxu0 %v1332
    %1798 = vmatpush1.msra.mxu0 %v1331
    %1799 = vmatprep.subr.mxu0 %v1320
    %1800 = vmatpush1.msra.mxu0 %v1319
    %1801 = vmatprep.subr.mxu0 %v1308
    %1802 = vmatpush1.msra.mxu0 %v1307
    %1803 = vmatprep.subr.mxu0 %v1296
    %1804 = vmatpush1.msra.mxu0 %v1295
    %1805 = vmatprep.subr.mxu0 0.0
    %1806 = vmatpush2.msra.mxu0 0.0
    %1807 = vmatprep.subr.mxu0 0.0
    %1808 = vmatpush2.msra.mxu0 0.0
    %1809 = vmatprep.subr.mxu0 0.0
    %1810 = vmatpush2.msra.mxu0 0.0
    %1811 = vmatprep.subr.mxu0 0.0
    %1812 = vmatpush2.msra.mxu0 0.0
    %1813 = vmatprep.subr.mxu0 0.0
    %1814 = vmatpush2.msra.mxu0 0.0
    %1815 = vmatprep.subr.mxu0 0.0
    %1816 = vmatpush2.msra.mxu0 0.0
    %1817 = vmatprep.subr.mxu0 0.0
    %1818 = vmatpush2.msra.mxu0 0.0
    %1819 = vmatprep.subr.mxu0 0.0
    %1820 = vmatpush2.msra.mxu0 0.0
    %1821 = vmatprep.subr.mxu0 0.0
    %1822 = vmatpush2.msra.mxu0 0.0
    %1823 = vmatprep.subr.mxu0 0.0
    %1824 = vmatpush2.msra.mxu0 0.0
    %1825 = vmatprep.subr.mxu0 0.0
    %1826 = vmatpush2.msra.mxu0 0.0
    %1827 = vmatprep.subr.mxu0 0.0
    %1828 = vmatpush2.msra.mxu0 0.0
    %1829 = vmatprep.subr.mxu0 0.0
    %1830 = vmatpush2.msra.mxu0 0.0
    %1831 = vmatprep.subr.mxu0 0.0
    %1832 = vmatpush2.msra.mxu0 0.0
    %1833 = vmatprep.subr.mxu0 0.0
    %1834 = vmatpush2.msra.mxu0 0.0
    %1835 = vmatprep.subr.mxu0 0.0
    %1836 = vmatpush2.msra.mxu0 0.0
    %1837 = vmatprep.mubr.f32.mxu0 0.0
    %1838 = vmatmul.mubr.f32.gmra.mxu0 %v1383
    %v1839 = vpop.f32.mrf.mxu0
    %v1840 = vadd.f32 %v1374, %v1839
    %v1841 = vpop.f32.mrf.mxu0
    %v1842 = vadd.f32 %v1374, %v1841
    %1843 = vmatprep.mubr.f32.mxu0 0.0
    %1844 = vmatmul.mubr.f32.gmra.mxu0 %v1386
    %v1845 = vpop.f32.mrf.mxu0
    %v1846 = vadd.f32 %v1379, %v1845
    %v1847 = vpop.f32.mrf.mxu0
    %v1848 = vadd.f32 %v1379, %v1847
    %1849 = vdwg.mxu0
    %v1850 = vlaneseq
    %v1851 = vand.u32 %v1850, 127
    %v1852 = vadd.s32 %v1851, 128
    %v1853 = vadd.s32 %v1851, 256
    %v1854 = vadd.s32 %v1851, 384
    %v1855 = vadd.s32 %v1851, 512
    %v1856 = vadd.s32 %v1851, 640
    %v1857 = vadd.s32 %v1851, 768
    %v1858 = vadd.s32 %v1851, 896
    %v1859 = vadd.s32 %v1851, 1024
    %v1860 = vadd.s32 %v1851, 1152
    %v1861 = vadd.s32 %v1851, 1280
    %v1862 = vadd.s32 %v1851, 1408
    %v1863 = vand.u32 %v1851, 31
    %v1864 = vand.u32 %v1852, 31
    %v1865 = vand.u32 %v1853, 31
    %v1866 = vand.u32 %v1854, 31
    %v1867 = vand.u32 %v1855, 31
    %v1868 = vand.u32 %v1856, 31
    %v1869 = vand.u32 %v1857, 31
    %v1870 = vand.u32 %v1858, 31
    %v1871 = vand.u32 %v1859, 31
    %v1872 = vand.u32 %v1860, 31
    %v1873 = vand.u32 %v1861, 31
    %v1874 = vand.u32 %v1862, 31
    %v1875 = vshra.s32 %v1851, 5
    %v1876 = vshra.s32 %v1852, 5
    %v1877 = vshra.s32 %v1853, 5
    %v1878 = vshra.s32 %v1854, 5
    %v1879 = vshra.s32 %v1855, 5
    %v1880 = vshra.s32 %v1856, 5
    %v1881 = vshra.s32 %v1857, 5
    %v1882 = vshra.s32 %v1858, 5
    %v1883 = vshra.s32 %v1859, 5
    %v1884 = vshra.s32 %v1860, 5
    %v1885 = vshra.s32 %v1861, 5
    %v1886 = vshra.s32 %v1862, 5
    %vm1887 = vcmp.ge.s32.totalorder %v1875, 24
    %vm1888 = vcmp.ge.s32.totalorder %v1876, 24
    %vm1889 = vcmp.ge.s32.totalorder %v1877, 24
    %vm1890 = vcmp.ge.s32.totalorder %v1878, 24
    %vm1891 = vcmp.ge.s32.totalorder %v1879, 24
    %vm1892 = vcmp.ge.s32.totalorder %v1880, 24
    %vm1893 = vcmp.ge.s32.totalorder %v1881, 24
    %vm1894 = vcmp.ge.s32.totalorder %v1882, 24
    %vm1895 = vcmp.ge.s32.totalorder %v1883, 24
    %vm1896 = vcmp.ge.s32.totalorder %v1884, 24
    %vm1897 = vcmp.ge.s32.totalorder %v1885, 24
    %vm1898 = vcmp.ge.s32.totalorder %v1886, 24
    %v1899 = vsub.s32 %v1875, 24
    %v1900 = vsub.s32 %v1876, 24
    %v1901 = vsub.s32 %v1877, 24
    %v1902 = vsub.s32 %v1878, 24
    %v1903 = vsub.s32 %v1879, 24
    %v1904 = vsub.s32 %v1880, 24
    %v1905 = vsub.s32 %v1881, 24
    %v1906 = vsub.s32 %v1882, 24
    %v1907 = vsub.s32 %v1883, 24
    %v1908 = vsub.s32 %v1884, 24
    %v1909 = vsub.s32 %v1885, 24
    %v1910 = vsub.s32 %v1886, 24
    %v1911 = vsel %vm1887, %v1899, %v1875
    %v1912 = vsel %vm1888, %v1900, %v1876
    %v1913 = vsel %vm1889, %v1901, %v1877
    %v1914 = vsel %vm1890, %v1902, %v1878
    %v1915 = vsel %vm1891, %v1903, %v1879
    %v1916 = vsel %vm1892, %v1904, %v1880
    %v1917 = vsel %vm1893, %v1905, %v1881
    %v1918 = vsel %vm1894, %v1906, %v1882
    %v1919 = vsel %vm1895, %v1907, %v1883
    %v1920 = vsel %vm1896, %v1908, %v1884
    %v1921 = vsel %vm1897, %v1909, %v1885
    %v1922 = vsel %vm1898, %v1910, %v1886
    %vm1923 = vcmp.lt.s32.totalorder %v1911, 16
    %vm1924 = vcmp.lt.s32.totalorder %v1912, 16
    %vm1925 = vcmp.lt.s32.totalorder %v1913, 16
    %vm1926 = vcmp.lt.s32.totalorder %v1914, 16
    %vm1927 = vcmp.lt.s32.totalorder %v1915, 16
    %vm1928 = vcmp.lt.s32.totalorder %v1916, 16
    %vm1929 = vcmp.lt.s32.totalorder %v1917, 16
    %vm1930 = vcmp.lt.s32.totalorder %v1918, 16
    %vm1931 = vcmp.lt.s32.totalorder %v1919, 16
    %vm1932 = vcmp.lt.s32.totalorder %v1920, 16
    %vm1933 = vcmp.lt.s32.totalorder %v1921, 16
    %vm1934 = vcmp.lt.s32.totalorder %v1922, 16
    %vm1935 = vcmp.ge.s32.totalorder %v1863, 3
    %vm1936 = vcmp.ge.s32.totalorder %v1864, 3
    %vm1937 = vcmp.ge.s32.totalorder %v1865, 3
    %vm1938 = vcmp.ge.s32.totalorder %v1866, 3
    %vm1939 = vcmp.ge.s32.totalorder %v1867, 3
    %vm1940 = vcmp.ge.s32.totalorder %v1868, 3
    %vm1941 = vcmp.ge.s32.totalorder %v1869, 3
    %vm1942 = vcmp.ge.s32.totalorder %v1870, 3
    %vm1943 = vcmp.ge.s32.totalorder %v1871, 3
    %vm1944 = vcmp.ge.s32.totalorder %v1872, 3
    %vm1945 = vcmp.ge.s32.totalorder %v1873, 3
    %vm1946 = vcmp.ge.s32.totalorder %v1874, 3
    %vm1947 = vmand %vm1923, %vm1935
    %vm1948 = vmand %vm1924, %vm1936
    %vm1949 = vmand %vm1925, %vm1937
    %vm1950 = vmand %vm1926, %vm1938
    %vm1951 = vmand %vm1927, %vm1939
    %vm1952 = vmand %vm1928, %vm1940
    %vm1953 = vmand %vm1929, %vm1941
    %vm1954 = vmand %vm1930, %vm1942
    %vm1955 = vmand %vm1931, %vm1943
    %vm1956 = vmand %vm1932, %vm1944
    %vm1957 = vmand %vm1933, %vm1945
    %vm1958 = vmand %vm1934, %vm1946
    %vm1959 = vcmp.lt.s32.totalorder %v1863, 19
    %vm1960 = vcmp.lt.s32.totalorder %v1864, 19
    %vm1961 = vcmp.lt.s32.totalorder %v1865, 19
    %vm1962 = vcmp.lt.s32.totalorder %v1866, 19
    %vm1963 = vcmp.lt.s32.totalorder %v1867, 19
    %vm1964 = vcmp.lt.s32.totalorder %v1868, 19
    %vm1965 = vcmp.lt.s32.totalorder %v1869, 19
    %vm1966 = vcmp.lt.s32.totalorder %v1870, 19
    %vm1967 = vcmp.lt.s32.totalorder %v1871, 19
    %vm1968 = vcmp.lt.s32.totalorder %v1872, 19
    %vm1969 = vcmp.lt.s32.totalorder %v1873, 19
    %vm1970 = vcmp.lt.s32.totalorder %v1874, 19
    %vm1971 = vmand %vm1947, %vm1959
    %vm1972 = vmand %vm1948, %vm1960
    %vm1973 = vmand %vm1949, %vm1961
    %vm1974 = vmand %vm1950, %vm1962
    %vm1975 = vmand %vm1951, %vm1963
    %vm1976 = vmand %vm1952, %vm1964
    %vm1977 = vmand %vm1953, %vm1965
    %vm1978 = vmand %vm1954, %vm1966
    %vm1979 = vmand %vm1955, %vm1967
    %vm1980 = vmand %vm1956, %vm1968
    %vm1981 = vmand %vm1957, %vm1969
    %vm1982 = vmand %vm1958, %vm1970
    %v1983 = vsel %vm1971, 1, 0
    %v1984 = vsel %vm1972, 1, 0
    %v1985 = vsel %vm1973, 1, 0
    %v1986 = vsel %vm1974, 1, 0
    %v1987 = vsel %vm1975, 1, 0
    %v1988 = vsel %vm1976, 1, 0
    %v1989 = vsel %vm1977, 1, 0
    %v1990 = vsel %vm1978, 1, 0
    %v1991 = vsel %vm1979, 1, 0
    %v1992 = vsel %vm1980, 1, 0
    %v1993 = vsel %vm1981, 1, 0
    %v1994 = vsel %vm1982, 1, 0
    %v1995 = vcvt.s32.f32 %v1983
    %v1996 = vcvt.s32.f32 %v1984
    %v1997 = vcvt.s32.f32 %v1985
    %v1998 = vcvt.s32.f32 %v1986
    %v1999 = vcvt.s32.f32 %v1987
    %v2000 = vcvt.s32.f32 %v1988
    %v2001 = vcvt.s32.f32 %v1989
    %v2002 = vcvt.s32.f32 %v1990
    %v2003 = vcvt.s32.f32 %v1991
    %v2004 = vcvt.s32.f32 %v1992
    %v2005 = vcvt.s32.f32 %v1993
    %v2006 = vcvt.s32.f32 %v1994
    %vm2007 = vcmp.lt.s32.totalorder %v1911, 22
    %vm2008 = vcmp.lt.s32.totalorder %v1912, 22
    %vm2009 = vcmp.lt.s32.totalorder %v1913, 22
    %vm2010 = vcmp.lt.s32.totalorder %v1914, 22
    %vm2011 = vcmp.lt.s32.totalorder %v1915, 22
    %vm2012 = vcmp.lt.s32.totalorder %v1916, 22
    %vm2013 = vcmp.lt.s32.totalorder %v1917, 22
    %vm2014 = vcmp.lt.s32.totalorder %v1918, 22
    %vm2015 = vcmp.lt.s32.totalorder %v1919, 22
    %vm2016 = vcmp.lt.s32.totalorder %v1920, 22
    %vm2017 = vcmp.lt.s32.totalorder %v1921, 22
    %vm2018 = vcmp.lt.s32.totalorder %v1922, 22
    %vm2019 = vmand %vm2007, %vm1935
    %vm2020 = vmand %vm2008, %vm1936
    %vm2021 = vmand %vm2009, %vm1937
    %vm2022 = vmand %vm2010, %vm1938
    %vm2023 = vmand %vm2011, %vm1939
    %vm2024 = vmand %vm2012, %vm1940
    %vm2025 = vmand %vm2013, %vm1941
    %vm2026 = vmand %vm2014, %vm1942
    %vm2027 = vmand %vm2015, %vm1943
    %vm2028 = vmand %vm2016, %vm1944
    %vm2029 = vmand %vm2017, %vm1945
    %vm2030 = vmand %vm2018, %vm1946
    %vm2031 = vcmp.lt.s32.totalorder %v1863, 13
    %vm2032 = vcmp.lt.s32.totalorder %v1864, 13
    %vm2033 = vcmp.lt.s32.totalorder %v1865, 13
    %vm2034 = vcmp.lt.s32.totalorder %v1866, 13
    %vm2035 = vcmp.lt.s32.totalorder %v1867, 13
    %vm2036 = vcmp.lt.s32.totalorder %v1868, 13
    %vm2037 = vcmp.lt.s32.totalorder %v1869, 13
    %vm2038 = vcmp.lt.s32.totalorder %v1870, 13
    %vm2039 = vcmp.lt.s32.totalorder %v1871, 13
    %vm2040 = vcmp.lt.s32.totalorder %v1872, 13
    %vm2041 = vcmp.lt.s32.totalorder %v1873, 13
    %vm2042 = vcmp.lt.s32.totalorder %v1874, 13
    %vm2043 = vmand %vm2019, %vm2031
    %vm2044 = vmand %vm2020, %vm2032
    %vm2045 = vmand %vm2021, %vm2033
    %vm2046 = vmand %vm2022, %vm2034
    %vm2047 = vmand %vm2023, %vm2035
    %vm2048 = vmand %vm2024, %vm2036
    %vm2049 = vmand %vm2025, %vm2037
    %vm2050 = vmand %vm2026, %vm2038
    %vm2051 = vmand %vm2027, %vm2039
    %vm2052 = vmand %vm2028, %vm2040
    %vm2053 = vmand %vm2029, %vm2041
    %vm2054 = vmand %vm2030, %vm2042
    %v2055 = vsel %vm2043, 1, 0
    %v2056 = vsel %vm2044, 1, 0
    %v2057 = vsel %vm2045, 1, 0
    %v2058 = vsel %vm2046, 1, 0
    %v2059 = vsel %vm2047, 1, 0
    %v2060 = vsel %vm2048, 1, 0
    %v2061 = vsel %vm2049, 1, 0
    %v2062 = vsel %vm2050, 1, 0
    %v2063 = vsel %vm2051, 1, 0
    %v2064 = vsel %vm2052, 1, 0
    %v2065 = vsel %vm2053, 1, 0
    %v2066 = vsel %vm2054, 1, 0
    %v2067 = vcvt.s32.f32 %v2055
    %v2068 = vcvt.s32.f32 %v2056
    %v2069 = vcvt.s32.f32 %v2057
    %v2070 = vcvt.s32.f32 %v2058
    %v2071 = vcvt.s32.f32 %v2059
    %v2072 = vcvt.s32.f32 %v2060
    %v2073 = vcvt.s32.f32 %v2061
    %v2074 = vcvt.s32.f32 %v2062
    %v2075 = vcvt.s32.f32 %v2063
    %v2076 = vcvt.s32.f32 %v2064
    %v2077 = vcvt.s32.f32 %v2065
    %v2078 = vcvt.s32.f32 %v2066
    %v2079 = vmul.f32 %v1455, %v1995
    %v2080 = vmul.f32 %v1457, %v1996
    %v2081 = vmul.f32 %v1532, %v1997
    %v2082 = vmul.f32 %v1534, %v1998
    %v2083 = vmul.f32 %v1609, %v1999
    %v2084 = vmul.f32 %v1611, %v2000
    %v2085 = vmul.f32 %v1686, %v2001
    %v2086 = vmul.f32 %v1688, %v2002
    %v2087 = vmul.f32 %v1763, %v2003
    %v2088 = vmul.f32 %v1765, %v2004
    %v2089 = vmul.f32 %v1840, %v2005
    %v2090 = vmul.f32 %v1842, %v2006
    %2091 = vst [vmem:[#allocation4] sm:$0xff] %v2079
    %2092 = vst [vmem:[#allocation4 + $0x8] sm:$0xff] %v2080
    %2093 = vst [vmem:[#allocation4 + $0x10] sm:$0xff] %v2081
    %2094 = vst [vmem:[#allocation4 + $0x18] sm:$0xff] %v2082
    %2095 = vst [vmem:[#allocation4 + $0x20] sm:$0xff] %v2083
    %2096 = vst [vmem:[#allocation4 + $0x28] sm:$0xff] %v2084
    %2097 = vst [vmem:[#allocation4 + $0x30] sm:$0xff] %v2085
    %2098 = vst [vmem:[#allocation4 + $0x38] sm:$0xff] %v2086
    %2099 = vst [vmem:[#allocation4 + $0x40] sm:$0xff] %v2087
    %2100 = vst [vmem:[#allocation4 + $0x48] sm:$0xff] %v2088
    %2101 = vst [vmem:[#allocation4 + $0x50] sm:$0xff] %v2089
    %2102 = vst [vmem:[#allocation4 + $0x58] sm:$0xff] %v2090
    %v2103 = vmul.f32 %v1461, %v2067
    %v2104 = vmul.f32 %v1463, %v2068
    %v2105 = vmul.f32 %v1538, %v2069
    %v2106 = vmul.f32 %v1540, %v2070
    %v2107 = vmul.f32 %v1615, %v2071
    %v2108 = vmul.f32 %v1617, %v2072
    %v2109 = vmul.f32 %v1692, %v2073
    %v2110 = vmul.f32 %v1694, %v2074
    %v2111 = vmul.f32 %v1769, %v2075
    %v2112 = vmul.f32 %v1771, %v2076
    %v2113 = vmul.f32 %v1846, %v2077
    %v2114 = vmul.f32 %v1848, %v2078
    %2115 = vst [vmem:[#allocation4 + $0x70] sm:$0xff] %v2103
    %2116 = vst [vmem:[#allocation4 + $0x78] sm:$0xff] %v2104
    %2117 = vst [vmem:[#allocation4 + $0x80] sm:$0xff] %v2105
    %2118 = vst [vmem:[#allocation4 + $0x88] sm:$0xff] %v2106
    %2119 = vst [vmem:[#allocation4 + $0x90] sm:$0xff] %v2107
    %2120 = vst [vmem:[#allocation4 + $0x98] sm:$0xff] %v2108
    %2121 = vst [vmem:[#allocation4 + $0xa0] sm:$0xff] %v2109
    %2122 = vst [vmem:[#allocation4 + $0xa8] sm:$0xff] %v2110
    %2123 = vst [vmem:[#allocation4 + $0xb0] sm:$0xff] %v2111
    %2124 = vst [vmem:[#allocation4 + $0xb8] sm:$0xff] %v2112
    %2125 = vst [vmem:[#allocation4 + $0xc0] sm:$0xff] %v2113
    %2126 = vst [vmem:[#allocation4 + $0xc8] sm:$0xff] %v2114
    %v2127 = vld [vmem:[#allocation4] sm:$0xff]
    %v2128 = vld [vmem:[#allocation4 + $0x8] sm:$0xff]
    %v2129 = vld [vmem:[#allocation4 + $0x10] sm:$0xff]
    %v2130 = vld [vmem:[#allocation4 + $0x18] sm:$0xff]
    %v2131 = vld [vmem:[#allocation4 + $0x20] sm:$0xff]
    %v2132 = vld [vmem:[#allocation4 + $0x28] sm:$0xff]
    %v2133 = vld [vmem:[#allocation4 + $0x30] sm:$0xff]
    %v2134 = vld [vmem:[#allocation4 + $0x38] sm:$0xff]
    %v2135 = vld [vmem:[#allocation4 + $0x40] sm:$0xff]
    %v2136 = vld [vmem:[#allocation4 + $0x48] sm:$0xff]
    %v2137 = vld [vmem:[#allocation4 + $0x50] sm:$0xff]
    %v2138 = vld [vmem:[#allocation4 + $0x58] sm:$0xff]
    %2139 = vst [vmem:[#allocation5] sm:$0xff] %v2127
    %2140 = vst [vmem:[#allocation5 + $0x8] sm:$0xff] %v2128
    %2141 = vst [vmem:[#allocation5 + $0x10] sm:$0xff] %v2129
    %2142 = vst [vmem:[#allocation5 + $0x18] sm:$0xff] %v2130
    %2143 = vst [vmem:[#allocation5 + $0x20] sm:$0xff] %v2131
    %2144 = vst [vmem:[#allocation5 + $0x28] sm:$0xff] %v2132
    %2145 = vst [vmem:[#allocation5 + $0x30] sm:$0xff] %v2133
    %2146 = vst [vmem:[#allocation5 + $0x38] sm:$0xff] %v2134
    %2147 = vst [vmem:[#allocation5 + $0x40] sm:$0xff] %v2135
    %2148 = vst [vmem:[#allocation5 + $0x48] sm:$0xff] %v2136
    %2149 = vst [vmem:[#allocation5 + $0x50] sm:$0xff] %v2137
    %2150 = vst [vmem:[#allocation5 + $0x58] sm:$0xff] %v2138
    %v2151 = vld [vmem:[#allocation4 + $0x70] sm:$0xff]
    %v2152 = vld [vmem:[#allocation4 + $0x78] sm:$0xff]
    %v2153 = vld [vmem:[#allocation4 + $0x80] sm:$0xff]
    %v2154 = vld [vmem:[#allocation4 + $0x88] sm:$0xff]
    %v2155 = vld [vmem:[#allocation4 + $0x90] sm:$0xff]
    %v2156 = vld [vmem:[#allocation4 + $0x98] sm:$0xff]
    %v2157 = vld [vmem:[#allocation4 + $0xa0] sm:$0xff]
    %v2158 = vld [vmem:[#allocation4 + $0xa8] sm:$0xff]
    %v2159 = vld [vmem:[#allocation4 + $0xb0] sm:$0xff]
    %v2160 = vld [vmem:[#allocation4 + $0xb8] sm:$0xff]
    %v2161 = vld [vmem:[#allocation4 + $0xc0] sm:$0xff]
    %v2162 = vld [vmem:[#allocation4 + $0xc8] sm:$0xff]
    %2163 = vst [vmem:[#allocation5 + $0x2a0] sm:$0xff] %v2151
    %2164 = vst [vmem:[#allocation5 + $0x2a8] sm:$0xff] %v2152
    %2165 = vst [vmem:[#allocation5 + $0x2b0] sm:$0xff] %v2153
    %2166 = vst [vmem:[#allocation5 + $0x2b8] sm:$0xff] %v2154
    %2167 = vst [vmem:[#allocation5 + $0x2c0] sm:$0xff] %v2155
    %2168 = vst [vmem:[#allocation5 + $0x2c8] sm:$0xff] %v2156
    %2169 = vst [vmem:[#allocation5 + $0x2d0] sm:$0xff] %v2157
    %2170 = vst [vmem:[#allocation5 + $0x2d8] sm:$0xff] %v2158
    %2171 = vst [vmem:[#allocation5 + $0x2e0] sm:$0xff] %v2159
    %2172 = vst [vmem:[#allocation5 + $0x2e8] sm:$0xff] %v2160
    %2173 = vst [vmem:[#allocation5 + $0x2f0] sm:$0xff] %v2161
    %2174 = vst [vmem:[#allocation5 + $0x2f8] sm:$0xff] %v2162
    %v2175 = vld [vmem:[#allocation4] sm:$0xff]
    %v2176 = vld [vmem:[#allocation4 + $0x8] sm:$0xff]
    %v2177 = vld [vmem:[#allocation4 + $0x10] sm:$0xff]
    %v2178 = vld [vmem:[#allocation4 + $0x18] sm:$0xff]
    %v2179 = vld [vmem:[#allocation4 + $0x20] sm:$0xff]
    %v2180 = vld [vmem:[#allocation4 + $0x28] sm:$0xff]
    %v2181 = vld [vmem:[#allocation4 + $0x30] sm:$0xff]
    %v2182 = vld [vmem:[#allocation4 + $0x38] sm:$0xff]
    %v2183 = vld [vmem:[#allocation4 + $0x40] sm:$0xff]
    %v2184 = vld [vmem:[#allocation4 + $0x48] sm:$0xff]
    %v2185 = vld [vmem:[#allocation4 + $0x50] sm:$0xff]
    %v2186 = vld [vmem:[#allocation4 + $0x58] sm:$0xff]
    %v2187 = vld [vmem:[#allocation4 + $0x60] sm:$0xff]
    %2201 = vrot.lane.b32.xlu0 %v2175, 127
    %v2202 = vpop.permute.xlu0 %2201
    %2203 = vrot.lane.b32.xlu0 %v2176, 127
    %v2204 = vpop.permute.xlu0 %2203
    %2205 = vrot.lane.b32.xlu0 %v2177, 127
    %v2206 = vpop.permute.xlu0 %2205
    %2207 = vrot.lane.b32.xlu0 %v2178, 127
    %v2208 = vpop.permute.xlu0 %2207
    %2209 = vrot.lane.b32.xlu0 %v2179, 127
    %v2210 = vpop.permute.xlu0 %2209
    %2211 = vrot.lane.b32.xlu0 %v2180, 127
    %v2212 = vpop.permute.xlu0 %2211
    %2213 = vrot.lane.b32.xlu0 %v2181, 127
    %v2214 = vpop.permute.xlu0 %2213
    %2215 = vrot.lane.b32.xlu0 %v2182, 127
    %v2216 = vpop.permute.xlu0 %2215
    %2217 = vrot.lane.b32.xlu0 %v2183, 127
    %v2218 = vpop.permute.xlu0 %2217
    %2219 = vrot.lane.b32.xlu0 %v2184, 127
    %v2220 = vpop.permute.xlu0 %2219
    %2221 = vrot.lane.b32.xlu0 %v2185, 127
    %v2222 = vpop.permute.xlu0 %2221
    %2223 = vrot.lane.b32.xlu0 %v2186, 127
    %v2224 = vpop.permute.xlu0 %2223
    %2225 = vrot.lane.b32.xlu0 %v2187, 127
    %v2226 = vpop.permute.xlu0 %2225
    %v2227 = vsel %vm460, %v2202, %v2204
    %v2228 = vsel %vm460, %v2204, %v2206
    %v2229 = vsel %vm460, %v2206, %v2208
    %v2230 = vsel %vm460, %v2208, %v2210
    %v2231 = vsel %vm460, %v2210, %v2212
    %v2232 = vsel %vm460, %v2212, %v2214
    %v2233 = vsel %vm460, %v2214, %v2216
    %v2234 = vsel %vm460, %v2216, %v2218
    %v2235 = vsel %vm460, %v2218, %v2220
    %v2236 = vsel %vm460, %v2220, %v2222
    %v2237 = vsel %vm460, %v2222, %v2224
    %v2238 = vsel %vm460, %v2224, %v2226
    %2251 = vst [vmem:[#allocation5 + $0x60] sm:$0xff] %v2227
    %2252 = vst [vmem:[#allocation5 + $0x68] sm:$0xff] %v2228
    %2253 = vst [vmem:[#allocation5 + $0x70] sm:$0xff] %v2229
    %2254 = vst [vmem:[#allocation5 + $0x78] sm:$0xff] %v2230
    %2255 = vst [vmem:[#allocation5 + $0x80] sm:$0xff] %v2231
    %2256 = vst [vmem:[#allocation5 + $0x88] sm:$0xff] %v2232
    %2257 = vst [vmem:[#allocation5 + $0x90] sm:$0xff] %v2233
    %2258 = vst [vmem:[#allocation5 + $0x98] sm:$0xff] %v2234
    %2259 = vst [vmem:[#allocation5 + $0xa0] sm:$0xff] %v2235
    %2260 = vst [vmem:[#allocation5 + $0xa8] sm:$0xff] %v2236
    %2261 = vst [vmem:[#allocation5 + $0xb0] sm:$0xff] %v2237
    %2262 = vst [vmem:[#allocation5 + $0xb8] sm:$0xff] %v2238
    %v2263 = vld [vmem:[#allocation4 + $0x70] sm:$0xff]
    %v2264 = vld [vmem:[#allocation4 + $0x78] sm:$0xff]
    %v2265 = vld [vmem:[#allocation4 + $0x80] sm:$0xff]
    %v2266 = vld [vmem:[#allocation4 + $0x88] sm:$0xff]
    %v2267 = vld [vmem:[#allocation4 + $0x90] sm:$0xff]
    %v2268 = vld [vmem:[#allocation4 + $0x98] sm:$0xff]
    %v2269 = vld [vmem:[#allocation4 + $0xa0] sm:$0xff]
    %v2270 = vld [vmem:[#allocation4 + $0xa8] sm:$0xff]
    %v2271 = vld [vmem:[#allocation4 + $0xb0] sm:$0xff]
    %v2272 = vld [vmem:[#allocation4 + $0xb8] sm:$0xff]
    %v2273 = vld [vmem:[#allocation4 + $0xc0] sm:$0xff]
    %v2274 = vld [vmem:[#allocation4 + $0xc8] sm:$0xff]
    %v2275 = vld [vmem:[#allocation4 + $0xd0] sm:$0xff]
    %2289 = vrot.lane.b32.xlu0 %v2263, 96
    %v2290 = vpop.permute.xlu0 %2289
    %2291 = vrot.lane.b32.xlu0 %v2264, 96
    %v2292 = vpop.permute.xlu0 %2291
    %2293 = vrot.lane.b32.xlu0 %v2265, 96
    %v2294 = vpop.permute.xlu0 %2293
    %2295 = vrot.lane.b32.xlu0 %v2266, 96
    %v2296 = vpop.permute.xlu0 %2295
    %2297 = vrot.lane.b32.xlu0 %v2267, 96
    %v2298 = vpop.permute.xlu0 %2297
    %2299 = vrot.lane.b32.xlu0 %v2268, 96
    %v2300 = vpop.permute.xlu0 %2299
    %2301 = vrot.lane.b32.xlu0 %v2269, 96
    %v2302 = vpop.permute.xlu0 %2301
    %2303 = vrot.lane.b32.xlu0 %v2270, 96
    %v2304 = vpop.permute.xlu0 %2303
    %2305 = vrot.lane.b32.xlu0 %v2271, 96
    %v2306 = vpop.permute.xlu0 %2305
    %2307 = vrot.lane.b32.xlu0 %v2272, 96
    %v2308 = vpop.permute.xlu0 %2307
    %2309 = vrot.lane.b32.xlu0 %v2273, 96
    %v2310 = vpop.permute.xlu0 %2309
    %2311 = vrot.lane.b32.xlu0 %v2274, 96
    %v2312 = vpop.permute.xlu0 %2311
    %2313 = vrot.lane.b32.xlu0 %v2275, 96
    %v2314 = vpop.permute.xlu0 %2313
    %v2315 = vsel %vm377, %v2290, %v2292
    %v2316 = vsel %vm377, %v2292, %v2294
    %v2317 = vsel %vm377, %v2294, %v2296
    %v2318 = vsel %vm377, %v2296, %v2298
    %v2319 = vsel %vm377, %v2298, %v2300
    %v2320 = vsel %vm377, %v2300, %v2302
    %v2321 = vsel %vm377, %v2302, %v2304
    %v2322 = vsel %vm377, %v2304, %v2306
    %v2323 = vsel %vm377, %v2306, %v2308
    %v2324 = vsel %vm377, %v2308, %v2310
    %v2325 = vsel %vm377, %v2310, %v2312
    %v2326 = vsel %vm377, %v2312, %v2314
    %2339 = vst [vmem:[#allocation5 + $0x300] sm:$0xff] %v2315
    %2340 = vst [vmem:[#allocation5 + $0x308] sm:$0xff] %v2316
    %2341 = vst [vmem:[#allocation5 + $0x310] sm:$0xff] %v2317
    %2342 = vst [vmem:[#allocation5 + $0x318] sm:$0xff] %v2318
    %2343 = vst [vmem:[#allocation5 + $0x320] sm:$0xff] %v2319
    %2344 = vst [vmem:[#allocation5 + $0x328] sm:$0xff] %v2320
    %2345 = vst [vmem:[#allocation5 + $0x330] sm:$0xff] %v2321
    %2346 = vst [vmem:[#allocation5 + $0x338] sm:$0xff] %v2322
    %2347 = vst [vmem:[#allocation5 + $0x340] sm:$0xff] %v2323
    %2348 = vst [vmem:[#allocation5 + $0x348] sm:$0xff] %v2324
    %2349 = vst [vmem:[#allocation5 + $0x350] sm:$0xff] %v2325
    %2350 = vst [vmem:[#allocation5 + $0x358] sm:$0xff] %v2326
    %v2351 = vld [vmem:[#allocation4] sm:$0xff]
    %v2352 = vld [vmem:[#allocation4 + $0x8] sm:$0xff]
    %v2353 = vld [vmem:[#allocation4 + $0x10] sm:$0xff]
    %v2354 = vld [vmem:[#allocation4 + $0x18] sm:$0xff]
    %v2355 = vld [vmem:[#allocation4 + $0x20] sm:$0xff]
    %v2356 = vld [vmem:[#allocation4 + $0x28] sm:$0xff]
    %v2357 = vld [vmem:[#allocation4 + $0x30] sm:$0xff]
    %v2358 = vld [vmem:[#allocation4 + $0x38] sm:$0xff]
    %v2359 = vld [vmem:[#allocation4 + $0x40] sm:$0xff]
    %v2360 = vld [vmem:[#allocation4 + $0x48] sm:$0xff]
    %v2361 = vld [vmem:[#allocation4 + $0x50] sm:$0xff]
    %v2362 = vld [vmem:[#allocation4 + $0x58] sm:$0xff]
    %v2363 = vld [vmem:[#allocation4 + $0x60] sm:$0xff]
    %2377 = vrot.lane.b32.xlu0 %v2351, 126
    %v2378 = vpop.permute.xlu0 %2377
    %2379 = vrot.lane.b32.xlu0 %v2352, 126
    %v2380 = vpop.permute.xlu0 %2379
    %2381 = vrot.lane.b32.xlu0 %v2353, 126
    %v2382 = vpop.permute.xlu0 %2381
    %2383 = vrot.lane.b32.xlu0 %v2354, 126
    %v2384 = vpop.permute.xlu0 %2383
    %2385 = vrot.lane.b32.xlu0 %v2355, 126
    %v2386 = vpop.permute.xlu0 %2385
    %2387 = vrot.lane.b32.xlu0 %v2356, 126
    %v2388 = vpop.permute.xlu0 %2387
    %2389 = vrot.lane.b32.xlu0 %v2357, 126
    %v2390 = vpop.permute.xlu0 %2389
    %2391 = vrot.lane.b32.xlu0 %v2358, 126
    %v2392 = vpop.permute.xlu0 %2391
    %2393 = vrot.lane.b32.xlu0 %v2359, 126
    %v2394 = vpop.permute.xlu0 %2393
    %2395 = vrot.lane.b32.xlu0 %v2360, 126
    %v2396 = vpop.permute.xlu0 %2395
    %2397 = vrot.lane.b32.xlu0 %v2361, 126
    %v2398 = vpop.permute.xlu0 %2397
    %2399 = vrot.lane.b32.xlu0 %v2362, 126
    %v2400 = vpop.permute.xlu0 %2399
    %2401 = vrot.lane.b32.xlu0 %v2363, 126
    %v2402 = vpop.permute.xlu0 %2401
    %v2403 = vsel %vm627, %v2378, %v2380
    %v2404 = vsel %vm627, %v2380, %v2382
    %v2405 = vsel %vm627, %v2382, %v2384
    %v2406 = vsel %vm627, %v2384, %v2386
    %v2407 = vsel %vm627, %v2386, %v2388
    %v2408 = vsel %vm627, %v2388, %v2390
    %v2409 = vsel %vm627, %v2390, %v2392
    %v2410 = vsel %vm627, %v2392, %v2394
    %v2411 = vsel %vm627, %v2394, %v2396
    %v2412 = vsel %vm627, %v2396, %v2398
    %v2413 = vsel %vm627, %v2398, %v2400
    %v2414 = vsel %vm627, %v2400, %v2402
    %2427 = vst [vmem:[#allocation5 + $0xc0] sm:$0xff] %v2403
    %2428 = vst [vmem:[#allocation5 + $0xc8] sm:$0xff] %v2404
    %2429 = vst [vmem:[#allocation5 + $0xd0] sm:$0xff] %v2405
    %2430 = vst [vmem:[#allocation5 + $0xd8] sm:$0xff] %v2406
    %2431 = vst [vmem:[#allocation5 + $0xe0] sm:$0xff] %v2407
    %2432 = vst [vmem:[#allocation5 + $0xe8] sm:$0xff] %v2408
    %2433 = vst [vmem:[#allocation5 + $0xf0] sm:$0xff] %v2409
    %2434 = vst [vmem:[#allocation5 + $0xf8] sm:$0xff] %v2410
    %2435 = vst [vmem:[#allocation5 + $0x100] sm:$0xff] %v2411
    %2436 = vst [vmem:[#allocation5 + $0x108] sm:$0xff] %v2412
    %2437 = vst [vmem:[#allocation5 + $0x110] sm:$0xff] %v2413
    %2438 = vst [vmem:[#allocation5 + $0x118] sm:$0xff] %v2414
    %v2439 = vld [vmem:[#allocation4 + $0x70] sm:$0xff]
    %v2440 = vld [vmem:[#allocation4 + $0x78] sm:$0xff]
    %v2441 = vld [vmem:[#allocation4 + $0x80] sm:$0xff]
    %v2442 = vld [vmem:[#allocation4 + $0x88] sm:$0xff]
    %v2443 = vld [vmem:[#allocation4 + $0x90] sm:$0xff]
    %v2444 = vld [vmem:[#allocation4 + $0x98] sm:$0xff]
    %v2445 = vld [vmem:[#allocation4 + $0xa0] sm:$0xff]
    %v2446 = vld [vmem:[#allocation4 + $0xa8] sm:$0xff]
    %v2447 = vld [vmem:[#allocation4 + $0xb0] sm:$0xff]
    %v2448 = vld [vmem:[#allocation4 + $0xb8] sm:$0xff]
    %v2449 = vld [vmem:[#allocation4 + $0xc0] sm:$0xff]
    %v2450 = vld [vmem:[#allocation4 + $0xc8] sm:$0xff]
    %v2451 = vld [vmem:[#allocation4 + $0xd0] sm:$0xff]
    %2465 = vrot.lane.b32.xlu0 %v2439, 64
    %v2466 = vpop.permute.xlu0 %2465
    %2467 = vrot.lane.b32.xlu0 %v2440, 64
    %v2468 = vpop.permute.xlu0 %2467
    %2469 = vrot.lane.b32.xlu0 %v2441, 64
    %v2470 = vpop.permute.xlu0 %2469
    %2471 = vrot.lane.b32.xlu0 %v2442, 64
    %v2472 = vpop.permute.xlu0 %2471
    %2473 = vrot.lane.b32.xlu0 %v2443, 64
    %v2474 = vpop.permute.xlu0 %2473
    %2475 = vrot.lane.b32.xlu0 %v2444, 64
    %v2476 = vpop.permute.xlu0 %2475
    %2477 = vrot.lane.b32.xlu0 %v2445, 64
    %v2478 = vpop.permute.xlu0 %2477
    %2479 = vrot.lane.b32.xlu0 %v2446, 64
    %v2480 = vpop.permute.xlu0 %2479
    %2481 = vrot.lane.b32.xlu0 %v2447, 64
    %v2482 = vpop.permute.xlu0 %2481
    %2483 = vrot.lane.b32.xlu0 %v2448, 64
    %v2484 = vpop.permute.xlu0 %2483
    %2485 = vrot.lane.b32.xlu0 %v2449, 64
    %v2486 = vpop.permute.xlu0 %2485
    %2487 = vrot.lane.b32.xlu0 %v2450, 64
    %v2488 = vpop.permute.xlu0 %2487
    %2489 = vrot.lane.b32.xlu0 %v2451, 64
    %v2490 = vpop.permute.xlu0 %2489
    %v2491 = vsel %vm543, %v2466, %v2468
    %v2492 = vsel %vm543, %v2468, %v2470
    %v2493 = vsel %vm543, %v2470, %v2472
    %v2494 = vsel %vm543, %v2472, %v2474
    %v2495 = vsel %vm543, %v2474, %v2476
    %v2496 = vsel %vm543, %v2476, %v2478
    %v2497 = vsel %vm543, %v2478, %v2480
    %v2498 = vsel %vm543, %v2480, %v2482
    %v2499 = vsel %vm543, %v2482, %v2484
    %v2500 = vsel %vm543, %v2484, %v2486
    %v2501 = vsel %vm543, %v2486, %v2488
    %v2502 = vsel %vm543, %v2488, %v2490
    %2515 = vst [vmem:[#allocation5 + $0x360] sm:$0xff] %v2491
    %2516 = vst [vmem:[#allocation5 + $0x368] sm:$0xff] %v2492
    %2517 = vst [vmem:[#allocation5 + $0x370] sm:$0xff] %v2493
    %2518 = vst [vmem:[#allocation5 + $0x378] sm:$0xff] %v2494
    %2519 = vst [vmem:[#allocation5 + $0x380] sm:$0xff] %v2495
    %2520 = vst [vmem:[#allocation5 + $0x388] sm:$0xff] %v2496
    %2521 = vst [vmem:[#allocation5 + $0x390] sm:$0xff] %v2497
    %2522 = vst [vmem:[#allocation5 + $0x398] sm:$0xff] %v2498
    %2523 = vst [vmem:[#allocation5 + $0x3a0] sm:$0xff] %v2499
    %2524 = vst [vmem:[#allocation5 + $0x3a8] sm:$0xff] %v2500
    %2525 = vst [vmem:[#allocation5 + $0x3b0] sm:$0xff] %v2501
    %2526 = vst [vmem:[#allocation5 + $0x3b8] sm:$0xff] %v2502
    %v2527 = vld [vmem:[#allocation4] sm:$0xff]
    %v2528 = vld [vmem:[#allocation4 + $0x8] sm:$0xff]
    %v2529 = vld [vmem:[#allocation4 + $0x10] sm:$0xff]
    %v2530 = vld [vmem:[#allocation4 + $0x18] sm:$0xff]
    %v2531 = vld [vmem:[#allocation4 + $0x20] sm:$0xff]
    %v2532 = vld [vmem:[#allocation4 + $0x28] sm:$0xff]
    %v2533 = vld [vmem:[#allocation4 + $0x30] sm:$0xff]
    %v2534 = vld [vmem:[#allocation4 + $0x38] sm:$0xff]
    %v2535 = vld [vmem:[#allocation4 + $0x40] sm:$0xff]
    %v2536 = vld [vmem:[#allocation4 + $0x48] sm:$0xff]
    %v2537 = vld [vmem:[#allocation4 + $0x50] sm:$0xff]
    %v2538 = vld [vmem:[#allocation4 + $0x58] sm:$0xff]
    %v2539 = vld [vmem:[#allocation4 + $0x60] sm:$0xff]
    %2553 = vrot.lane.b32.xlu0 %v2527, 125
    %v2554 = vpop.permute.xlu0 %2553
    %2555 = vrot.lane.b32.xlu0 %v2528, 125
    %v2556 = vpop.permute.xlu0 %2555
    %2557 = vrot.lane.b32.xlu0 %v2529, 125
    %v2558 = vpop.permute.xlu0 %2557
    %2559 = vrot.lane.b32.xlu0 %v2530, 125
    %v2560 = vpop.permute.xlu0 %2559
    %2561 = vrot.lane.b32.xlu0 %v2531, 125
    %v2562 = vpop.permute.xlu0 %2561
    %2563 = vrot.lane.b32.xlu0 %v2532, 125
    %v2564 = vpop.permute.xlu0 %2563
    %2565 = vrot.lane.b32.xlu0 %v2533, 125
    %v2566 = vpop.permute.xlu0 %2565
    %2567 = vrot.lane.b32.xlu0 %v2534, 125
    %v2568 = vpop.permute.xlu0 %2567
    %2569 = vrot.lane.b32.xlu0 %v2535, 125
    %v2570 = vpop.permute.xlu0 %2569
    %2571 = vrot.lane.b32.xlu0 %v2536, 125
    %v2572 = vpop.permute.xlu0 %2571
    %2573 = vrot.lane.b32.xlu0 %v2537, 125
    %v2574 = vpop.permute.xlu0 %2573
    %2575 = vrot.lane.b32.xlu0 %v2538, 125
    %v2576 = vpop.permute.xlu0 %2575
    %2577 = vrot.lane.b32.xlu0 %v2539, 125
    %v2578 = vpop.permute.xlu0 %2577
    %v2579 = vsel %vm794, %v2554, %v2556
    %v2580 = vsel %vm794, %v2556, %v2558
    %v2581 = vsel %vm794, %v2558, %v2560
    %v2582 = vsel %vm794, %v2560, %v2562
    %v2583 = vsel %vm794, %v2562, %v2564
    %v2584 = vsel %vm794, %v2564, %v2566
    %v2585 = vsel %vm794, %v2566, %v2568
    %v2586 = vsel %vm794, %v2568, %v2570
    %v2587 = vsel %vm794, %v2570, %v2572
    %v2588 = vsel %vm794, %v2572, %v2574
    %v2589 = vsel %vm794, %v2574, %v2576
    %v2590 = vsel %vm794, %v2576, %v2578
    %2603 = vst [vmem:[#allocation5 + $0x120] sm:$0xff] %v2579
    %2604 = vst [vmem:[#allocation5 + $0x128] sm:$0xff] %v2580
    %2605 = vst [vmem:[#allocation5 + $0x130] sm:$0xff] %v2581
    %2606 = vst [vmem:[#allocation5 + $0x138] sm:$0xff] %v2582
    %2607 = vst [vmem:[#allocation5 + $0x140] sm:$0xff] %v2583
    %2608 = vst [vmem:[#allocation5 + $0x148] sm:$0xff] %v2584
    %2609 = vst [vmem:[#allocation5 + $0x150] sm:$0xff] %v2585
    %2610 = vst [vmem:[#allocation5 + $0x158] sm:$0xff] %v2586
    %2611 = vst [vmem:[#allocation5 + $0x160] sm:$0xff] %v2587
    %2612 = vst [vmem:[#allocation5 + $0x168] sm:$0xff] %v2588
    %2613 = vst [vmem:[#allocation5 + $0x170] sm:$0xff] %v2589
    %2614 = vst [vmem:[#allocation5 + $0x178] sm:$0xff] %v2590
    %v2615 = vld [vmem:[#allocation4 + $0x70] sm:$0xff]
    %v2616 = vld [vmem:[#allocation4 + $0x78] sm:$0xff]
    %v2617 = vld [vmem:[#allocation4 + $0x80] sm:$0xff]
    %v2618 = vld [vmem:[#allocation4 + $0x88] sm:$0xff]
    %v2619 = vld [vmem:[#allocation4 + $0x90] sm:$0xff]
    %v2620 = vld [vmem:[#allocation4 + $0x98] sm:$0xff]
    %v2621 = vld [vmem:[#allocation4 + $0xa0] sm:$0xff]
    %v2622 = vld [vmem:[#allocation4 + $0xa8] sm:$0xff]
    %v2623 = vld [vmem:[#allocation4 + $0xb0] sm:$0xff]
    %v2624 = vld [vmem:[#allocation4 + $0xb8] sm:$0xff]
    %v2625 = vld [vmem:[#allocation4 + $0xc0] sm:$0xff]
    %v2626 = vld [vmem:[#allocation4 + $0xc8] sm:$0xff]
    %v2627 = vld [vmem:[#allocation4 + $0xd0] sm:$0xff]
    %2641 = vrot.lane.b32.xlu0 %v2615, 32
    %v2642 = vpop.permute.xlu0 %2641
    %2643 = vrot.lane.b32.xlu0 %v2616, 32
    %v2644 = vpop.permute.xlu0 %2643
    %2645 = vrot.lane.b32.xlu0 %v2617, 32
    %v2646 = vpop.permute.xlu0 %2645
    %2647 = vrot.lane.b32.xlu0 %v2618, 32
    %v2648 = vpop.permute.xlu0 %2647
    %2649 = vrot.lane.b32.xlu0 %v2619, 32
    %v2650 = vpop.permute.xlu0 %2649
    %2651 = vrot.lane.b32.xlu0 %v2620, 32
    %v2652 = vpop.permute.xlu0 %2651
    %2653 = vrot.lane.b32.xlu0 %v2621, 32
    %v2654 = vpop.permute.xlu0 %2653
    %2655 = vrot.lane.b32.xlu0 %v2622, 32
    %v2656 = vpop.permute.xlu0 %2655
    %2657 = vrot.lane.b32.xlu0 %v2623, 32
    %v2658 = vpop.permute.xlu0 %2657
    %2659 = vrot.lane.b32.xlu0 %v2624, 32
    %v2660 = vpop.permute.xlu0 %2659
    %2661 = vrot.lane.b32.xlu0 %v2625, 32
    %v2662 = vpop.permute.xlu0 %2661
    %2663 = vrot.lane.b32.xlu0 %v2626, 32
    %v2664 = vpop.permute.xlu0 %2663
    %2665 = vrot.lane.b32.xlu0 %v2627, 32
    %v2666 = vpop.permute.xlu0 %2665
    %v2667 = vsel %vm711, %v2642, %v2644
    %v2668 = vsel %vm711, %v2644, %v2646
    %v2669 = vsel %vm711, %v2646, %v2648
    %v2670 = vsel %vm711, %v2648, %v2650
    %v2671 = vsel %vm711, %v2650, %v2652
    %v2672 = vsel %vm711, %v2652, %v2654
    %v2673 = vsel %vm711, %v2654, %v2656
    %v2674 = vsel %vm711, %v2656, %v2658
    %v2675 = vsel %vm711, %v2658, %v2660
    %v2676 = vsel %vm711, %v2660, %v2662
    %v2677 = vsel %vm711, %v2662, %v2664
    %v2678 = vsel %vm711, %v2664, %v2666
    %2691 = vst [vmem:[#allocation5 + $0x3c0] sm:$0xff] %v2667
    %2692 = vst [vmem:[#allocation5 + $0x3c8] sm:$0xff] %v2668
    %2693 = vst [vmem:[#allocation5 + $0x3d0] sm:$0xff] %v2669
    %2694 = vst [vmem:[#allocation5 + $0x3d8] sm:$0xff] %v2670
    %2695 = vst [vmem:[#allocation5 + $0x3e0] sm:$0xff] %v2671
    %2696 = vst [vmem:[#allocation5 + $0x3e8] sm:$0xff] %v2672
    %2697 = vst [vmem:[#allocation5 + $0x3f0] sm:$0xff] %v2673
    %2698 = vst [vmem:[#allocation5 + $0x3f8] sm:$0xff] %v2674
    %2699 = vst [vmem:[#allocation5 + $0x400] sm:$0xff] %v2675
    %2700 = vst [vmem:[#allocation5 + $0x408] sm:$0xff] %v2676
    %2701 = vst [vmem:[#allocation5 + $0x410] sm:$0xff] %v2677
    %2702 = vst [vmem:[#allocation5 + $0x418] sm:$0xff] %v2678
    %v2703 = vld [vmem:[#allocation4] sm:$0xff]
    %v2704 = vld [vmem:[#allocation4 + $0x8] sm:$0xff]
    %v2705 = vld [vmem:[#allocation4 + $0x10] sm:$0xff]
    %v2706 = vld [vmem:[#allocation4 + $0x18] sm:$0xff]
    %v2707 = vld [vmem:[#allocation4 + $0x20] sm:$0xff]
    %v2708 = vld [vmem:[#allocation4 + $0x28] sm:$0xff]
    %v2709 = vld [vmem:[#allocation4 + $0x30] sm:$0xff]
    %v2710 = vld [vmem:[#allocation4 + $0x38] sm:$0xff]
    %v2711 = vld [vmem:[#allocation4 + $0x40] sm:$0xff]
    %v2712 = vld [vmem:[#allocation4 + $0x48] sm:$0xff]
    %v2713 = vld [vmem:[#allocation4 + $0x50] sm:$0xff]
    %v2714 = vld [vmem:[#allocation4 + $0x58] sm:$0xff]
    %v2715 = vld [vmem:[#allocation4 + $0x60] sm:$0xff]
    %2729 = vrot.lane.b32.xlu0 %v2703, 124
    %v2730 = vpop.permute.xlu0 %2729
    %2731 = vrot.lane.b32.xlu0 %v2704, 124
    %v2732 = vpop.permute.xlu0 %2731
    %2733 = vrot.lane.b32.xlu0 %v2705, 124
    %v2734 = vpop.permute.xlu0 %2733
    %2735 = vrot.lane.b32.xlu0 %v2706, 124
    %v2736 = vpop.permute.xlu0 %2735
    %2737 = vrot.lane.b32.xlu0 %v2707, 124
    %v2738 = vpop.permute.xlu0 %2737
    %2739 = vrot.lane.b32.xlu0 %v2708, 124
    %v2740 = vpop.permute.xlu0 %2739
    %2741 = vrot.lane.b32.xlu0 %v2709, 124
    %v2742 = vpop.permute.xlu0 %2741
    %2743 = vrot.lane.b32.xlu0 %v2710, 124
    %v2744 = vpop.permute.xlu0 %2743
    %2745 = vrot.lane.b32.xlu0 %v2711, 124
    %v2746 = vpop.permute.xlu0 %2745
    %2747 = vrot.lane.b32.xlu0 %v2712, 124
    %v2748 = vpop.permute.xlu0 %2747
    %2749 = vrot.lane.b32.xlu0 %v2713, 124
    %v2750 = vpop.permute.xlu0 %2749
    %2751 = vrot.lane.b32.xlu0 %v2714, 124
    %v2752 = vpop.permute.xlu0 %2751
    %2753 = vrot.lane.b32.xlu0 %v2715, 124
    %v2754 = vpop.permute.xlu0 %2753
    %v2755 = vsel %vm914, %v2730, %v2732
    %v2756 = vsel %vm914, %v2732, %v2734
    %v2757 = vsel %vm914, %v2734, %v2736
    %v2758 = vsel %vm914, %v2736, %v2738
    %v2759 = vsel %vm914, %v2738, %v2740
    %v2760 = vsel %vm914, %v2740, %v2742
    %v2761 = vsel %vm914, %v2742, %v2744
    %v2762 = vsel %vm914, %v2744, %v2746
    %v2763 = vsel %vm914, %v2746, %v2748
    %v2764 = vsel %vm914, %v2748, %v2750
    %v2765 = vsel %vm914, %v2750, %v2752
    %v2766 = vsel %vm914, %v2752, %v2754
    %2779 = vst [vmem:[#allocation5 + $0x180] sm:$0xff] %v2755
    %2780 = vst [vmem:[#allocation5 + $0x188] sm:$0xff] %v2756
    %2781 = vst [vmem:[#allocation5 + $0x190] sm:$0xff] %v2757
    %2782 = vst [vmem:[#allocation5 + $0x198] sm:$0xff] %v2758
    %2783 = vst [vmem:[#allocation5 + $0x1a0] sm:$0xff] %v2759
    %2784 = vst [vmem:[#allocation5 + $0x1a8] sm:$0xff] %v2760
    %2785 = vst [vmem:[#allocation5 + $0x1b0] sm:$0xff] %v2761
    %2786 = vst [vmem:[#allocation5 + $0x1b8] sm:$0xff] %v2762
    %2787 = vst [vmem:[#allocation5 + $0x1c0] sm:$0xff] %v2763
    %2788 = vst [vmem:[#allocation5 + $0x1c8] sm:$0xff] %v2764
    %2789 = vst [vmem:[#allocation5 + $0x1d0] sm:$0xff] %v2765
    %2790 = vst [vmem:[#allocation5 + $0x1d8] sm:$0xff] %v2766
    %v2791 = vld [vmem:[#allocation4 + $0x78] sm:$0xff]
    %v2792 = vld [vmem:[#allocation4 + $0x80] sm:$0xff]
    %v2793 = vld [vmem:[#allocation4 + $0x88] sm:$0xff]
    %v2794 = vld [vmem:[#allocation4 + $0x90] sm:$0xff]
    %v2795 = vld [vmem:[#allocation4 + $0x98] sm:$0xff]
    %v2796 = vld [vmem:[#allocation4 + $0xa0] sm:$0xff]
    %v2797 = vld [vmem:[#allocation4 + $0xa8] sm:$0xff]
    %v2798 = vld [vmem:[#allocation4 + $0xb0] sm:$0xff]
    %v2799 = vld [vmem:[#allocation4 + $0xb8] sm:$0xff]
    %v2800 = vld [vmem:[#allocation4 + $0xc0] sm:$0xff]
    %v2801 = vld [vmem:[#allocation4 + $0xc8] sm:$0xff]
    %v2802 = vld [vmem:[#allocation4 + $0xd0] sm:$0xff]
    %2803 = vst [vmem:[#allocation5 + $0x420] sm:$0xff] %v2791
    %2804 = vst [vmem:[#allocation5 + $0x428] sm:$0xff] %v2792
    %2805 = vst [vmem:[#allocation5 + $0x430] sm:$0xff] %v2793
    %2806 = vst [vmem:[#allocation5 + $0x438] sm:$0xff] %v2794
    %2807 = vst [vmem:[#allocation5 + $0x440] sm:$0xff] %v2795
    %2808 = vst [vmem:[#allocation5 + $0x448] sm:$0xff] %v2796
    %2809 = vst [vmem:[#allocation5 + $0x450] sm:$0xff] %v2797
    %2810 = vst [vmem:[#allocation5 + $0x458] sm:$0xff] %v2798
    %2811 = vst [vmem:[#allocation5 + $0x460] sm:$0xff] %v2799
    %2812 = vst [vmem:[#allocation5 + $0x468] sm:$0xff] %v2800
    %2813 = vst [vmem:[#allocation5 + $0x470] sm:$0xff] %v2801
    %2814 = vst [vmem:[#allocation5 + $0x478] sm:$0xff] %v2802
    %v2815 = vld [vmem:[#allocation4] sm:$0xff]
    %v2816 = vld [vmem:[#allocation4 + $0x8] sm:$0xff]
    %v2817 = vld [vmem:[#allocation4 + $0x10] sm:$0xff]
    %v2818 = vld [vmem:[#allocation4 + $0x18] sm:$0xff]
    %v2819 = vld [vmem:[#allocation4 + $0x20] sm:$0xff]
    %v2820 = vld [vmem:[#allocation4 + $0x28] sm:$0xff]
    %v2821 = vld [vmem:[#allocation4 + $0x30] sm:$0xff]
    %v2822 = vld [vmem:[#allocation4 + $0x38] sm:$0xff]
    %v2823 = vld [vmem:[#allocation4 + $0x40] sm:$0xff]
    %v2824 = vld [vmem:[#allocation4 + $0x48] sm:$0xff]
    %v2825 = vld [vmem:[#allocation4 + $0x50] sm:$0xff]
    %v2826 = vld [vmem:[#allocation4 + $0x58] sm:$0xff]
    %v2827 = vld [vmem:[#allocation4 + $0x60] sm:$0xff]
    %2841 = vrot.lane.b32.xlu0 %v2815, 123
    %v2842 = vpop.permute.xlu0 %2841
    %2843 = vrot.lane.b32.xlu0 %v2816, 123
    %v2844 = vpop.permute.xlu0 %2843
    %2845 = vrot.lane.b32.xlu0 %v2817, 123
    %v2846 = vpop.permute.xlu0 %2845
    %2847 = vrot.lane.b32.xlu0 %v2818, 123
    %v2848 = vpop.permute.xlu0 %2847
    %2849 = vrot.lane.b32.xlu0 %v2819, 123
    %v2850 = vpop.permute.xlu0 %2849
    %2851 = vrot.lane.b32.xlu0 %v2820, 123
    %v2852 = vpop.permute.xlu0 %2851
    %2853 = vrot.lane.b32.xlu0 %v2821, 123
    %v2854 = vpop.permute.xlu0 %2853
    %2855 = vrot.lane.b32.xlu0 %v2822, 123
    %v2856 = vpop.permute.xlu0 %2855
    %2857 = vrot.lane.b32.xlu0 %v2823, 123
    %v2858 = vpop.permute.xlu0 %2857
    %2859 = vrot.lane.b32.xlu0 %v2824, 123
    %v2860 = vpop.permute.xlu0 %2859
    %2861 = vrot.lane.b32.xlu0 %v2825, 123
    %v2862 = vpop.permute.xlu0 %2861
    %2863 = vrot.lane.b32.xlu0 %v2826, 123
    %v2864 = vpop.permute.xlu0 %2863
    %2865 = vrot.lane.b32.xlu0 %v2827, 123
    %v2866 = vpop.permute.xlu0 %2865
    %v2867 = vsel %vm1080, %v2842, %v2844
    %v2868 = vsel %vm1080, %v2844, %v2846
    %v2869 = vsel %vm1080, %v2846, %v2848
    %v2870 = vsel %vm1080, %v2848, %v2850
    %v2871 = vsel %vm1080, %v2850, %v2852
    %v2872 = vsel %vm1080, %v2852, %v2854
    %v2873 = vsel %vm1080, %v2854, %v2856
    %v2874 = vsel %vm1080, %v2856, %v2858
    %v2875 = vsel %vm1080, %v2858, %v2860
    %v2876 = vsel %vm1080, %v2860, %v2862
    %v2877 = vsel %vm1080, %v2862, %v2864
    %v2878 = vsel %vm1080, %v2864, %v2866
    %2891 = vst [vmem:[#allocation5 + $0x1e0] sm:$0xff] %v2867
    %2892 = vst [vmem:[#allocation5 + $0x1e8] sm:$0xff] %v2868
    %2893 = vst [vmem:[#allocation5 + $0x1f0] sm:$0xff] %v2869
    %2894 = vst [vmem:[#allocation5 + $0x1f8] sm:$0xff] %v2870
    %2895 = vst [vmem:[#allocation5 + $0x200] sm:$0xff] %v2871
    %2896 = vst [vmem:[#allocation5 + $0x208] sm:$0xff] %v2872
    %2897 = vst [vmem:[#allocation5 + $0x210] sm:$0xff] %v2873
    %2898 = vst [vmem:[#allocation5 + $0x218] sm:$0xff] %v2874
    %2899 = vst [vmem:[#allocation5 + $0x220] sm:$0xff] %v2875
    %2900 = vst [vmem:[#allocation5 + $0x228] sm:$0xff] %v2876
    %2901 = vst [vmem:[#allocation5 + $0x230] sm:$0xff] %v2877
    %2902 = vst [vmem:[#allocation5 + $0x238] sm:$0xff] %v2878
    %v2903 = vld [vmem:[#allocation4 + $0x78] sm:$0xff]
    %v2904 = vld [vmem:[#allocation4 + $0x80] sm:$0xff]
    %v2905 = vld [vmem:[#allocation4 + $0x88] sm:$0xff]
    %v2906 = vld [vmem:[#allocation4 + $0x90] sm:$0xff]
    %v2907 = vld [vmem:[#allocation4 + $0x98] sm:$0xff]
    %v2908 = vld [vmem:[#allocation4 + $0xa0] sm:$0xff]
    %v2909 = vld [vmem:[#allocation4 + $0xa8] sm:$0xff]
    %v2910 = vld [vmem:[#allocation4 + $0xb0] sm:$0xff]
    %v2911 = vld [vmem:[#allocation4 + $0xb8] sm:$0xff]
    %v2912 = vld [vmem:[#allocation4 + $0xc0] sm:$0xff]
    %v2913 = vld [vmem:[#allocation4 + $0xc8] sm:$0xff]
    %v2914 = vld [vmem:[#allocation4 + $0xd0] sm:$0xff]
    %v2915 = vld [vmem:[#allocation4 + $0xd8] sm:$0xff]
    %2929 = vrot.lane.b32.xlu0 %v2903, 96
    %v2930 = vpop.permute.xlu0 %2929
    %2931 = vrot.lane.b32.xlu0 %v2904, 96
    %v2932 = vpop.permute.xlu0 %2931
    %2933 = vrot.lane.b32.xlu0 %v2905, 96
    %v2934 = vpop.permute.xlu0 %2933
    %2935 = vrot.lane.b32.xlu0 %v2906, 96
    %v2936 = vpop.permute.xlu0 %2935
    %2937 = vrot.lane.b32.xlu0 %v2907, 96
    %v2938 = vpop.permute.xlu0 %2937
    %2939 = vrot.lane.b32.xlu0 %v2908, 96
    %v2940 = vpop.permute.xlu0 %2939
    %2941 = vrot.lane.b32.xlu0 %v2909, 96
    %v2942 = vpop.permute.xlu0 %2941
    %2943 = vrot.lane.b32.xlu0 %v2910, 96
    %v2944 = vpop.permute.xlu0 %2943
    %2945 = vrot.lane.b32.xlu0 %v2911, 96
    %v2946 = vpop.permute.xlu0 %2945
    %2947 = vrot.lane.b32.xlu0 %v2912, 96
    %v2948 = vpop.permute.xlu0 %2947
    %2949 = vrot.lane.b32.xlu0 %v2913, 96
    %v2950 = vpop.permute.xlu0 %2949
    %2951 = vrot.lane.b32.xlu0 %v2914, 96
    %v2952 = vpop.permute.xlu0 %2951
    %2953 = vrot.lane.b32.xlu0 %v2915, 96
    %v2954 = vpop.permute.xlu0 %2953
    %v2955 = vsel %vm377, %v2930, %v2932
    %v2956 = vsel %vm377, %v2932, %v2934
    %v2957 = vsel %vm377, %v2934, %v2936
    %v2958 = vsel %vm377, %v2936, %v2938
    %v2959 = vsel %vm377, %v2938, %v2940
    %v2960 = vsel %vm377, %v2940, %v2942
    %v2961 = vsel %vm377, %v2942, %v2944
    %v2962 = vsel %vm377, %v2944, %v2946
    %v2963 = vsel %vm377, %v2946, %v2948
    %v2964 = vsel %vm377, %v2948, %v2950
    %v2965 = vsel %vm377, %v2950, %v2952
    %v2966 = vsel %vm377, %v2952, %v2954
    %2979 = vst [vmem:[#allocation5 + $0x480] sm:$0xff] %v2955
    %2980 = vst [vmem:[#allocation5 + $0x488] sm:$0xff] %v2956
    %2981 = vst [vmem:[#allocation5 + $0x490] sm:$0xff] %v2957
    %2982 = vst [vmem:[#allocation5 + $0x498] sm:$0xff] %v2958
    %2983 = vst [vmem:[#allocation5 + $0x4a0] sm:$0xff] %v2959
    %2984 = vst [vmem:[#allocation5 + $0x4a8] sm:$0xff] %v2960
    %2985 = vst [vmem:[#allocation5 + $0x4b0] sm:$0xff] %v2961
    %2986 = vst [vmem:[#allocation5 + $0x4b8] sm:$0xff] %v2962
    %2987 = vst [vmem:[#allocation5 + $0x4c0] sm:$0xff] %v2963
    %2988 = vst [vmem:[#allocation5 + $0x4c8] sm:$0xff] %v2964
    %2989 = vst [vmem:[#allocation5 + $0x4d0] sm:$0xff] %v2965
    %2990 = vst [vmem:[#allocation5 + $0x4d8] sm:$0xff] %v2966
    %v2991 = vld [vmem:[#allocation4] sm:$0xff]
    %v2992 = vld [vmem:[#allocation4 + $0x8] sm:$0xff]
    %v2993 = vld [vmem:[#allocation4 + $0x10] sm:$0xff]
    %v2994 = vld [vmem:[#allocation4 + $0x18] sm:$0xff]
    %v2995 = vld [vmem:[#allocation4 + $0x20] sm:$0xff]
    %v2996 = vld [vmem:[#allocation4 + $0x28] sm:$0xff]
    %v2997 = vld [vmem:[#allocation4 + $0x30] sm:$0xff]
    %v2998 = vld [vmem:[#allocation4 + $0x38] sm:$0xff]
    %v2999 = vld [vmem:[#allocation4 + $0x40] sm:$0xff]
    %v3000 = vld [vmem:[#allocation4 + $0x48] sm:$0xff]
    %v3001 = vld [vmem:[#allocation4 + $0x50] sm:$0xff]
    %v3002 = vld [vmem:[#allocation4 + $0x58] sm:$0xff]
    %v3003 = vld [vmem:[#allocation4 + $0x60] sm:$0xff]
    %3017 = vrot.lane.b32.xlu0 %v2991, 122
    %v3018 = vpop.permute.xlu0 %3017
    %3019 = vrot.lane.b32.xlu0 %v2992, 122
    %v3020 = vpop.permute.xlu0 %3019
    %3021 = vrot.lane.b32.xlu0 %v2993, 122
    %v3022 = vpop.permute.xlu0 %3021
    %3023 = vrot.lane.b32.xlu0 %v2994, 122
    %v3024 = vpop.permute.xlu0 %3023
    %3025 = vrot.lane.b32.xlu0 %v2995, 122
    %v3026 = vpop.permute.xlu0 %3025
    %3027 = vrot.lane.b32.xlu0 %v2996, 122
    %v3028 = vpop.permute.xlu0 %3027
    %3029 = vrot.lane.b32.xlu0 %v2997, 122
    %v3030 = vpop.permute.xlu0 %3029
    %3031 = vrot.lane.b32.xlu0 %v2998, 122
    %v3032 = vpop.permute.xlu0 %3031
    %3033 = vrot.lane.b32.xlu0 %v2999, 122
    %v3034 = vpop.permute.xlu0 %3033
    %3035 = vrot.lane.b32.xlu0 %v3000, 122
    %v3036 = vpop.permute.xlu0 %3035
    %3037 = vrot.lane.b32.xlu0 %v3001, 122
    %v3038 = vpop.permute.xlu0 %3037
    %3039 = vrot.lane.b32.xlu0 %v3002, 122
    %v3040 = vpop.permute.xlu0 %3039
    %3041 = vrot.lane.b32.xlu0 %v3003, 122
    %v3042 = vpop.permute.xlu0 %3041
    %v3043 = vsel %vm1246, %v3018, %v3020
    %v3044 = vsel %vm1246, %v3020, %v3022
    %v3045 = vsel %vm1246, %v3022, %v3024
    %v3046 = vsel %vm1246, %v3024, %v3026
    %v3047 = vsel %vm1246, %v3026, %v3028
    %v3048 = vsel %vm1246, %v3028, %v3030
    %v3049 = vsel %vm1246, %v3030, %v3032
    %v3050 = vsel %vm1246, %v3032, %v3034
    %v3051 = vsel %vm1246, %v3034, %v3036
    %v3052 = vsel %vm1246, %v3036, %v3038
    %v3053 = vsel %vm1246, %v3038, %v3040
    %v3054 = vsel %vm1246, %v3040, %v3042
    %3067 = vst [vmem:[#allocation5 + $0x240] sm:$0xff] %v3043
    %3068 = vst [vmem:[#allocation5 + $0x248] sm:$0xff] %v3044
    %3069 = vst [vmem:[#allocation5 + $0x250] sm:$0xff] %v3045
    %3070 = vst [vmem:[#allocation5 + $0x258] sm:$0xff] %v3046
    %3071 = vst [vmem:[#allocation5 + $0x260] sm:$0xff] %v3047
    %3072 = vst [vmem:[#allocation5 + $0x268] sm:$0xff] %v3048
    %3073 = vst [vmem:[#allocation5 + $0x270] sm:$0xff] %v3049
    %3074 = vst [vmem:[#allocation5 + $0x278] sm:$0xff] %v3050
    %3075 = vst [vmem:[#allocation5 + $0x280] sm:$0xff] %v3051
    %3076 = vst [vmem:[#allocation5 + $0x288] sm:$0xff] %v3052
    %3077 = vst [vmem:[#allocation5 + $0x290] sm:$0xff] %v3053
    %3078 = vst [vmem:[#allocation5 + $0x298] sm:$0xff] %v3054
    %v3079 = vld [vmem:[#allocation4 + $0x78] sm:$0xff]
    %v3080 = vld [vmem:[#allocation4 + $0x80] sm:$0xff]
    %v3081 = vld [vmem:[#allocation4 + $0x88] sm:$0xff]
    %v3082 = vld [vmem:[#allocation4 + $0x90] sm:$0xff]
    %v3083 = vld [vmem:[#allocation4 + $0x98] sm:$0xff]
    %v3084 = vld [vmem:[#allocation4 + $0xa0] sm:$0xff]
    %v3085 = vld [vmem:[#allocation4 + $0xa8] sm:$0xff]
    %v3086 = vld [vmem:[#allocation4 + $0xb0] sm:$0xff]
    %v3087 = vld [vmem:[#allocation4 + $0xb8] sm:$0xff]
    %v3088 = vld [vmem:[#allocation4 + $0xc0] sm:$0xff]
    %v3089 = vld [vmem:[#allocation4 + $0xc8] sm:$0xff]
    %v3090 = vld [vmem:[#allocation4 + $0xd0] sm:$0xff]
    %v3091 = vld [vmem:[#allocation4 + $0xd8] sm:$0xff]
    %3105 = vrot.lane.b32.xlu0 %v3079, 64
    %v3106 = vpop.permute.xlu0 %3105
    %3107 = vrot.lane.b32.xlu0 %v3080, 64
    %v3108 = vpop.permute.xlu0 %3107
    %3109 = vrot.lane.b32.xlu0 %v3081, 64
    %v3110 = vpop.permute.xlu0 %3109
    %3111 = vrot.lane.b32.xlu0 %v3082, 64
    %v3112 = vpop.permute.xlu0 %3111
    %3113 = vrot.lane.b32.xlu0 %v3083, 64
    %v3114 = vpop.permute.xlu0 %3113
    %3115 = vrot.lane.b32.xlu0 %v3084, 64
    %v3116 = vpop.permute.xlu0 %3115
    %3117 = vrot.lane.b32.xlu0 %v3085, 64
    %v3118 = vpop.permute.xlu0 %3117
    %3119 = vrot.lane.b32.xlu0 %v3086, 64
    %v3120 = vpop.permute.xlu0 %3119
    %3121 = vrot.lane.b32.xlu0 %v3087, 64
    %v3122 = vpop.permute.xlu0 %3121
    %3123 = vrot.lane.b32.xlu0 %v3088, 64
    %v3124 = vpop.permute.xlu0 %3123
    %3125 = vrot.lane.b32.xlu0 %v3089, 64
    %v3126 = vpop.permute.xlu0 %3125
    %3127 = vrot.lane.b32.xlu0 %v3090, 64
    %v3128 = vpop.permute.xlu0 %3127
    %3129 = vrot.lane.b32.xlu0 %v3091, 64
    %v3130 = vpop.permute.xlu0 %3129
    %v3131 = vsel %vm543, %v3106, %v3108
    %v3132 = vsel %vm543, %v3108, %v3110
    %v3133 = vsel %vm543, %v3110, %v3112
    %v3134 = vsel %vm543, %v3112, %v3114
    %v3135 = vsel %vm543, %v3114, %v3116
    %v3136 = vsel %vm543, %v3116, %v3118
    %v3137 = vsel %vm543, %v3118, %v3120
    %v3138 = vsel %vm543, %v3120, %v3122
    %v3139 = vsel %vm543, %v3122, %v3124
    %v3140 = vsel %vm543, %v3124, %v3126
    %v3141 = vsel %vm543, %v3126, %v3128
    %v3142 = vsel %vm543, %v3128, %v3130
    %3155 = vst [vmem:[#allocation5 + $0x4e0] sm:$0xff] %v3131
    %3156 = vst [vmem:[#allocation5 + $0x4e8] sm:$0xff] %v3132
    %3157 = vst [vmem:[#allocation5 + $0x4f0] sm:$0xff] %v3133
    %3158 = vst [vmem:[#allocation5 + $0x4f8] sm:$0xff] %v3134
    %3159 = vst [vmem:[#allocation5 + $0x500] sm:$0xff] %v3135
    %3160 = vst [vmem:[#allocation5 + $0x508] sm:$0xff] %v3136
    %3161 = vst [vmem:[#allocation5 + $0x510] sm:$0xff] %v3137
    %3162 = vst [vmem:[#allocation5 + $0x518] sm:$0xff] %v3138
    %3163 = vst [vmem:[#allocation5 + $0x520] sm:$0xff] %v3139
    %3164 = vst [vmem:[#allocation5 + $0x528] sm:$0xff] %v3140
    %3165 = vst [vmem:[#allocation5 + $0x530] sm:$0xff] %v3141
    %3166 = vst [vmem:[#allocation5 + $0x538] sm:$0xff] %v3142
    %v3167 = vld [vmem:[%s3] sm:$0xff]
    %v3168 = vld [vmem:[#allocation5] sm:$0xff]
    %v3169 = vld [vmem:[#allocation5 + $0x8] sm:$0xff]
    %v3170 = vld [vmem:[#allocation5 + $0x10] sm:$0xff]
    %v3171 = vld [vmem:[#allocation5 + $0x18] sm:$0xff]
    %v3172 = vld [vmem:[#allocation5 + $0x30] sm:$0xff]
    %v3173 = vld [vmem:[#allocation5 + $0x38] sm:$0xff]
    %v3174 = vld [vmem:[#allocation5 + $0x40] sm:$0xff]
    %v3175 = vld [vmem:[#allocation5 + $0x48] sm:$0xff]
    %v3176 = vld [vmem:[#allocation5 + $0x60] sm:$0xff]
    %v3177 = vld [vmem:[#allocation5 + $0x68] sm:$0xff]
    %v3178 = vld [vmem:[#allocation5 + $0x70] sm:$0xff]
    %v3179 = vld [vmem:[#allocation5 + $0x78] sm:$0xff]
    %v3180 = vld [vmem:[#allocation5 + $0x90] sm:$0xff]
    %v3181 = vld [vmem:[#allocation5 + $0x98] sm:$0xff]
    %v3182 = vld [vmem:[#allocation5 + $0xa0] sm:$0xff]
    %v3183 = vld [vmem:[#allocation5 + $0xa8] sm:$0xff]
    %v3184 = vld [vmem:[#allocation5 + $0xc0] sm:$0xff]
    %v3185 = vld [vmem:[#allocation5 + $0xc8] sm:$0xff]
    %v3186 = vld [vmem:[#allocation5 + $0xd0] sm:$0xff]
    %v3187 = vld [vmem:[#allocation5 + $0xd8] sm:$0xff]
    %v3188 = vld [vmem:[#allocation5 + $0xf0] sm:$0xff]
    %v3189 = vld [vmem:[#allocation5 + $0xf8] sm:$0xff]
    %v3190 = vld [vmem:[#allocation5 + $0x100] sm:$0xff]
    %v3191 = vld [vmem:[#allocation5 + $0x108] sm:$0xff]
    %v3192 = vld [vmem:[#allocation5 + $0x120] sm:$0xff]
    %v3193 = vld [vmem:[#allocation5 + $0x128] sm:$0xff]
    %v3194 = vld [vmem:[#allocation5 + $0x130] sm:$0xff]
    %v3195 = vld [vmem:[#allocation5 + $0x138] sm:$0xff]
    %v3196 = vld [vmem:[#allocation5 + $0x150] sm:$0xff]
    %v3197 = vld [vmem:[#allocation5 + $0x158] sm:$0xff]
    %v3198 = vld [vmem:[#allocation5 + $0x160] sm:$0xff]
    %v3199 = vld [vmem:[#allocation5 + $0x168] sm:$0xff]
    %v3200 = vld [vmem:[#allocation5 + $0x180] sm:$0xff]
    %v3201 = vld [vmem:[#allocation5 + $0x188] sm:$0xff]
    %v3202 = vld [vmem:[#allocation5 + $0x190] sm:$0xff]
    %v3203 = vld [vmem:[#allocation5 + $0x198] sm:$0xff]
    %v3204 = vld [vmem:[#allocation5 + $0x1b0] sm:$0xff]
    %v3205 = vld [vmem:[#allocation5 + $0x1b8] sm:$0xff]
    %v3206 = vld [vmem:[#allocation5 + $0x1c0] sm:$0xff]
    %v3207 = vld [vmem:[#allocation5 + $0x1c8] sm:$0xff]
    %v3208 = vld [vmem:[#allocation5 + $0x1e0] sm:$0xff]
    %v3209 = vld [vmem:[#allocation5 + $0x1e8] sm:$0xff]
    %v3210 = vld [vmem:[#allocation5 + $0x1f0] sm:$0xff]
    %v3211 = vld [vmem:[#allocation5 + $0x1f8] sm:$0xff]
    %v3212 = vld [vmem:[#allocation5 + $0x210] sm:$0xff]
    %v3213 = vld [vmem:[#allocation5 + $0x218] sm:$0xff]
    %v3214 = vld [vmem:[#allocation5 + $0x220] sm:$0xff]
    %v3215 = vld [vmem:[#allocation5 + $0x228] sm:$0xff]
    %v3216 = vld [vmem:[#allocation5 + $0x240] sm:$0xff]
    %v3217 = vld [vmem:[#allocation5 + $0x248] sm:$0xff]
    %v3218 = vld [vmem:[#allocation5 + $0x250] sm:$0xff]
    %v3219 = vld [vmem:[#allocation5 + $0x258] sm:$0xff]
    %v3220 = vld [vmem:[#allocation5 + $0x270] sm:$0xff]
    %v3221 = vld [vmem:[#allocation5 + $0x278] sm:$0xff]
    %v3222 = vld [vmem:[#allocation5 + $0x280] sm:$0xff]
    %v3223 = vld [vmem:[#allocation5 + $0x288] sm:$0xff]
    %v3224 = vld [vmem:[#allocation5 + $0x2a0] sm:$0xff]
    %v3225 = vld [vmem:[#allocation5 + $0x2a8] sm:$0xff]
    %v3226 = vld [vmem:[#allocation5 + $0x2b0] sm:$0xff]
    %v3227 = vld [vmem:[#allocation5 + $0x2b8] sm:$0xff]
    %v3228 = vld [vmem:[#allocation5 + $0x2d0] sm:$0xff]
    %v3229 = vld [vmem:[#allocation5 + $0x2d8] sm:$0xff]
    %v3230 = vld [vmem:[#allocation5 + $0x2e0] sm:$0xff]
    %v3231 = vld [vmem:[#allocation5 + $0x2e8] sm:$0xff]
    %v3232 = vld [vmem:[#allocation5 + $0x300] sm:$0xff]
    %v3233 = vld [vmem:[#allocation5 + $0x308] sm:$0xff]
    %v3234 = vld [vmem:[#allocation5 + $0x310] sm:$0xff]
    %v3235 = vld [vmem:[#allocation5 + $0x318] sm:$0xff]
    %v3236 = vld [vmem:[#allocation5 + $0x330] sm:$0xff]
    %v3237 = vld [vmem:[#allocation5 + $0x338] sm:$0xff]
    %v3238 = vld [vmem:[#allocation5 + $0x340] sm:$0xff]
    %v3239 = vld [vmem:[#allocation5 + $0x348] sm:$0xff]
    %v3240 = vld [vmem:[#allocation5 + $0x360] sm:$0xff]
    %v3241 = vld [vmem:[#allocation5 + $0x368] sm:$0xff]
    %v3242 = vld [vmem:[#allocation5 + $0x370] sm:$0xff]
    %v3243 = vld [vmem:[#allocation5 + $0x378] sm:$0xff]
    %v3244 = vld [vmem:[#allocation5 + $0x390] sm:$0xff]
    %v3245 = vld [vmem:[#allocation5 + $0x398] sm:$0xff]
    %v3246 = vld [vmem:[#allocation5 + $0x3a0] sm:$0xff]
    %v3247 = vld [vmem:[#allocation5 + $0x3a8] sm:$0xff]
    %v3248 = vld [vmem:[#allocation5 + $0x3c0] sm:$0xff]
    %v3249 = vld [vmem:[#allocation5 + $0x3c8] sm:$0xff]
    %v3250 = vld [vmem:[#allocation5 + $0x3d0] sm:$0xff]
    %v3251 = vld [vmem:[#allocation5 + $0x3d8] sm:$0xff]
    %v3252 = vld [vmem:[#allocation5 + $0x3f0] sm:$0xff]
    %v3253 = vld [vmem:[#allocation5 + $0x3f8] sm:$0xff]
    %v3254 = vld [vmem:[#allocation5 + $0x400] sm:$0xff]
    %v3255 = vld [vmem:[#allocation5 + $0x408] sm:$0xff]
    %v3256 = vld [vmem:[#allocation5 + $0x420] sm:$0xff]
    %v3257 = vld [vmem:[#allocation5 + $0x428] sm:$0xff]
    %v3258 = vld [vmem:[#allocation5 + $0x430] sm:$0xff]
    %v3259 = vld [vmem:[#allocation5 + $0x438] sm:$0xff]
    %v3260 = vld [vmem:[#allocation5 + $0x450] sm:$0xff]
    %v3261 = vld [vmem:[#allocation5 + $0x458] sm:$0xff]
    %v3262 = vld [vmem:[#allocation5 + $0x460] sm:$0xff]
    %v3263 = vld [vmem:[#allocation5 + $0x468] sm:$0xff]
    %v3264 = vld [vmem:[#allocation5 + $0x480] sm:$0xff]
    %v3265 = vld [vmem:[#allocation5 + $0x488] sm:$0xff]
    %v3266 = vld [vmem:[#allocation5 + $0x490] sm:$0xff]
    %v3267 = vld [vmem:[#allocation5 + $0x498] sm:$0xff]
    %v3268 = vld [vmem:[#allocation5 + $0x4b0] sm:$0xff]
    %v3269 = vld [vmem:[#allocation5 + $0x4b8] sm:$0xff]
    %v3270 = vld [vmem:[#allocation5 + $0x4c0] sm:$0xff]
    %v3271 = vld [vmem:[#allocation5 + $0x4c8] sm:$0xff]
    %v3272 = vld [vmem:[#allocation5 + $0x4e0] sm:$0xff]
    %v3273 = vld [vmem:[#allocation5 + $0x4e8] sm:$0xff]
    %v3274 = vld [vmem:[#allocation5 + $0x4f0] sm:$0xff]
    %v3275 = vld [vmem:[#allocation5 + $0x4f8] sm:$0xff]
    %v3276 = vld [vmem:[#allocation5 + $0x510] sm:$0xff]
    %v3277 = vld [vmem:[#allocation5 + $0x518] sm:$0xff]
    %v3278 = vld [vmem:[#allocation5 + $0x520] sm:$0xff]
    %v3279 = vld [vmem:[#allocation5 + $0x528] sm:$0xff]
    %v3280 = vld [vmem:[%s4] sm:$0xff]
    %3282 = vset.pattern.permute.xlu0 0
    %3283 = vperm.xlu0 %3282, %v3280
    %v3284 = vpop.permute.xlu0 %3283
    %vm3286 = vcmask 916480
    %v3288 = vsel %vm3286, %v3167, 0
    %3290 = vmatprep.subr.mxu0 0.0
    %3291 = vmatpush1.msra.mxu0 0.0
    %3292 = vmatprep.subr.mxu0 0.0
    %3293 = vmatpush1.msra.mxu0 0.0
    %3294 = vmatprep.subr.mxu0 %v3273
    %3295 = vmatpush1.msra.mxu0 %v3272
    %3296 = vmatprep.subr.mxu0 %v3265
    %3297 = vmatpush1.msra.mxu0 %v3264
    %3298 = vmatprep.subr.mxu0 %v3257
    %3299 = vmatpush1.msra.mxu0 %v3256
    %3300 = vmatprep.subr.mxu0 %v3249
    %3301 = vmatpush1.msra.mxu0 %v3248
    %3302 = vmatprep.subr.mxu0 %v3241
    %3303 = vmatpush1.msra.mxu0 %v3240
    %3304 = vmatprep.subr.mxu0 %v3233
    %3305 = vmatpush1.msra.mxu0 %v3232
    %3306 = vmatprep.subr.mxu0 %v3225
    %3307 = vmatpush1.msra.mxu0 %v3224
    %3308 = vmatprep.subr.mxu0 %v3217
    %3309 = vmatpush1.msra.mxu0 %v3216
    %3310 = vmatprep.subr.mxu0 %v3209
    %3311 = vmatpush1.msra.mxu0 %v3208
    %3312 = vmatprep.subr.mxu0 %v3201
    %3313 = vmatpush1.msra.mxu0 %v3200
    %3314 = vmatprep.subr.mxu0 %v3193
    %3315 = vmatpush1.msra.mxu0 %v3192
    %3316 = vmatprep.subr.mxu0 %v3185
    %3317 = vmatpush1.msra.mxu0 %v3184
    %3318 = vmatprep.subr.mxu0 %v3177
    %3319 = vmatpush1.msra.mxu0 %v3176
    %3320 = vmatprep.subr.mxu0 %v3169
    %3321 = vmatpush1.msra.mxu0 %v3168
    %3322 = vmatprep.subr.mxu0 0.0
    %3323 = vmatpush2.msra.mxu0 0.0
    %3324 = vmatprep.subr.mxu0 0.0
    %3325 = vmatpush2.msra.mxu0 0.0
    %3326 = vmatprep.subr.mxu0 0.0
    %3327 = vmatpush2.msra.mxu0 0.0
    %3328 = vmatprep.subr.mxu0 0.0
    %3329 = vmatpush2.msra.mxu0 0.0
    %3330 = vmatprep.subr.mxu0 0.0
    %3331 = vmatpush2.msra.mxu0 0.0
    %3332 = vmatprep.subr.mxu0 0.0
    %3333 = vmatpush2.msra.mxu0 0.0
    %3334 = vmatprep.subr.mxu0 0.0
    %3335 = vmatpush2.msra.mxu0 0.0
    %3336 = vmatprep.subr.mxu0 0.0
    %3337 = vmatpush2.msra.mxu0 0.0
    %3338 = vmatprep.subr.mxu0 0.0
    %3339 = vmatpush2.msra.mxu0 0.0
    %3340 = vmatprep.subr.mxu0 0.0
    %3341 = vmatpush2.msra.mxu0 0.0
    %3342 = vmatprep.subr.mxu0 0.0
    %3343 = vmatpush2.msra.mxu0 0.0
    %3344 = vmatprep.subr.mxu0 0.0
    %3345 = vmatpush2.msra.mxu0 0.0
    %3346 = vmatprep.subr.mxu0 0.0
    %3347 = vmatpush2.msra.mxu0 0.0
    %3348 = vmatprep.subr.mxu0 0.0
    %3349 = vmatpush2.msra.mxu0 0.0
    %3350 = vmatprep.subr.mxu0 0.0
    %3351 = vmatpush2.msra.mxu0 0.0
    %3352 = vmatprep.subr.mxu0 0.0
    %3353 = vmatpush2.msra.mxu0 0.0
    %3354 = vmatprep.mubr.f32.mxu0 0.0
    %3355 = vmatmul.mubr.f32.gmra.mxu0 %v3288
    %v3356 = vpop.f32.mrf.mxu0
    %v3357 = vadd.f32 %v3284, %v3356
    %v3358 = vpop.f32.mrf.mxu0
    %v3359 = vadd.f32 %v3284, %v3358
    %3360 = vdwg.mxu0
    %3361 = vmatprep.subr.mxu0 0.0
    %3362 = vmatpush1.msra.mxu0 0.0
    %3363 = vmatprep.subr.mxu0 0.0
    %3364 = vmatpush1.msra.mxu0 0.0
    %3365 = vmatprep.subr.mxu0 %v3275
    %3366 = vmatpush1.msra.mxu0 %v3274
    %3367 = vmatprep.subr.mxu0 %v3267
    %3368 = vmatpush1.msra.mxu0 %v3266
    %3369 = vmatprep.subr.mxu0 %v3259
    %3370 = vmatpush1.msra.mxu0 %v3258
    %3371 = vmatprep.subr.mxu0 %v3251
    %3372 = vmatpush1.msra.mxu0 %v3250
    %3373 = vmatprep.subr.mxu0 %v3243
    %3374 = vmatpush1.msra.mxu0 %v3242
    %3375 = vmatprep.subr.mxu0 %v3235
    %3376 = vmatpush1.msra.mxu0 %v3234
    %3377 = vmatprep.subr.mxu0 %v3227
    %3378 = vmatpush1.msra.mxu0 %v3226
    %3379 = vmatprep.subr.mxu0 %v3219
    %3380 = vmatpush1.msra.mxu0 %v3218
    %3381 = vmatprep.subr.mxu0 %v3211
    %3382 = vmatpush1.msra.mxu0 %v3210
    %3383 = vmatprep.subr.mxu0 %v3203
    %3384 = vmatpush1.msra.mxu0 %v3202
    %3385 = vmatprep.subr.mxu0 %v3195
    %3386 = vmatpush1.msra.mxu0 %v3194
    %3387 = vmatprep.subr.mxu0 %v3187
    %3388 = vmatpush1.msra.mxu0 %v3186
    %3389 = vmatprep.subr.mxu0 %v3179
    %3390 = vmatpush1.msra.mxu0 %v3178
    %3391 = vmatprep.subr.mxu0 %v3171
    %3392 = vmatpush1.msra.mxu0 %v3170
    %3393 = vmatprep.subr.mxu0 0.0
    %3394 = vmatpush2.msra.mxu0 0.0
    %3395 = vmatprep.subr.mxu0 0.0
    %3396 = vmatpush2.msra.mxu0 0.0
    %3397 = vmatprep.subr.mxu0 0.0
    %3398 = vmatpush2.msra.mxu0 0.0
    %3399 = vmatprep.subr.mxu0 0.0
    %3400 = vmatpush2.msra.mxu0 0.0
    %3401 = vmatprep.subr.mxu0 0.0
    %3402 = vmatpush2.msra.mxu0 0.0
    %3403 = vmatprep.subr.mxu0 0.0
    %3404 = vmatpush2.msra.mxu0 0.0
    %3405 = vmatprep.subr.mxu0 0.0
    %3406 = vmatpush2.msra.mxu0 0.0
    %3407 = vmatprep.subr.mxu0 0.0
    %3408 = vmatpush2.msra.mxu0 0.0
    %3409 = vmatprep.subr.mxu0 0.0
    %3410 = vmatpush2.msra.mxu0 0.0
    %3411 = vmatprep.subr.mxu0 0.0
    %3412 = vmatpush2.msra.mxu0 0.0
    %3413 = vmatprep.subr.mxu0 0.0
    %3414 = vmatpush2.msra.mxu0 0.0
    %3415 = vmatprep.subr.mxu0 0.0
    %3416 = vmatpush2.msra.mxu0 0.0
    %3417 = vmatprep.subr.mxu0 0.0
    %3418 = vmatpush2.msra.mxu0 0.0
    %3419 = vmatprep.subr.mxu0 0.0
    %3420 = vmatpush2.msra.mxu0 0.0
    %3421 = vmatprep.subr.mxu0 0.0
    %3422 = vmatpush2.msra.mxu0 0.0
    %3423 = vmatprep.subr.mxu0 0.0
    %3424 = vmatpush2.msra.mxu0 0.0
    %3425 = vmatprep.mubr.f32.mxu0 0.0
    %3426 = vmatmul.mubr.f32.gmra.mxu0 %v3288
    %v3427 = vpop.f32.mrf.mxu0
    %v3428 = vadd.f32 %v3284, %v3427
    %v3429 = vpop.f32.mrf.mxu0
    %v3430 = vadd.f32 %v3284, %v3429
    %3431 = vdwg.mxu0
    %3432 = vmatprep.subr.mxu0 0.0
    %3433 = vmatpush1.msra.mxu0 0.0
    %3434 = vmatprep.subr.mxu0 0.0
    %3435 = vmatpush1.msra.mxu0 0.0
    %3436 = vmatprep.subr.mxu0 %v3277
    %3437 = vmatpush1.msra.mxu0 %v3276
    %3438 = vmatprep.subr.mxu0 %v3269
    %3439 = vmatpush1.msra.mxu0 %v3268
    %3440 = vmatprep.subr.mxu0 %v3261
    %3441 = vmatpush1.msra.mxu0 %v3260
    %3442 = vmatprep.subr.mxu0 %v3253
    %3443 = vmatpush1.msra.mxu0 %v3252
    %3444 = vmatprep.subr.mxu0 %v3245
    %3445 = vmatpush1.msra.mxu0 %v3244
    %3446 = vmatprep.subr.mxu0 %v3237
    %3447 = vmatpush1.msra.mxu0 %v3236
    %3448 = vmatprep.subr.mxu0 %v3229
    %3449 = vmatpush1.msra.mxu0 %v3228
    %3450 = vmatprep.subr.mxu0 %v3221
    %3451 = vmatpush1.msra.mxu0 %v3220
    %3452 = vmatprep.subr.mxu0 %v3213
    %3453 = vmatpush1.msra.mxu0 %v3212
    %3454 = vmatprep.subr.mxu0 %v3205
    %3455 = vmatpush1.msra.mxu0 %v3204
    %3456 = vmatprep.subr.mxu0 %v3197
    %3457 = vmatpush1.msra.mxu0 %v3196
    %3458 = vmatprep.subr.mxu0 %v3189
    %3459 = vmatpush1.msra.mxu0 %v3188
    %3460 = vmatprep.subr.mxu0 %v3181
    %3461 = vmatpush1.msra.mxu0 %v3180
    %3462 = vmatprep.subr.mxu0 %v3173
    %3463 = vmatpush1.msra.mxu0 %v3172
    %3464 = vmatprep.subr.mxu0 0.0
    %3465 = vmatpush2.msra.mxu0 0.0
    %3466 = vmatprep.subr.mxu0 0.0
    %3467 = vmatpush2.msra.mxu0 0.0
    %3468 = vmatprep.subr.mxu0 0.0
    %3469 = vmatpush2.msra.mxu0 0.0
    %3470 = vmatprep.subr.mxu0 0.0
    %3471 = vmatpush2.msra.mxu0 0.0
    %3472 = vmatprep.subr.mxu0 0.0
    %3473 = vmatpush2.msra.mxu0 0.0
    %3474 = vmatprep.subr.mxu0 0.0
    %3475 = vmatpush2.msra.mxu0 0.0
    %3476 = vmatprep.subr.mxu0 0.0
    %3477 = vmatpush2.msra.mxu0 0.0
    %3478 = vmatprep.subr.mxu0 0.0
    %3479 = vmatpush2.msra.mxu0 0.0
    %3480 = vmatprep.subr.mxu0 0.0
    %3481 = vmatpush2.msra.mxu0 0.0
    %3482 = vmatprep.subr.mxu0 0.0
    %3483 = vmatpush2.msra.mxu0 0.0
    %3484 = vmatprep.subr.mxu0 0.0
    %3485 = vmatpush2.msra.mxu0 0.0
    %3486 = vmatprep.subr.mxu0 0.0
    %3487 = vmatpush2.msra.mxu0 0.0
    %3488 = vmatprep.subr.mxu0 0.0
    %3489 = vmatpush2.msra.mxu0 0.0
    %3490 = vmatprep.subr.mxu0 0.0
    %3491 = vmatpush2.msra.mxu0 0.0
    %3492 = vmatprep.subr.mxu0 0.0
    %3493 = vmatpush2.msra.mxu0 0.0
    %3494 = vmatprep.subr.mxu0 0.0
    %3495 = vmatpush2.msra.mxu0 0.0
    %3496 = vmatprep.mubr.f32.mxu0 0.0
    %3497 = vmatmul.mubr.f32.gmra.mxu0 %v3288
    %v3498 = vpop.f32.mrf.mxu0
    %v3499 = vadd.f32 %v3284, %v3498
    %v3500 = vpop.f32.mrf.mxu0
    %v3501 = vadd.f32 %v3284, %v3500
    %3502 = vdwg.mxu0
    %3503 = vmatprep.subr.mxu0 0.0
    %3504 = vmatpush1.msra.mxu0 0.0
    %3505 = vmatprep.subr.mxu0 0.0
    %3506 = vmatpush1.msra.mxu0 0.0
    %3507 = vmatprep.subr.mxu0 %v3279
    %3508 = vmatpush1.msra.mxu0 %v3278
    %3509 = vmatprep.subr.mxu0 %v3271
    %3510 = vmatpush1.msra.mxu0 %v3270
    %3511 = vmatprep.subr.mxu0 %v3263
    %3512 = vmatpush1.msra.mxu0 %v3262
    %3513 = vmatprep.subr.mxu0 %v3255
    %3514 = vmatpush1.msra.mxu0 %v3254
    %3515 = vmatprep.subr.mxu0 %v3247
    %3516 = vmatpush1.msra.mxu0 %v3246
    %3517 = vmatprep.subr.mxu0 %v3239
    %3518 = vmatpush1.msra.mxu0 %v3238
    %3519 = vmatprep.subr.mxu0 %v3231
    %3520 = vmatpush1.msra.mxu0 %v3230
    %3521 = vmatprep.subr.mxu0 %v3223
    %3522 = vmatpush1.msra.mxu0 %v3222
    %3523 = vmatprep.subr.mxu0 %v3215
    %3524 = vmatpush1.msra.mxu0 %v3214
    %3525 = vmatprep.subr.mxu0 %v3207
    %3526 = vmatpush1.msra.mxu0 %v3206
    %3527 = vmatprep.subr.mxu0 %v3199
    %3528 = vmatpush1.msra.mxu0 %v3198
    %3529 = vmatprep.subr.mxu0 %v3191
    %3530 = vmatpush1.msra.mxu0 %v3190
    %3531 = vmatprep.subr.mxu0 %v3183
    %3532 = vmatpush1.msra.mxu0 %v3182
    %3533 = vmatprep.subr.mxu0 %v3175
    %3534 = vmatpush1.msra.mxu0 %v3174
    %3535 = vmatprep.subr.mxu0 0.0
    %3536 = vmatpush2.msra.mxu0 0.0
    %3537 = vmatprep.subr.mxu0 0.0
    %3538 = vmatpush2.msra.mxu0 0.0
    %3539 = vmatprep.subr.mxu0 0.0
    %3540 = vmatpush2.msra.mxu0 0.0
    %3541 = vmatprep.subr.mxu0 0.0
    %3542 = vmatpush2.msra.mxu0 0.0
    %3543 = vmatprep.subr.mxu0 0.0
    %3544 = vmatpush2.msra.mxu0 0.0
    %3545 = vmatprep.subr.mxu0 0.0
    %3546 = vmatpush2.msra.mxu0 0.0
    %3547 = vmatprep.subr.mxu0 0.0
    %3548 = vmatpush2.msra.mxu0 0.0
    %3549 = vmatprep.subr.mxu0 0.0
    %3550 = vmatpush2.msra.mxu0 0.0
    %3551 = vmatprep.subr.mxu0 0.0
    %3552 = vmatpush2.msra.mxu0 0.0
    %3553 = vmatprep.subr.mxu0 0.0
    %3554 = vmatpush2.msra.mxu0 0.0
    %3555 = vmatprep.subr.mxu0 0.0
    %3556 = vmatpush2.msra.mxu0 0.0
    %3557 = vmatprep.subr.mxu0 0.0
    %3558 = vmatpush2.msra.mxu0 0.0
    %3559 = vmatprep.subr.mxu0 0.0
    %3560 = vmatpush2.msra.mxu0 0.0
    %3561 = vmatprep.subr.mxu0 0.0
    %3562 = vmatpush2.msra.mxu0 0.0
    %3563 = vmatprep.subr.mxu0 0.0
    %3564 = vmatpush2.msra.mxu0 0.0
    %3565 = vmatprep.subr.mxu0 0.0
    %3566 = vmatpush2.msra.mxu0 0.0
    %3567 = vmatprep.mubr.f32.mxu0 0.0
    %3568 = vmatmul.mubr.f32.gmra.mxu0 %v3288
    %v3569 = vpop.f32.mrf.mxu0
    %v3570 = vadd.f32 %v3284, %v3569
    %v3571 = vpop.f32.mrf.mxu0
    %v3572 = vadd.f32 %v3284, %v3571
    %3573 = vdwg.mxu0
    %vm3574 = vcmask 130048
    %3575 = vst.msk [vmem:[#allocation9] sm:$0xff] %vm3574, %v3357
    %3577 = vrot.lane.b32.xlu0 %v3357, 112
    %v3578 = vpop.permute.xlu0 %3577
    %vm3580 = vcmask 261248
    %3581 = vst.msk [vmem:[#allocation9] sm:$0xff] %vm3580, %v3578
    %3582 = vrot.lane.b32.xlu0 %v3357, 96
    %v3583 = vpop.permute.xlu0 %3582
    %vm3585 = vcmask 392448
    %3586 = vst.msk [vmem:[#allocation9] sm:$0xff] %vm3585, %v3583
    %3587 = vrot.lane.b32.xlu0 %v3357, 80
    %v3588 = vpop.permute.xlu0 %3587
    %vm3590 = vcmask 523648
    %3591 = vst.msk [vmem:[#allocation9] sm:$0xff] %vm3590, %v3588
    %3593 = vrot.lane.b32.xlu0 %v3359, 64
    %v3594 = vpop.permute.xlu0 %3593
    %vm3596 = vcmask 654848
    %3597 = vst.msk [vmem:[#allocation9] sm:$0xff] %vm3596, %v3594
    %3598 = vrot.lane.b32.xlu0 %v3359, 48
    %v3599 = vpop.permute.xlu0 %3598
    %vm3601 = vcmask 786048
    %3602 = vst.msk [vmem:[#allocation9] sm:$0xff] %vm3601, %v3599
    %3603 = vrot.lane.b32.xlu0 %v3359, 32
    %v3604 = vpop.permute.xlu0 %3603
    %vm3606 = vcmask 917248
    %3607 = vst.msk [vmem:[#allocation9] sm:$0xff] %vm3606, %v3604
    %3608 = vrot.lane.b32.xlu0 %v3359, 16
    %v3609 = vpop.permute.xlu0 %3608
    %vm3611 = vcmask 1048448
    %3612 = vst.msk [vmem:[#allocation9] sm:$0xff] %vm3611, %v3609
    %3613 = vst.msk [vmem:[#allocation9 + $0x8] sm:$0xff] %vm3574, %v3428
    %3615 = vrot.lane.b32.xlu0 %v3428, 112
    %v3616 = vpop.permute.xlu0 %3615
    %3618 = vst.msk [vmem:[#allocation9 + $0x8] sm:$0xff] %vm3580, %v3616
    %3619 = vrot.lane.b32.xlu0 %v3428, 96
    %v3620 = vpop.permute.xlu0 %3619
    %3622 = vst.msk [vmem:[#allocation9 + $0x8] sm:$0xff] %vm3585, %v3620
    %3623 = vrot.lane.b32.xlu0 %v3428, 80
    %v3624 = vpop.permute.xlu0 %3623
    %3626 = vst.msk [vmem:[#allocation9 + $0x8] sm:$0xff] %vm3590, %v3624
    %3628 = vrot.lane.b32.xlu0 %v3430, 64
    %v3629 = vpop.permute.xlu0 %3628
    %3631 = vst.msk [vmem:[#allocation9 + $0x8] sm:$0xff] %vm3596, %v3629
    %3632 = vrot.lane.b32.xlu0 %v3430, 48
    %v3633 = vpop.permute.xlu0 %3632
    %3635 = vst.msk [vmem:[#allocation9 + $0x8] sm:$0xff] %vm3601, %v3633
    %3636 = vrot.lane.b32.xlu0 %v3430, 32
    %v3637 = vpop.permute.xlu0 %3636
    %3639 = vst.msk [vmem:[#allocation9 + $0x8] sm:$0xff] %vm3606, %v3637
    %3640 = vrot.lane.b32.xlu0 %v3430, 16
    %v3641 = vpop.permute.xlu0 %3640
    %3643 = vst.msk [vmem:[#allocation9 + $0x8] sm:$0xff] %vm3611, %v3641
    %3644 = vst.msk [vmem:[#allocation9 + $0x10] sm:$0xff] %vm3574, %v3499
    %3646 = vrot.lane.b32.xlu0 %v3499, 112
    %v3647 = vpop.permute.xlu0 %3646
    %3649 = vst.msk [vmem:[#allocation9 + $0x10] sm:$0xff] %vm3580, %v3647
    %3650 = vrot.lane.b32.xlu0 %v3499, 96
    %v3651 = vpop.permute.xlu0 %3650
    %3653 = vst.msk [vmem:[#allocation9 + $0x10] sm:$0xff] %vm3585, %v3651
    %3654 = vrot.lane.b32.xlu0 %v3499, 80
    %v3655 = vpop.permute.xlu0 %3654
    %3657 = vst.msk [vmem:[#allocation9 + $0x10] sm:$0xff] %vm3590, %v3655
    %3659 = vrot.lane.b32.xlu0 %v3501, 64
    %v3660 = vpop.permute.xlu0 %3659
    %3662 = vst.msk [vmem:[#allocation9 + $0x10] sm:$0xff] %vm3596, %v3660
    %3663 = vrot.lane.b32.xlu0 %v3501, 48
    %v3664 = vpop.permute.xlu0 %3663
    %3666 = vst.msk [vmem:[#allocation9 + $0x10] sm:$0xff] %vm3601, %v3664
    %3667 = vrot.lane.b32.xlu0 %v3501, 32
    %v3668 = vpop.permute.xlu0 %3667
    %3670 = vst.msk [vmem:[#allocation9 + $0x10] sm:$0xff] %vm3606, %v3668
    %3671 = vrot.lane.b32.xlu0 %v3501, 16
    %v3672 = vpop.permute.xlu0 %3671
    %3674 = vst.msk [vmem:[#allocation9 + $0x10] sm:$0xff] %vm3611, %v3672
    %3675 = vst.msk [vmem:[#allocation9 + $0x18] sm:$0xff] %vm3574, %v3570
    %3677 = vrot.lane.b32.xlu0 %v3570, 112
    %v3678 = vpop.permute.xlu0 %3677
    %3680 = vst.msk [vmem:[#allocation9 + $0x18] sm:$0xff] %vm3580, %v3678
    %3681 = vrot.lane.b32.xlu0 %v3570, 96
    %v3682 = vpop.permute.xlu0 %3681
    %3684 = vst.msk [vmem:[#allocation9 + $0x18] sm:$0xff] %vm3585, %v3682
    %3685 = vrot.lane.b32.xlu0 %v3570, 80
    %v3686 = vpop.permute.xlu0 %3685
    %3688 = vst.msk [vmem:[#allocation9 + $0x18] sm:$0xff] %vm3590, %v3686
    %3690 = vrot.lane.b32.xlu0 %v3572, 64
    %v3691 = vpop.permute.xlu0 %3690
    %3693 = vst.msk [vmem:[#allocation9 + $0x18] sm:$0xff] %vm3596, %v3691
    %3694 = vrot.lane.b32.xlu0 %v3572, 48
    %v3695 = vpop.permute.xlu0 %3694
    %3697 = vst.msk [vmem:[#allocation9 + $0x18] sm:$0xff] %vm3601, %v3695
    %3698 = vrot.lane.b32.xlu0 %v3572, 32
    %v3699 = vpop.permute.xlu0 %3698
    %3701 = vst.msk [vmem:[#allocation9 + $0x18] sm:$0xff] %vm3606, %v3699
    %3702 = vrot.lane.b32.xlu0 %v3572, 16
    %v3703 = vpop.permute.xlu0 %3702
    %3705 = vst.msk [vmem:[#allocation9 + $0x18] sm:$0xff] %vm3611, %v3703
    // Predicated region
    $region26: #{tpu_custom_call.1} parent=1 // pred_check
      _
    $region27: #{tpu_custom_call.1} parent=1 // pred_check_branch
      %3707 = sbr.rel (0) target = $region29
    $region28: #{tpu_custom_call.1} parent=1 // pred_region
      %s3709 = ssub.s32 512, 512
      %3710 = vsyncadd [#allocation8], %s3709
      %s3711 = sshll.u32 [#allocation9], 4
      %s3712 = int_to_ptr.vmem [resolvable:$true] %s3711
      %3717 = dma.vmem_to_hbm [thread:$0]  %s3712, 512, %s5, [#allocation8], 256, 256, 16
    $region29: #{tpu_custom_call.1} parent=1 // pred_fallthru
      _
    // Predicated region
    $region30: #{tpu_custom_call.1} parent=1 // pred_check
      _
    $region31: #{tpu_custom_call.1} parent=1 // pred_check_branch
      %3719 = sbr.rel (0) target = $region33
    $region32: #{tpu_custom_call.1} parent=1 // pred_region
      %3720 = dma.done [#allocation8], 512
    $region33: #{tpu_custom_call.1} parent=1 // pred_fallthru
      _
    %3721 = vsyncpa [#allocation7], 1
    %3722 = vsyncpa [#allocation8], 1

</llo_original>
